<compile_context>
chip_gen: v6e
topology: v6e:2x2x1
jax: 0.10.0
libtpu: 0.0.40
codegen_flags: <defaults>
</compile_context>

<pallas_src>
import math
import functools

import numpy as np
import jax
import jax.numpy as jnp
from jax.experimental import pallas as pl
from jax.experimental.pallas import tpu as pltpu


# ----------------------------------------------------------------------------
# Parameter init (deterministic, mimics nn.Linear / nn.LayerNorm defaults)
# ----------------------------------------------------------------------------
def _linear(key, out_f, in_f, bias=True):
    kw, kb = jax.random.split(key)
    bound = 1.0 / math.sqrt(in_f)
    w = jax.random.uniform(kw, (out_f, in_f), jnp.float32, -bound, bound)
    if not bias:
        return [w]
    b = jax.random.uniform(kb, (out_f,), jnp.float32, -bound, bound)
    return [w, b]


def init_block_params(key, c_m, c_z, c_hidden, no_heads):
    keys = jax.random.split(key, 10)
    p = []
    # RowAttentionWithPairBias (gating=False)
    p += [jnp.ones((c_m,), jnp.float32), jnp.zeros((c_m,), jnp.float32)]   # layer_norm_m
    p += [jnp.ones((c_z,), jnp.float32), jnp.zeros((c_z,), jnp.float32)]   # layer_norm_z
    p += _linear(keys[0], no_heads, c_z, bias=False)                       # linear_z
    p += _linear(keys[1], c_hidden, c_m, bias=False)                       # linear_q
    p += _linear(keys[2], c_hidden, c_m, bias=False)                       # linear_k
    p += _linear(keys[3], c_hidden, c_m, bias=False)                       # linear_v
    p += _linear(keys[4], c_m, c_hidden, bias=True)                        # linear_o
    # Transition (n=4)
    p += [jnp.ones((c_m,), jnp.float32), jnp.zeros((c_m,), jnp.float32)]
    p += _linear(keys[5], 4 * c_m, c_m)
    p += _linear(keys[6], c_m, 4 * c_m)
    # OuterProductMean
    p += [jnp.ones((c_m,), jnp.float32), jnp.zeros((c_m,), jnp.float32)]
    p += _linear(keys[7], c_hidden, c_m)
    p += _linear(keys[8], c_hidden, c_m)
    p += _linear(keys[9], c_z, c_hidden * c_hidden)
    return p  # 24 arrays


def init_stack_params(key, no_blocks, c_m, c_z, c_hidden, no_heads):
    keys = jax.random.split(key, no_blocks)
    return [init_block_params(k, c_m, c_z, c_hidden, no_heads) for k in keys]


# ----------------------------------------------------------------------------
# Pallas kernel
# ----------------------------------------------------------------------------
def _layernorm(x, g, b, eps=1e-5):
    mu = jnp.mean(x, axis=-1, keepdims=True)
    var = jnp.mean(jnp.square(x - mu), axis=-1, keepdims=True)
    return (x - mu) * jax.lax.rsqrt(var + eps) * g + b


def bioformer_stack_kernel(m_in_ref, z_hbm_ref, vec_ref,
                           wz_ref, wq_ref, wk_ref, wv_ref, wo_ref,
                           w1_ref, w2_ref, wa_ref, wb_ref, wopm_ref,
                           m_ref, z_ref, copy_sem,
                           *, c_m, c_z, c_hidden, no_heads,
                           do_opm, do_pair_bias, row_tile):
    b = pl.program_id(0)
    blk = pl.program_id(1)
    R = m_ref.shape[1]
    H = no_heads
    dh = c_hidden // H
    n_tiles = R // row_tile
    bf16 = jnp.bfloat16

    # ---- block 0 of each batch element: seed the resident m/z accumulators.
    # z input never occupies a second resident VMEM block: it is DMA'd once
    # from HBM straight into the resident output accumulator.
    @pl.when(blk == 0)
    def _seed():
        m_ref[...] = m_in_ref[...]
        cp = pltpu.make_async_copy(z_hbm_ref.at[b], z_ref.at[0], copy_sem)
        cp.start()
        cp.wait()

    # ---- unpack the coalesced 1-D parameter vector (single DMA per block) --
    vec = vec_ref[0, 0]
    sizes = [c_m, c_m, c_z, c_z, c_m, c_m, c_m, 4 * c_m, c_m, c_m, c_m,
             c_hidden, c_hidden, c_z]
    offs = np.cumsum([0] + sizes)
    pieces = [vec[int(offs[i]):int(offs[i + 1])] for i in range(len(sizes))]
    (ln_m_g, ln_m_b, ln_z_g, ln_z_b, bo, t_ln_g, t_ln_b, b1, b2,
     o_ln_g, o_ln_b, ba, bb, bout) = pieces

    m = m_ref[0]                                                    # [R,c_m] f32

    # ---------------- RowAttentionWithPairBias (gating=False) ----------------
    lm = _layernorm(m, ln_m_g, ln_m_b).astype(bf16)
    # Three separate projections (no lane-slicing of a fused QKV output);
    # 1/sqrt(c_hidden) is already folded into wq.
    q = jnp.dot(lm, wq_ref[0], preferred_element_type=jnp.float32)  # [R, ch]
    k = jnp.dot(lm, wk_ref[0], preferred_element_type=jnp.float32)
    v = jnp.dot(lm, wv_ref[0], preferred_element_type=jnp.float32)
    qh = q.reshape(R, H, dh).transpose(1, 0, 2).astype(bf16)        # [H,R,dh]
    kh = k.reshape(R, H, dh).transpose(1, 0, 2).astype(bf16)
    vh = v.reshape(R, H, dh).transpose(1, 0, 2).astype(bf16)
    logits = jnp.einsum('hid,hjd->hij', qh, kh,
                        preferred_element_type=jnp.float32)         # [H,R,R] f32

    if do_pair_bias:
        wz = wz_ref[0]                                              # [H,c_z] bf16
        tiles = []
        for it in range(n_tiles):                                   # row-tiled
            i0 = it * row_tile
            zt = z_ref[0, i0:i0 + row_tile]                         # [T,R,c_z]
            lz = _layernorm(zt.reshape(row_tile * R, c_z), ln_z_g, ln_z_b)
            bt = jax.lax.dot_general(wz, lz.astype(bf16),
                                     (((1,), (1,)), ((), ())),
                                     preferred_element_type=jnp.float32)
            tiles.append(bt.reshape(H, row_tile, R))
        bias = tiles[0] if n_tiles == 1 else jnp.concatenate(tiles, axis=1)
        logits = logits + bias

    # softmax kept in f32 (VPU/EUP), denominator via EUP approx reciprocal
    logits = logits - jnp.max(logits, axis=-1, keepdims=True)
    e = jnp.exp(logits)
    p = e * pl.reciprocal(jnp.sum(e, axis=-1, keepdims=True), approx=True)
    ctx = jnp.einsum('hij,hjd->hid', p.astype(bf16), vh,
                     preferred_element_type=jnp.float32)            # [H,R,dh]
    ctx = ctx.transpose(1, 0, 2).reshape(R, c_hidden).astype(bf16)
    m = m + jnp.dot(ctx, wo_ref[0], preferred_element_type=jnp.float32) + bo

    # ------------------------------ Transition -------------------------------
    lt = _layernorm(m, t_ln_g, t_ln_b).astype(bf16)
    hid = jnp.maximum(
        jnp.dot(lt, w1_ref[0], preferred_element_type=jnp.float32) + b1, 0.0)
    m = m + jnp.dot(hid.astype(bf16), w2_ref[0],
                    preferred_element_type=jnp.float32) + b2
    m_ref[0] = m

    # --------------------------- OuterProductMean ----------------------------
    if do_opm:
        lo = _layernorm(m, o_ln_g, o_ln_b).astype(bf16)
        av = jnp.dot(lo, wa_ref[0], preferred_element_type=jnp.float32) + ba
        bv = jnp.dot(lo, wb_ref[0], preferred_element_type=jnp.float32) + bb
        # out[i,j,c] = sum_{p,q} av[i,p] bv[j,q] wout[c,p*ch+q] as two matmuls.
        t = jnp.dot(bv.astype(bf16), wopm_ref[0],
                    preferred_element_type=jnp.float32)             # [R, ch*c_z]
        tT = (t.reshape(R, c_hidden, c_z).transpose(1, 0, 2)
               .reshape(c_hidden, R * c_z).astype(bf16))            # [ch, R*c_z]
        av_b = av.astype(bf16)
        for it in range(n_tiles):                                   # row-tiled
            i0 = it * row_tile
            upd = jnp.dot(av_b[i0:i0 + row_tile], tT,
                          preferred_element_type=jnp.float32)       # [T, R*c_z]
            z_ref[0, i0:i0 + row_tile] = (
                z_ref[0, i0:i0 + row_tile]
                + upd.reshape(row_tile, R, c_z) + bout)


# ----------------------------------------------------------------------------
# Host-side packing & wrapper
# ----------------------------------------------------------------------------
def _pick_row_tile(R):
    if R <= 128:
        return R
    for t in (128, 64, 32, 16, 8):
        if R % t == 0:
            return t
    return R


def _pack_block_params(p, c_z, c_hidden):
    (ln_m_g, ln_m_b, ln_z_g, ln_z_b, wz,
     wq, wk, wv, wo, bo,
     t_ln_g, t_ln_b, w1, b1, w2, b2,
     o_ln_g, o_ln_b, wa, ba, wb, bb, wout, bout) = p
    # all 1-D params coalesced into one vector -> one small DMA per block
    vec = jnp.concatenate([ln_m_g, ln_m_b, ln_z_g, ln_z_b, bo,
                           t_ln_g, t_ln_b, b1, b2,
                           o_ln_g, o_ln_b, ba, bb, bout]).reshape(1, -1)
    scale = 1.0 / math.sqrt(c_hidden)
    bf = lambda x: x.astype(jnp.bfloat16)
    mats = [
        bf(wz),                       # [H, c_z]   (contracts c_z in kernel)
        bf(wq.T * scale),             # [c_m, ch]  (q scale folded in)
        bf(wk.T), bf(wv.T),           # [c_m, ch]
        bf(wo.T),                     # [ch, c_m]
        bf(w1.T), bf(w2.T),           # [c_m, 4c_m], [4c_m, c_m]
        bf(wa.T), bf(wb.T),           # [c_m, ch]
        # wout[c, p*ch+q] -> w_opm[q, p*c_z+c]   (precomputed on host)
        bf(jnp.transpose(wout.reshape(c_z, c_hidden, c_hidden),
                         (2, 1, 0)).reshape(c_hidden, c_hidden * c_z)),
    ]
    return [vec.astype(jnp.float32)] + mats


def _vmem_limit_bytes(R, c_m, c_z, c_hidden, no_heads, stacked, row_tile):
    z_blk = R * R * c_z * 4
    m_blk = R * c_m * 4
    params = sum(int(np.prod(w.shape[1:])) * w.dtype.itemsize for w in stacked)
    inter = (2 * no_heads * R * R                # logits + bias (f32)
             + 3 * c_hidden * R * c_z            # OPM t / tT
             + 3 * row_tile * R * c_z            # lz / upd row tiles
             + 12 * R * max(4 * c_m, c_hidden)) * 4
    need = 2 * z_blk + 4 * m_blk + 2 * params + inter + (4 << 20)
    try:
        cap = int(pltpu.get_tpu_info().vmem_capacity_bytes)
    except Exception:
        cap = 128 << 20
    return int(min(max(need, 32 << 20), (cap * 7) // 8))


def bioformer_stack_forward(m, z, stack_params, *, c_hidden, no_heads,
                            do_opm, do_pair_bias):
    B, R, c_m = m.shape
    c_z = z.shape[-1]
    no_blocks = len(stack_params)
    row_tile = _pick_row_tile(R)

    per_block = [_pack_block_params(p, c_z, c_hidden) for p in stack_params]
    # Stack every parameter across blocks -> leading block dim, streamed per step.
    stacked = [jnp.stack([pb[i] for pb in per_block], axis=0)
               for i in range(len(per_block[0]))]

    kernel = functools.partial(
        bioformer_stack_kernel, c_m=c_m, c_z=c_z, c_hidden=c_hidden,
        no_heads=no_heads, do_opm=do_opm, do_pair_bias=do_pair_bias,
        row_tile=row_tile)

    param_specs = [pl.BlockSpec((1,) + tuple(w.shape[1:]),
                                lambda b, blk: (blk, 0, 0))
                   for w in stacked]

    vmem_limit = _vmem_limit_bytes(R, c_m, c_z, c_hidden, no_heads,
                                   stacked, row_tile)

    m_out, z_out = pl.pallas_call(
        kernel,
        out_shape=(jax.ShapeDtypeStruct(m.shape, m.dtype),
                   jax.ShapeDtypeStruct(z.shape, z.dtype)),
        grid_spec=pltpu.PrefetchScalarGridSpec(
            num_scalar_prefetch=0,
            grid=(B, no_blocks),                     # block axis innermost
            in_specs=[pl.BlockSpec((1, R, c_m), lambda b, blk: (b, 0, 0)),
                      pl.BlockSpec(memory_space=pl.ANY)]   # z input stays in HBM
                     + param_specs,
            out_specs=[pl.BlockSpec((1, R, c_m), lambda b, blk: (b, 0, 0)),
                       pl.BlockSpec((1, R, R, c_z), lambda b, blk: (b, 0, 0, 0))],
            scratch_shapes=[pltpu.SemaphoreType.DMA(())]),
        compiler_params=pltpu.CompilerParams(
            dimension_semantics=("parallel", "arbitrary"),
            vmem_limit_bytes=vmem_limit),
    )(m, z, *stacked)
    return m_out, z_out


# ----------------------------------------------------------------------------
# Pure-JAX reference (mirrors the PyTorch forward exactly, f32) for validation
# ----------------------------------------------------------------------------
def _ref_block(m, z, p, *, c_hidden, no_heads, do_opm, do_pair_bias):
    (ln_m_g, ln_m_b, ln_z_g, ln_z_b, wz,
     wq, wk, wv, wo, bo,
     t_ln_g, t_ln_b, w1, b1, w2, b2,
     o_ln_g, o_ln_b, wa, ba, wb, bb, wout, bout) = p

    def ln(x, g, b):
        mu = x.mean(-1, keepdims=True)
        var = ((x - mu) ** 2).mean(-1, keepdims=True)
        return (x - mu) / jnp.sqrt(var + 1e-5) * g + b

    B, R, c_m = m.shape
    H, dh = no_heads, c_hidden // no_heads
    lm = ln(m, ln_m_g, ln_m_b)
    q = (lm @ wq.T).reshape(B, R, H, dh).transpose(0, 2, 1, 3) / math.sqrt(c_hidden)
    k = (lm @ wk.T).reshape(B, R, H, dh).transpose(0, 2, 1, 3)
    v = (lm @ wv.T).reshape(B, R, H, dh).transpose(0, 2, 1, 3)
    a = jnp.einsum('bhid,bhjd->bhij', q, k)
    if do_pair_bias:
        zb = ln(z, ln_z_g, ln_z_b) @ wz.T                  # [B,R,R,H]
        a = a + jnp.transpose(zb, (0, 3, 1, 2))
    a = jax.nn.softmax(a, -1)
    ctx = jnp.einsum('bhij,bhjd->bhid', a, v).transpose(0, 2, 1, 3).reshape(B, R, H * dh)
    m = m + ctx @ wo.T + bo
    lt = ln(m, t_ln_g, t_ln_b)
    m = m + jnp.maximum(lt @ w1.T + b1, 0.0) @ w2.T + b2
    if do_opm:
        lo = ln(m, o_ln_g, o_ln_b)
        av = lo @ wa.T + ba
        bv = lo @ wb.T + bb
        outer = jnp.einsum('bip,bjq->bijpq', av, bv).reshape(B, R, R, -1)
        z = z + outer @ wout.T + bout
    return m, z


def _ref_stack(m, z, stack_params, **kw):
    for p in stack_params:
        m, z = _ref_block(m, z, p, **kw)
    return m, z


# ----------------------------------------------------------------------------
if __name__ == "__main__":
    B, R = 2, 16
    c_m, c_z, c_hidden, no_heads, no_blocks = 32, 16, 8, 4, 2
    do_opm, do_pair_bias = True, True

    key = jax.random.PRNGKey(0)
    k_m, k_z, k_p = jax.random.split(key, 3)
    m = jax.random.normal(k_m, (B, R, c_m), jnp.float32)
    z = jax.random.normal(k_z, (B, R, R, c_z), jnp.float32)
    stack_params = init_stack_params(k_p, no_blocks, c_m, c_z, c_hidden, no_heads)

    m_out, z_out = bioformer_stack_forward(
        m, z, stack_params, c_hidden=c_hidden, no_heads=no_heads,
        do_opm=do_opm, do_pair_bias=do_pair_bias)
    jax.block_until_ready((m_out, z_out))

    m_exp, z_exp = _ref_stack(
        m, z, stack_params, c_hidden=c_hidden, no_heads=no_heads,
        do_opm=do_opm, do_pair_bias=do_pair_bias)
    # Tolerance accounts for bf16 MXU operands (f32 accumulation) vs f32 reference.
    np.testing.assert_allclose(np.asarray(m_out), np.asarray(m_exp), rtol=3e-2, atol=3e-2)
    np.testing.assert_allclose(np.asarray(z_out), np.asarray(z_exp), rtol=3e-2, atol=3e-2)

    print("KERNEL_OK")
</pallas_src>

<mosaic_0001>
module attributes {stable_mosaic.version = 11 : i64} {
  func.func @bioformer_stack_kernel(%arg0: i32, %arg1: i32, %arg2: memref<1x16x32xf32, #tpu.memory_space<vmem>>, %arg3: memref<2x16x16x16xf32, #tpu.memory_space<any>>, %arg4: memref<1x1x448xf32, #tpu.memory_space<vmem>>, %arg5: memref<1x4x16xbf16, #tpu.memory_space<vmem>>, %arg6: memref<1x32x8xbf16, #tpu.memory_space<vmem>>, %arg7: memref<1x32x8xbf16, #tpu.memory_space<vmem>>, %arg8: memref<1x32x8xbf16, #tpu.memory_space<vmem>>, %arg9: memref<1x8x32xbf16, #tpu.memory_space<vmem>>, %arg10: memref<1x32x128xbf16, #tpu.memory_space<vmem>>, %arg11: memref<1x128x32xbf16, #tpu.memory_space<vmem>>, %arg12: memref<1x32x8xbf16, #tpu.memory_space<vmem>>, %arg13: memref<1x32x8xbf16, #tpu.memory_space<vmem>>, %arg14: memref<1x8x128xbf16, #tpu.memory_space<vmem>>, %arg15: memref<1x16x32xf32, #tpu.memory_space<vmem>>, %arg16: memref<1x16x16x16xf32, #tpu.memory_space<vmem>>, %arg17: memref<!tpu.dma_semaphore, #tpu.memory_space<semaphore_mem>>) attributes {dimension_semantics = [#tpu.dimension_semantics<parallel>, #tpu.dimension_semantics<arbitrary>], iteration_bounds = array<i64: 2, 2>, scalar_prefetch = 0 : i64, scratch_operands = 1 : i64, tpu.core_type = #tpu.core_type<tc>, window_params = [{transform_indices = @transform_0, window_bounds = array<i64: 1, 16, 32>}, {}, {transform_indices = @transform_2, window_bounds = array<i64: 1, 1, 448>}, {transform_indices = @transform_3, window_bounds = array<i64: 1, 4, 16>}, {transform_indices = @transform_4, window_bounds = array<i64: 1, 32, 8>}, {transform_indices = @transform_5, window_bounds = array<i64: 1, 32, 8>}, {transform_indices = @transform_6, window_bounds = array<i64: 1, 32, 8>}, {transform_indices = @transform_7, window_bounds = array<i64: 1, 8, 32>}, {transform_indices = @transform_8, window_bounds = array<i64: 1, 32, 128>}, {transform_indices = @transform_9, window_bounds = array<i64: 1, 128, 32>}, {transform_indices = @transform_10, window_bounds = array<i64: 1, 32, 8>}, {transform_indices = @transform_11, window_bounds = array<i64: 1, 32, 8>}, {transform_indices = @transform_12, window_bounds = array<i64: 1, 8, 128>}, {transform_indices = @transform_13, window_bounds = array<i64: 1, 16, 32>}, {transform_indices = @transform_14, window_bounds = array<i64: 1, 16, 16, 16>}]} {
    %c0_i32 = arith.constant 0 : i32
    %0 = arith.cmpi eq, %arg1, %c0_i32 : i32
    %1 = arith.extui %0 : i1 to i32
    %c0_i32_0 = arith.constant 0 : i32
    %2 = arith.cmpi ne, %1, %c0_i32_0 : i32
    scf.if %2 {
      %c0_86 = arith.constant 0 : index
      %c0_87 = arith.constant 0 : index
      %c0_88 = arith.constant 0 : index
      %221 = vector.load %arg2[%c0_86, %c0_87, %c0_88] : memref<1x16x32xf32, #tpu.memory_space<vmem>>, vector<1x16x32xf32>
      %c0_89 = arith.constant 0 : index
      %c0_90 = arith.constant 0 : index
      %c0_91 = arith.constant 0 : index
      %222 = vector.load %arg15[%c0_89, %c0_90, %c0_91] : memref<1x16x32xf32, #tpu.memory_space<vmem>>, vector<1x16x32xf32>
      tpu.vector_store %arg15[%c0_89, %c0_90, %c0_91], %221 {strides = array<i32>} : memref<1x16x32xf32, #tpu.memory_space<vmem>>, vector<1x16x32xf32>,
      %c0_i32_92 = arith.constant 0 : i32
      %c0_i32_93 = arith.constant 0 : i32
      %c0_i32_94 = arith.constant 0 : i32
      %c0_i32_95 = arith.constant 0 : i32
      %223 = tpu.memref_slice %arg3[%arg0, %c0_i32_93, %c0_i32_94, %c0_i32_95] : memref<2x16x16x16xf32, #tpu.memory_space<any>> -> memref<1x16x16x16xf32, #tpu.memory_space<any>>
      %224 = tpu.memref_squeeze %223 : memref<1x16x16x16xf32, #tpu.memory_space<any>> -> memref<16x16x16xf32, #tpu.memory_space<any>>
      %c0_i32_96 = arith.constant 0 : i32
      %c0_i32_97 = arith.constant 0 : i32
      %c0_i32_98 = arith.constant 0 : i32
      %225 = tpu.memref_slice %arg16[%c0_i32_92, %c0_i32_96, %c0_i32_97, %c0_i32_98] : memref<1x16x16x16xf32, #tpu.memory_space<vmem>> -> memref<1x16x16x16xf32, #tpu.memory_space<vmem>>
      %226 = tpu.memref_squeeze %225 : memref<1x16x16x16xf32, #tpu.memory_space<vmem>> -> memref<16x16x16xf32, #tpu.memory_space<vmem>>
      tpu.enqueue_dma source(%224 : memref<16x16x16xf32, #tpu.memory_space<any>>) target(%226 : memref<16x16x16xf32, #tpu.memory_space<vmem>>) target_semaphore(%arg17 : memref<!tpu.dma_semaphore, #tpu.memory_space<semaphore_mem>>)
      %c0_i32_99 = arith.constant 0 : i32
      %c0_i32_100 = arith.constant 0 : i32
      %c0_i32_101 = arith.constant 0 : i32
      %c0_i32_102 = arith.constant 0 : i32
      %227 = tpu.memref_slice %arg3[%arg0, %c0_i32_100, %c0_i32_101, %c0_i32_102] : memref<2x16x16x16xf32, #tpu.memory_space<any>> -> memref<1x16x16x16xf32, #tpu.memory_space<any>>
      %228 = tpu.memref_squeeze %227 : memref<1x16x16x16xf32, #tpu.memory_space<any>> -> memref<16x16x16xf32, #tpu.memory_space<any>>
      %c0_i32_103 = arith.constant 0 : i32
      %c0_i32_104 = arith.constant 0 : i32
      %c0_i32_105 = arith.constant 0 : i32
      %229 = tpu.memref_slice %arg16[%c0_i32_99, %c0_i32_103, %c0_i32_104, %c0_i32_105] : memref<1x16x16x16xf32, #tpu.memory_space<vmem>> -> memref<1x16x16x16xf32, #tpu.memory_space<vmem>>
      %230 = tpu.memref_squeeze %229 : memref<1x16x16x16xf32, #tpu.memory_space<vmem>> -> memref<16x16x16xf32, #tpu.memory_space<vmem>>
      tpu.wait_dma2 semaphore(%arg17 : memref<!tpu.dma_semaphore, #tpu.memory_space<semaphore_mem>>) src(%228 : memref<16x16x16xf32, #tpu.memory_space<any>>) dst(%230 : memref<16x16x16xf32, #tpu.memory_space<vmem>>)
    } else {
    }
    %c0 = arith.constant 0 : index
    %c0_1 = arith.constant 0 : index
    %c0_2 = arith.constant 0 : index
    %3 = vector.load %arg4[%c0, %c0_1, %c0_2] : memref<1x1x448xf32, #tpu.memory_space<vmem>>, vector<1x1x448xf32>
    %4 = vector.shape_cast %3 : vector<1x1x448xf32> to vector<448xf32>
    %5 = vector.extract_strided_slice %4 {offsets = [0], sizes = [32], strides = [1]} : vector<448xf32> to vector<32xf32>
    %6 = vector.extract_strided_slice %4 {offsets = [32], sizes = [32], strides = [1]} : vector<448xf32> to vector<32xf32>
    %7 = vector.extract_strided_slice %4 {offsets = [64], sizes = [16], strides = [1]} : vector<448xf32> to vector<16xf32>
    %8 = vector.extract_strided_slice %4 {offsets = [80], sizes = [16], strides = [1]} : vector<448xf32> to vector<16xf32>
    %9 = vector.extract_strided_slice %4 {offsets = [96], sizes = [32], strides = [1]} : vector<448xf32> to vector<32xf32>
    %10 = vector.extract_strided_slice %4 {offsets = [128], sizes = [32], strides = [1]} : vector<448xf32> to vector<32xf32>
    %11 = vector.extract_strided_slice %4 {offsets = [160], sizes = [32], strides = [1]} : vector<448xf32> to vector<32xf32>
    %12 = vector.extract_strided_slice %4 {offsets = [192], sizes = [128], strides = [1]} : vector<448xf32> to vector<128xf32>
    %13 = vector.extract_strided_slice %4 {offsets = [320], sizes = [32], strides = [1]} : vector<448xf32> to vector<32xf32>
    %14 = vector.extract_strided_slice %4 {offsets = [352], sizes = [32], strides = [1]} : vector<448xf32> to vector<32xf32>
    %15 = vector.extract_strided_slice %4 {offsets = [384], sizes = [32], strides = [1]} : vector<448xf32> to vector<32xf32>
    %16 = vector.extract_strided_slice %4 {offsets = [416], sizes = [8], strides = [1]} : vector<448xf32> to vector<8xf32>
    %17 = vector.extract_strided_slice %4 {offsets = [424], sizes = [8], strides = [1]} : vector<448xf32> to vector<8xf32>
    %18 = vector.extract_strided_slice %4 {offsets = [432], sizes = [16], strides = [1]} : vector<448xf32> to vector<16xf32>
    %c0_3 = arith.constant 0 : index
    %c0_4 = arith.constant 0 : index
    %c0_5 = arith.constant 0 : index
    %19 = vector.load %arg15[%c0_3, %c0_4, %c0_5] : memref<1x16x32xf32, #tpu.memory_space<vmem>>, vector<1x16x32xf32>
    %20 = vector.shape_cast %19 : vector<1x16x32xf32> to vector<16x32xf32>
    %cst = arith.constant dense<0.000000e+00> : vector<16xf32>
    %21 = vector.multi_reduction <add>, %20, %cst [1] : vector<16x32xf32> to vector<16xf32>
    %22 = vector.shape_cast %21 : vector<16xf32> to vector<16x1xf32>
    %cst_6 = arith.constant 3.200000e+01 : f32
    %23 = vector.broadcast %cst_6 : f32 to vector<16x1xf32>
    %24 = arith.divf %22, %23 : vector<16x1xf32>
    %25 = vector.broadcast %24 : vector<16x1xf32> to vector<16x32xf32>
    %26 = arith.subf %20, %25 : vector<16x32xf32>
    %27 = arith.mulf %26, %26 : vector<16x32xf32>
    %cst_7 = arith.constant dense<0.000000e+00> : vector<16xf32>
    %28 = vector.multi_reduction <add>, %27, %cst_7 [1] : vector<16x32xf32> to vector<16xf32>
    %29 = vector.shape_cast %28 : vector<16xf32> to vector<16x1xf32>
    %cst_8 = arith.constant 3.200000e+01 : f32
    %30 = vector.broadcast %cst_8 : f32 to vector<16x1xf32>
    %31 = arith.divf %29, %30 : vector<16x1xf32>
    %32 = vector.broadcast %24 : vector<16x1xf32> to vector<16x32xf32>
    %33 = arith.subf %20, %32 : vector<16x32xf32>
    %cst_9 = arith.constant 9.99999974E-6 : f32
    %34 = vector.broadcast %cst_9 : f32 to vector<16x1xf32>
    %35 = arith.addf %31, %34 : vector<16x1xf32>
    %36 = math.rsqrt %35 : vector<16x1xf32>
    %37 = vector.broadcast %36 : vector<16x1xf32> to vector<16x32xf32>
    %38 = arith.mulf %33, %37 : vector<16x32xf32>
    %39 = vector.shape_cast %5 : vector<32xf32> to vector<1x32xf32>
    %40 = vector.broadcast %39 : vector<1x32xf32> to vector<16x32xf32>
    %41 = arith.mulf %38, %40 : vector<16x32xf32>
    %42 = vector.shape_cast %6 : vector<32xf32> to vector<1x32xf32>
    %43 = vector.broadcast %42 : vector<1x32xf32> to vector<16x32xf32>
    %44 = arith.addf %41, %43 : vector<16x32xf32>
    %45 = arith.truncf %44 : vector<16x32xf32> to vector<16x32xbf16>
    %c0_10 = arith.constant 0 : index
    %c0_11 = arith.constant 0 : index
    %c0_12 = arith.constant 0 : index
    %46 = vector.load %arg6[%c0_10, %c0_11, %c0_12] : memref<1x32x8xbf16, #tpu.memory_space<vmem>>, vector<1x32x8xbf16>
    %47 = vector.shape_cast %46 : vector<1x32x8xbf16> to vector<32x8xbf16>
    %cst_13 = arith.constant dense<0.000000e+00> : vector<16x8xf32>
    %48 = tpu.matmul %45, %47, %cst_13 {dimension_numbers = #tpu.dot_dimension_numbers<[1], [0], [0], [1], [0, 0, 1, 1], [], []>} : vector<16x32xbf16>, vector<32x8xbf16>, vector<16x8xf32> -> vector<16x8xf32>
    %c0_14 = arith.constant 0 : index
    %c0_15 = arith.constant 0 : index
    %c0_16 = arith.constant 0 : index
    %49 = vector.load %arg7[%c0_14, %c0_15, %c0_16] : memref<1x32x8xbf16, #tpu.memory_space<vmem>>, vector<1x32x8xbf16>
    %50 = vector.shape_cast %49 : vector<1x32x8xbf16> to vector<32x8xbf16>
    %cst_17 = arith.constant dense<0.000000e+00> : vector<16x8xf32>
    %51 = tpu.matmul %45, %50, %cst_17 {dimension_numbers = #tpu.dot_dimension_numbers<[1], [0], [0], [1], [0, 0, 1, 1], [], []>} : vector<16x32xbf16>, vector<32x8xbf16>, vector<16x8xf32> -> vector<16x8xf32>
    %c0_18 = arith.constant 0 : index
    %c0_19 = arith.constant 0 : index
    %c0_20 = arith.constant 0 : index
    %52 = vector.load %arg8[%c0_18, %c0_19, %c0_20] : memref<1x32x8xbf16, #tpu.memory_space<vmem>>, vector<1x32x8xbf16>
    %53 = vector.shape_cast %52 : vector<1x32x8xbf16> to vector<32x8xbf16>
    %cst_21 = arith.constant dense<0.000000e+00> : vector<16x8xf32>
    %54 = tpu.matmul %45, %53, %cst_21 {dimension_numbers = #tpu.dot_dimension_numbers<[1], [0], [0], [1], [0, 0, 1, 1], [], []>} : vector<16x32xbf16>, vector<32x8xbf16>, vector<16x8xf32> -> vector<16x8xf32>
    %55 = vector.shape_cast %48 : vector<16x8xf32> to vector<16x4x2xf32>
    %56 = tpu.transpose %55, [1, 0, 2] : vector<16x4x2xf32> -> vector<4x16x2xf32>
    %57 = arith.truncf %56 : vector<4x16x2xf32> to vector<4x16x2xbf16>
    %58 = vector.shape_cast %51 : vector<16x8xf32> to vector<16x4x2xf32>
    %59 = tpu.transpose %58, [1, 0, 2] : vector<16x4x2xf32> -> vector<4x16x2xf32>
    %60 = arith.truncf %59 : vector<4x16x2xf32> to vector<4x16x2xbf16>
    %61 = vector.shape_cast %54 : vector<16x8xf32> to vector<16x4x2xf32>
    %62 = tpu.transpose %61, [1, 0, 2] : vector<16x4x2xf32> -> vector<4x16x2xf32>
    %63 = arith.truncf %62 : vector<4x16x2xf32> to vector<4x16x2xbf16>
    "tpu.trace_start"() <{level = 10 : i32, message = "hid,hjd->hij"}> : () -> ()
    %cst_22 = arith.constant dense<0.000000e+00> : vector<4x16x16xf32>
    %64 = tpu.matmul %57, %60, %cst_22 {dimension_numbers = #tpu.dot_dimension_numbers<[2], [2], [1], [1], [0, 0, 0, 1, 1, 1], [0], [0]>} : vector<4x16x2xbf16>, vector<4x16x2xbf16>, vector<4x16x16xf32> -> vector<4x16x16xf32>
    "tpu.trace_stop"() : () -> ()
    %c0_23 = arith.constant 0 : index
    %c0_24 = arith.constant 0 : index
    %c0_25 = arith.constant 0 : index
    %65 = vector.load %arg5[%c0_23, %c0_24, %c0_25] : memref<1x4x16xbf16, #tpu.memory_space<vmem>>, vector<1x4x16xbf16>
    %66 = vector.shape_cast %65 : vector<1x4x16xbf16> to vector<4x16xbf16>
    %c0_26 = arith.constant 0 : index
    %c0_27 = arith.constant 0 : index
    %c0_28 = arith.constant 0 : index
    %c0_29 = arith.constant 0 : index
    %67 = vector.load %arg16[%c0_26, %c0_27, %c0_28, %c0_29] : memref<1x16x16x16xf32, #tpu.memory_space<vmem>>, vector<1x16x16x16xf32>
    %68 = vector.shape_cast %67 : vector<1x16x16x16xf32> to vector<16x16x16xf32>
    %69 = vector.shape_cast %68 : vector<16x16x16xf32> to vector<256x16xf32>
    %cst_30 = arith.constant dense<0.000000e+00> : vector<256xf32>
    %70 = vector.multi_reduction <add>, %69, %cst_30 [1] : vector<256x16xf32> to vector<256xf32>
    %71 = vector.shape_cast %70 : vector<256xf32> to vector<256x1xf32>
    %cst_31 = arith.constant 1.600000e+01 : f32
    %72 = vector.broadcast %cst_31 : f32 to vector<256x1xf32>
    %73 = arith.divf %71, %72 : vector<256x1xf32>
    %74 = vector.broadcast %73 : vector<256x1xf32> to vector<256x16xf32>
    %75 = arith.subf %69, %74 : vector<256x16xf32>
    %76 = arith.mulf %75, %75 : vector<256x16xf32>
    %cst_32 = arith.constant dense<0.000000e+00> : vector<256xf32>
    %77 = vector.multi_reduction <add>, %76, %cst_32 [1] : vector<256x16xf32> to vector<256xf32>
    %78 = vector.shape_cast %77 : vector<256xf32> to vector<256x1xf32>
    %cst_33 = arith.constant 1.600000e+01 : f32
    %79 = vector.broadcast %cst_33 : f32 to vector<256x1xf32>
    %80 = arith.divf %78, %79 : vector<256x1xf32>
    %81 = vector.broadcast %73 : vector<256x1xf32> to vector<256x16xf32>
    %82 = arith.subf %69, %81 : vector<256x16xf32>
    %cst_34 = arith.constant 9.99999974E-6 : f32
    %83 = vector.broadcast %cst_34 : f32 to vector<256x1xf32>
    %84 = arith.addf %80, %83 : vector<256x1xf32>
    %85 = math.rsqrt %84 : vector<256x1xf32>
    %86 = vector.broadcast %85 : vector<256x1xf32> to vector<256x16xf32>
    %87 = arith.mulf %82, %86 : vector<256x16xf32>
    %88 = vector.shape_cast %7 : vector<16xf32> to vector<1x16xf32>
    %89 = vector.broadcast %88 : vector<1x16xf32> to vector<256x16xf32>
    %90 = arith.mulf %87, %89 : vector<256x16xf32>
    %91 = vector.shape_cast %8 : vector<16xf32> to vector<1x16xf32>
    %92 = vector.broadcast %91 : vector<1x16xf32> to vector<256x16xf32>
    %93 = arith.addf %90, %92 : vector<256x16xf32>
    %94 = arith.truncf %93 : vector<256x16xf32> to vector<256x16xbf16>
    %cst_35 = arith.constant dense<0.000000e+00> : vector<4x256xf32>
    %95 = tpu.matmul %66, %94, %cst_35 {dimension_numbers = #tpu.dot_dimension_numbers<[1], [1], [0], [0], [0, 0, 1, 0], [], []>} : vector<4x16xbf16>, vector<256x16xbf16>, vector<4x256xf32> -> vector<4x256xf32>
    %96 = vector.shape_cast %95 : vector<4x256xf32> to vector<4x16x16xf32>
    %97 = arith.addf %64, %96 : vector<4x16x16xf32>
    %cst_36 = arith.constant dense<0xFF800000> : vector<4x16xf32>
    %98 = vector.multi_reduction <maximumf>, %97, %cst_36 [2] : vector<4x16x16xf32> to vector<4x16xf32>
    %99 = vector.shape_cast %98 : vector<4x16xf32> to vector<4x16x1xf32>
    %100 = vector.broadcast %99 : vector<4x16x1xf32> to vector<4x16x16xf32>
    %101 = arith.subf %97, %100 : vector<4x16x16xf32>
    %102 = math.exp %101 : vector<4x16x16xf32>
    %cst_37 = arith.constant dense<0.000000e+00> : vector<4x16xf32>
    %103 = vector.multi_reduction <add>, %102, %cst_37 [2] : vector<4x16x16xf32> to vector<4x16xf32>
    %104 = vector.shape_cast %103 : vector<4x16xf32> to vector<4x16x1xf32>
    %105 = tpu.reciprocal %104 {approx = true} : vector<4x16x1xf32> -> vector<4x16x1xf32>
    %106 = vector.broadcast %105 : vector<4x16x1xf32> to vector<4x16x16xf32>
    %107 = arith.mulf %102, %106 : vector<4x16x16xf32>
    %108 = arith.truncf %107 : vector<4x16x16xf32> to vector<4x16x16xbf16>
    "tpu.trace_start"() <{level = 10 : i32, message = "hij,hjd->hid"}> : () -> ()
    %cst_38 = arith.constant dense<0.000000e+00> : vector<4x16x2xf32>
    %109 = tpu.matmul %108, %63, %cst_38 {dimension_numbers = #tpu.dot_dimension_numbers<[2], [1], [1], [2], [0, 0, 0, 1, 1, 2], [0], [0]>} : vector<4x16x16xbf16>, vector<4x16x2xbf16>, vector<4x16x2xf32> -> vector<4x16x2xf32>
    "tpu.trace_stop"() : () -> ()
    %110 = tpu.transpose %109, [1, 0, 2] : vector<4x16x2xf32> -> vector<16x4x2xf32>
    %111 = vector.shape_cast %110 : vector<16x4x2xf32> to vector<16x8xf32>
    %112 = arith.truncf %111 : vector<16x8xf32> to vector<16x8xbf16>
    %c0_39 = arith.constant 0 : index
    %c0_40 = arith.constant 0 : index
    %c0_41 = arith.constant 0 : index
    %113 = vector.load %arg9[%c0_39, %c0_40, %c0_41] : memref<1x8x32xbf16, #tpu.memory_space<vmem>>, vector<1x8x32xbf16>
    %114 = vector.shape_cast %113 : vector<1x8x32xbf16> to vector<8x32xbf16>
    %cst_42 = arith.constant dense<0.000000e+00> : vector<16x32xf32>
    %115 = tpu.matmul %112, %114, %cst_42 {dimension_numbers = #tpu.dot_dimension_numbers<[1], [0], [0], [1], [0, 0, 1, 1], [], []>} : vector<16x8xbf16>, vector<8x32xbf16>, vector<16x32xf32> -> vector<16x32xf32>
    %116 = arith.addf %20, %115 : vector<16x32xf32>
    %117 = vector.shape_cast %9 : vector<32xf32> to vector<1x32xf32>
    %118 = vector.broadcast %117 : vector<1x32xf32> to vector<16x32xf32>
    %119 = arith.addf %116, %118 : vector<16x32xf32>
    %cst_43 = arith.constant dense<0.000000e+00> : vector<16xf32>
    %120 = vector.multi_reduction <add>, %119, %cst_43 [1] : vector<16x32xf32> to vector<16xf32>
    %121 = vector.shape_cast %120 : vector<16xf32> to vector<16x1xf32>
    %cst_44 = arith.constant 3.200000e+01 : f32
    %122 = vector.broadcast %cst_44 : f32 to vector<16x1xf32>
    %123 = arith.divf %121, %122 : vector<16x1xf32>
    %124 = vector.broadcast %123 : vector<16x1xf32> to vector<16x32xf32>
    %125 = arith.subf %119, %124 : vector<16x32xf32>
    %126 = arith.mulf %125, %125 : vector<16x32xf32>
    %cst_45 = arith.constant dense<0.000000e+00> : vector<16xf32>
    %127 = vector.multi_reduction <add>, %126, %cst_45 [1] : vector<16x32xf32> to vector<16xf32>
    %128 = vector.shape_cast %127 : vector<16xf32> to vector<16x1xf32>
    %cst_46 = arith.constant 3.200000e+01 : f32
    %129 = vector.broadcast %cst_46 : f32 to vector<16x1xf32>
    %130 = arith.divf %128, %129 : vector<16x1xf32>
    %131 = vector.broadcast %123 : vector<16x1xf32> to vector<16x32xf32>
    %132 = arith.subf %119, %131 : vector<16x32xf32>
    %cst_47 = arith.constant 9.99999974E-6 : f32
    %133 = vector.broadcast %cst_47 : f32 to vector<16x1xf32>
    %134 = arith.addf %130, %133 : vector<16x1xf32>
    %135 = math.rsqrt %134 : vector<16x1xf32>
    %136 = vector.broadcast %135 : vector<16x1xf32> to vector<16x32xf32>
    %137 = arith.mulf %132, %136 : vector<16x32xf32>
    %138 = vector.shape_cast %10 : vector<32xf32> to vector<1x32xf32>
    %139 = vector.broadcast %138 : vector<1x32xf32> to vector<16x32xf32>
    %140 = arith.mulf %137, %139 : vector<16x32xf32>
    %141 = vector.shape_cast %11 : vector<32xf32> to vector<1x32xf32>
    %142 = vector.broadcast %141 : vector<1x32xf32> to vector<16x32xf32>
    %143 = arith.addf %140, %142 : vector<16x32xf32>
    %144 = arith.truncf %143 : vector<16x32xf32> to vector<16x32xbf16>
    %c0_48 = arith.constant 0 : index
    %c0_49 = arith.constant 0 : index
    %c0_50 = arith.constant 0 : index
    %145 = vector.load %arg10[%c0_48, %c0_49, %c0_50] : memref<1x32x128xbf16, #tpu.memory_space<vmem>>, vector<1x32x128xbf16>
    %146 = vector.shape_cast %145 : vector<1x32x128xbf16> to vector<32x128xbf16>
    %cst_51 = arith.constant dense<0.000000e+00> : vector<16x128xf32>
    %147 = tpu.matmul %144, %146, %cst_51 {dimension_numbers = #tpu.dot_dimension_numbers<[1], [0], [0], [1], [0, 0, 1, 1], [], []>} : vector<16x32xbf16>, vector<32x128xbf16>, vector<16x128xf32> -> vector<16x128xf32>
    %148 = vector.shape_cast %12 : vector<128xf32> to vector<1x128xf32>
    %149 = vector.broadcast %148 : vector<1x128xf32> to vector<16x128xf32>
    %150 = arith.addf %147, %149 : vector<16x128xf32>
    %cst_52 = arith.constant 0.000000e+00 : f32
    %151 = vector.broadcast %cst_52 : f32 to vector<16x128xf32>
    %152 = arith.maximumf %150, %151 : vector<16x128xf32>
    %153 = arith.truncf %152 : vector<16x128xf32> to vector<16x128xbf16>
    %c0_53 = arith.constant 0 : index
    %c0_54 = arith.constant 0 : index
    %c0_55 = arith.constant 0 : index
    %154 = vector.load %arg11[%c0_53, %c0_54, %c0_55] : memref<1x128x32xbf16, #tpu.memory_space<vmem>>, vector<1x128x32xbf16>
    %155 = vector.shape_cast %154 : vector<1x128x32xbf16> to vector<128x32xbf16>
    %cst_56 = arith.constant dense<0.000000e+00> : vector<16x32xf32>
    %156 = tpu.matmul %153, %155, %cst_56 {dimension_numbers = #tpu.dot_dimension_numbers<[1], [0], [0], [1], [0, 0, 1, 1], [], []>} : vector<16x128xbf16>, vector<128x32xbf16>, vector<16x32xf32> -> vector<16x32xf32>
    %157 = arith.addf %119, %156 : vector<16x32xf32>
    %158 = vector.shape_cast %13 : vector<32xf32> to vector<1x32xf32>
    %159 = vector.broadcast %158 : vector<1x32xf32> to vector<16x32xf32>
    %160 = arith.addf %157, %159 : vector<16x32xf32>
    %c0_57 = arith.constant 0 : index
    %c0_58 = arith.constant 0 : index
    %c0_59 = arith.constant 0 : index
    %161 = vector.load %arg15[%c0_57, %c0_58, %c0_59] : memref<1x16x32xf32, #tpu.memory_space<vmem>>, vector<1x16x32xf32>
    %162 = vector.shape_cast %161 : vector<1x16x32xf32> to vector<16x32xf32>
    %163 = vector.shape_cast %160 : vector<16x32xf32> to vector<1x16x32xf32>
    tpu.vector_store %arg15[%c0_57, %c0_58, %c0_59], %163 {strides = array<i32>} : memref<1x16x32xf32, #tpu.memory_space<vmem>>, vector<1x16x32xf32>,
    %cst_60 = arith.constant dense<0.000000e+00> : vector<16xf32>
    %164 = vector.multi_reduction <add>, %160, %cst_60 [1] : vector<16x32xf32> to vector<16xf32>
    %165 = vector.shape_cast %164 : vector<16xf32> to vector<16x1xf32>
    %cst_61 = arith.constant 3.200000e+01 : f32
    %166 = vector.broadcast %cst_61 : f32 to vector<16x1xf32>
    %167 = arith.divf %165, %166 : vector<16x1xf32>
    %168 = vector.broadcast %167 : vector<16x1xf32> to vector<16x32xf32>
    %169 = arith.subf %160, %168 : vector<16x32xf32>
    %170 = arith.mulf %169, %169 : vector<16x32xf32>
    %cst_62 = arith.constant dense<0.000000e+00> : vector<16xf32>
    %171 = vector.multi_reduction <add>, %170, %cst_62 [1] : vector<16x32xf32> to vector<16xf32>
    %172 = vector.shape_cast %171 : vector<16xf32> to vector<16x1xf32>
    %cst_63 = arith.constant 3.200000e+01 : f32
    %173 = vector.broadcast %cst_63 : f32 to vector<16x1xf32>
    %174 = arith.divf %172, %173 : vector<16x1xf32>
    %175 = vector.broadcast %167 : vector<16x1xf32> to vector<16x32xf32>
    %176 = arith.subf %160, %175 : vector<16x32xf32>
    %cst_64 = arith.constant 9.99999974E-6 : f32
    %177 = vector.broadcast %cst_64 : f32 to vector<16x1xf32>
    %178 = arith.addf %174, %177 : vector<16x1xf32>
    %179 = math.rsqrt %178 : vector<16x1xf32>
    %180 = vector.broadcast %179 : vector<16x1xf32> to vector<16x32xf32>
    %181 = arith.mulf %176, %180 : vector<16x32xf32>
    %182 = vector.shape_cast %14 : vector<32xf32> to vector<1x32xf32>
    %183 = vector.broadcast %182 : vector<1x32xf32> to vector<16x32xf32>
    %184 = arith.mulf %181, %183 : vector<16x32xf32>
    %185 = vector.shape_cast %15 : vector<32xf32> to vector<1x32xf32>
    %186 = vector.broadcast %185 : vector<1x32xf32> to vector<16x32xf32>
    %187 = arith.addf %184, %186 : vector<16x32xf32>
    %188 = arith.truncf %187 : vector<16x32xf32> to vector<16x32xbf16>
    %c0_65 = arith.constant 0 : index
    %c0_66 = arith.constant 0 : index
    %c0_67 = arith.constant 0 : index
    %189 = vector.load %arg12[%c0_65, %c0_66, %c0_67] : memref<1x32x8xbf16, #tpu.memory_space<vmem>>, vector<1x32x8xbf16>
    %190 = vector.shape_cast %189 : vector<1x32x8xbf16> to vector<32x8xbf16>
    %cst_68 = arith.constant dense<0.000000e+00> : vector<16x8xf32>
    %191 = tpu.matmul %188, %190, %cst_68 {dimension_numbers = #tpu.dot_dimension_numbers<[1], [0], [0], [1], [0, 0, 1, 1], [], []>} : vector<16x32xbf16>, vector<32x8xbf16>, vector<16x8xf32> -> vector<16x8xf32>
    %192 = vector.shape_cast %16 : vector<8xf32> to vector<1x8xf32>
    %193 = vector.broadcast %192 : vector<1x8xf32> to vector<16x8xf32>
    %194 = arith.addf %191, %193 : vector<16x8xf32>
    %c0_69 = arith.constant 0 : index
    %c0_70 = arith.constant 0 : index
    %c0_71 = arith.constant 0 : index
    %195 = vector.load %arg13[%c0_69, %c0_70, %c0_71] : memref<1x32x8xbf16, #tpu.memory_space<vmem>>, vector<1x32x8xbf16>
    %196 = vector.shape_cast %195 : vector<1x32x8xbf16> to vector<32x8xbf16>
    %cst_72 = arith.constant dense<0.000000e+00> : vector<16x8xf32>
    %197 = tpu.matmul %188, %196, %cst_72 {dimension_numbers = #tpu.dot_dimension_numbers<[1], [0], [0], [1], [0, 0, 1, 1], [], []>} : vector<16x32xbf16>, vector<32x8xbf16>, vector<16x8xf32> -> vector<16x8xf32>
    %198 = vector.shape_cast %17 : vector<8xf32> to vector<1x8xf32>
    %199 = vector.broadcast %198 : vector<1x8xf32> to vector<16x8xf32>
    %200 = arith.addf %197, %199 : vector<16x8xf32>
    %201 = arith.truncf %200 : vector<16x8xf32> to vector<16x8xbf16>
    %c0_73 = arith.constant 0 : index
    %c0_74 = arith.constant 0 : index
    %c0_75 = arith.constant 0 : index
    %202 = vector.load %arg14[%c0_73, %c0_74, %c0_75] : memref<1x8x128xbf16, #tpu.memory_space<vmem>>, vector<1x8x128xbf16>
    %203 = vector.shape_cast %202 : vector<1x8x128xbf16> to vector<8x128xbf16>
    %cst_76 = arith.constant dense<0.000000e+00> : vector<16x128xf32>
    %204 = tpu.matmul %201, %203, %cst_76 {dimension_numbers = #tpu.dot_dimension_numbers<[1], [0], [0], [1], [0, 0, 1, 1], [], []>} : vector<16x8xbf16>, vector<8x128xbf16>, vector<16x128xf32> -> vector<16x128xf32>
    %205 = vector.shape_cast %204 : vector<16x128xf32> to vector<16x8x16xf32>
    %206 = tpu.transpose %205, [1, 0, 2] : vector<16x8x16xf32> -> vector<8x16x16xf32>
    %207 = vector.shape_cast %206 : vector<8x16x16xf32> to vector<8x256xf32>
    %208 = arith.truncf %207 : vector<8x256xf32> to vector<8x256xbf16>
    %209 = arith.truncf %194 : vector<16x8xf32> to vector<16x8xbf16>
    %cst_77 = arith.constant dense<0.000000e+00> : vector<16x256xf32>
    %210 = tpu.matmul %209, %208, %cst_77 {dimension_numbers = #tpu.dot_dimension_numbers<[1], [0], [0], [1], [0, 0, 1, 1], [], []>} : vector<16x8xbf16>, vector<8x256xbf16>, vector<16x256xf32> -> vector<16x256xf32>
    %c0_78 = arith.constant 0 : index
    %c0_79 = arith.constant 0 : index
    %c0_80 = arith.constant 0 : index
    %c0_81 = arith.constant 0 : index
    %211 = vector.load %arg16[%c0_78, %c0_79, %c0_80, %c0_81] : memref<1x16x16x16xf32, #tpu.memory_space<vmem>>, vector<1x16x16x16xf32>
    %212 = vector.shape_cast %211 : vector<1x16x16x16xf32> to vector<16x16x16xf32>
    %213 = vector.shape_cast %210 : vector<16x256xf32> to vector<16x16x16xf32>
    %214 = arith.addf %212, %213 : vector<16x16x16xf32>
    %215 = vector.shape_cast %18 : vector<16xf32> to vector<1x1x16xf32>
    %216 = vector.broadcast %215 : vector<1x1x16xf32> to vector<16x16x16xf32>
    %217 = arith.addf %214, %216 : vector<16x16x16xf32>
    %c0_82 = arith.constant 0 : index
    %c0_83 = arith.constant 0 : index
    %c0_84 = arith.constant 0 : index
    %c0_85 = arith.constant 0 : index
    %218 = vector.load %arg16[%c0_82, %c0_83, %c0_84, %c0_85] : memref<1x16x16x16xf32, #tpu.memory_space<vmem>>, vector<1x16x16x16xf32>
    %219 = vector.shape_cast %218 : vector<1x16x16x16xf32> to vector<16x16x16xf32>
    %220 = vector.shape_cast %217 : vector<16x16x16xf32> to vector<1x16x16x16xf32>
    tpu.vector_store %arg16[%c0_82, %c0_83, %c0_84, %c0_85], %220 {strides = array<i32>} : memref<1x16x16x16xf32, #tpu.memory_space<vmem>>, vector<1x16x16x16xf32>,
    return
  }
  func.func @transform_0(%arg0: i32, %arg1: i32) -> (i32, i32, i32) {
    %c0_i32 = arith.constant 0 : i32
    %c0_i32_0 = arith.constant 0 : i32
    %c0_i32_1 = arith.constant 0 : i32
    return %arg0, %c0_i32, %c0_i32_0 : i32, i32, i32
  }
  func.func @transform_2(%arg0: i32, %arg1: i32) -> (i32, i32, i32) {
    %c0_i32 = arith.constant 0 : i32
    %c0_i32_0 = arith.constant 0 : i32
    %c0_i32_1 = arith.constant 0 : i32
    return %arg1, %c0_i32, %c0_i32_0 : i32, i32, i32
  }
  func.func @transform_3(%arg0: i32, %arg1: i32) -> (i32, i32, i32) {
    %c0_i32 = arith.constant 0 : i32
    %c0_i32_0 = arith.constant 0 : i32
    %c0_i32_1 = arith.constant 0 : i32
    return %arg1, %c0_i32, %c0_i32_0 : i32, i32, i32
  }
  func.func @transform_4(%arg0: i32, %arg1: i32) -> (i32, i32, i32) {
    %c0_i32 = arith.constant 0 : i32
    %c0_i32_0 = arith.constant 0 : i32
    %c0_i32_1 = arith.constant 0 : i32
    return %arg1, %c0_i32, %c0_i32_0 : i32, i32, i32
  }
  func.func @transform_5(%arg0: i32, %arg1: i32) -> (i32, i32, i32) {
    %c0_i32 = arith.constant 0 : i32
    %c0_i32_0 = arith.constant 0 : i32
    %c0_i32_1 = arith.constant 0 : i32
    return %arg1, %c0_i32, %c0_i32_0 : i32, i32, i32
  }
  func.func @transform_6(%arg0: i32, %arg1: i32) -> (i32, i32, i32) {
    %c0_i32 = arith.constant 0 : i32
    %c0_i32_0 = arith.constant 0 : i32
    %c0_i32_1 = arith.constant 0 : i32
    return %arg1, %c0_i32, %c0_i32_0 : i32, i32, i32
  }
  func.func @transform_7(%arg0: i32, %arg1: i32) -> (i32, i32, i32) {
    %c0_i32 = arith.constant 0 : i32
    %c0_i32_0 = arith.constant 0 : i32
    %c0_i32_1 = arith.constant 0 : i32
    return %arg1, %c0_i32, %c0_i32_0 : i32, i32, i32
  }
  func.func @transform_8(%arg0: i32, %arg1: i32) -> (i32, i32, i32) {
    %c0_i32 = arith.constant 0 : i32
    %c0_i32_0 = arith.constant 0 : i32
    %c0_i32_1 = arith.constant 0 : i32
    return %arg1, %c0_i32, %c0_i32_0 : i32, i32, i32
  }
  func.func @transform_9(%arg0: i32, %arg1: i32) -> (i32, i32, i32) {
    %c0_i32 = arith.constant 0 : i32
    %c0_i32_0 = arith.constant 0 : i32
    %c0_i32_1 = arith.constant 0 : i32
    return %arg1, %c0_i32, %c0_i32_0 : i32, i32, i32
  }
  func.func @transform_10(%arg0: i32, %arg1: i32) -> (i32, i32, i32) {
    %c0_i32 = arith.constant 0 : i32
    %c0_i32_0 = arith.constant 0 : i32
    %c0_i32_1 = arith.constant 0 : i32
    return %arg1, %c0_i32, %c0_i32_0 : i32, i32, i32
  }
  func.func @transform_11(%arg0: i32, %arg1: i32) -> (i32, i32, i32) {
    %c0_i32 = arith.constant 0 : i32
    %c0_i32_0 = arith.constant 0 : i32
    %c0_i32_1 = arith.constant 0 : i32
    return %arg1, %c0_i32, %c0_i32_0 : i32, i32, i32
  }
  func.func @transform_12(%arg0: i32, %arg1: i32) -> (i32, i32, i32) {
    %c0_i32 = arith.constant 0 : i32
    %c0_i32_0 = arith.constant 0 : i32
    %c0_i32_1 = arith.constant 0 : i32
    return %arg1, %c0_i32, %c0_i32_0 : i32, i32, i32
  }
  func.func @transform_13(%arg0: i32, %arg1: i32) -> (i32, i32, i32) {
    %c0_i32 = arith.constant 0 : i32
    %c0_i32_0 = arith.constant 0 : i32
    %c0_i32_1 = arith.constant 0 : i32
    return %arg0, %c0_i32, %c0_i32_0 : i32, i32, i32
  }
  func.func @transform_14(%arg0: i32, %arg1: i32) -> (i32, i32, i32, i32) {
    %c0_i32 = arith.constant 0 : i32
    %c0_i32_0 = arith.constant 0 : i32
    %c0_i32_1 = arith.constant 0 : i32
    %c0_i32_2 = arith.constant 0 : i32
    return %arg0, %c0_i32, %c0_i32_0, %c0_i32_1 : i32, i32, i32, i32
  }
}

</mosaic_0001>

<llo_original>
// kernel: tpu_custom_call.1
$region0: #{tpu_custom_call.1}
  #allocation0 [shape = 'u32[]', space=smem, size = 0x4, offset = 0x4, fixed_abs, tag = 'smem constant byte address 0x4 - core index']
  #allocation1 [shape = 'u32[144,128]{1,0:T(1,128)}', space=vmem, size = 0x12000, scoped, tag = 'internal scratch']
  #allocation2 [shape = 's32[1]{0}', space=sflag, size = 0x4, scoped, tag = 'scratch operand']
  #allocation7 [shape = 's32[]', space=sflag, size = 0x4, offset = 0, fixed_abs, tag = 'sflag constant byte address 0x0 - dummy sync flag']
  #allocation8 [shape = 's32[]', space=sflag, size = 0x4, offset = 0, fixed_abs, tag = 'sflag constant byte address 0x0 - dummy sync flag']
  #allocation9 [shape = 'u32[]', space=smem, size = 0x4, offset = 0x44, fixed_abs, tag = 'smem constant byte address 0x44 - assertion arg 0']
  #allocation10 [shape = 'u32[]', space=smem, size = 0x4, offset = 0x48, fixed_abs, tag = 'smem constant byte address 0x48 - assertion arg 1']
  %s0 = inlined_call_operand.vmem [shape: f32[2,16,32], index: 0, kind: input, shape index: {}]
  %s1 = inlined_call_operand.hbm [shape: f32[2,16,16,16], index: 1, kind: input, shape index: {}]
  %s2 = inlined_call_operand.vmem [shape: f32[2,1,448], index: 2, kind: input, shape index: {}]
  %s3 = inlined_call_operand.vmem [shape: bf16[2,4,16], index: 3, kind: input, shape index: {}]
  %s4 = inlined_call_operand.vmem [shape: bf16[2,32,8], index: 4, kind: input, shape index: {}]
  %s5 = inlined_call_operand.vmem [shape: bf16[2,32,8], index: 5, kind: input, shape index: {}]
  %s6 = inlined_call_operand.vmem [shape: bf16[2,32,8], index: 6, kind: input, shape index: {}]
  %s7 = inlined_call_operand.vmem [shape: bf16[2,8,32], index: 7, kind: input, shape index: {}]
  %s8 = inlined_call_operand.vmem [shape: bf16[2,32,128], index: 8, kind: input, shape index: {}]
  %s9 = inlined_call_operand.vmem [shape: bf16[2,128,32], index: 9, kind: input, shape index: {}]
  %s10 = inlined_call_operand.vmem [shape: bf16[2,32,8], index: 10, kind: input, shape index: {}]
  %s11 = inlined_call_operand.vmem [shape: bf16[2,32,8], index: 11, kind: input, shape index: {}]
  %s12 = inlined_call_operand.vmem [shape: bf16[2,8,128], index: 12, kind: input, shape index: {}]
  %s13 = inlined_call_operand.hbm [shape: f32[2,16,32], index: 13, kind: output, shape index: {0}]
  %s14 = inlined_call_operand.hbm [shape: f32[2,16,16,16], index: 14, kind: output, shape index: {1}]
  %15 = xla_tuple %s13, %s14
  %s16 = sld [smem:[#allocation0]]
  $region97: #{tpu_custom_call.1} parent=0
    _
  %s18 = ssub.s32 1, %s16
  %s19 = scalar_select 0, %s18, %s16
  $region1: #{tpu_custom_call.1} parent=0
    #allocation3 [shape = 'u8[16384]{0}', space=vmem, size = 0x4000, scoped, tag = 'output window, operand 0']
    #allocation4 [shape = 's32[2]{0}', space=sflag, size = 0x8, scoped, tag = 'scoped memory for tpu_custom_call.1']
    #allocation5 [shape = 'u8[262144]{0}', space=vmem, size = 0x40000, scoped, tag = 'output window, operand 1']
    #allocation6 [shape = 's32[2]{0}', space=sflag, size = 0x8, scoped, tag = 'scoped memory for tpu_custom_call.1']
    %20 = vsyncpa [#allocation4], 0
    %s21 = scalar_lea.sflag [#allocation4], 1
    %22 = vsyncpa %s21, 0
    %23 = vsyncpa [#allocation6], 0
    %s24 = scalar_lea.sflag [#allocation6], 1
    %25 = vsyncpa %s24, 0
    loop: start=0, step=1, limit=6
    $region2: #{tpu_custom_call.1} parent=1 // loop_pre_header
      _
    $region3: #{tpu_custom_call.1} parent=1 // loop_header
      %s27 = sphi 0, %s31
      %p28 = scmp.ge.s32.totalorder %s27, 6
      %s34 = sphi 0, %s46
      %s35 = sphi 0, %s42
      %s36 = sphi 0, %s34
      %s37 = sphi 0, %s35
      %s38 = sphi 0, %s36
      %s39 = sphi 0, %s37
      %s49 = sphi 0, %s51
      %s52 = sphi 0, %s49
      %s53 = sphi 0, %s52
      %s69 = sphi 0, %s53
      %s75 = sphi 0, %s77
      %s78 = sphi 0, %s75
      %s79 = sphi 0, %s78
      %s95 = sphi 0, %s79
      %s101 = sphi 0, %s103
      %s104 = sphi 0, %s101
      %s105 = sphi 0, %s104
      %s121 = sphi 0, %s105
      %s127 = sphi 0, %s129
      %s130 = sphi 0, %s127
      %s131 = sphi 0, %s130
      %s147 = sphi 0, %s131
      %s153 = sphi 0, %s155
      %s156 = sphi 0, %s153
      %s157 = sphi 0, %s156
      %s173 = sphi 0, %s157
      %s179 = sphi 0, %s181
      %s182 = sphi 0, %s179
      %s183 = sphi 0, %s182
      %s199 = sphi 0, %s183
      %s205 = sphi 0, %s207
      %s208 = sphi 0, %s205
      %s209 = sphi 0, %s208
      %s225 = sphi 0, %s209
      %s231 = sphi 0, %s233
      %s234 = sphi 0, %s231
      %s235 = sphi 0, %s234
      %s251 = sphi 0, %s235
      %s257 = sphi 0, %s259
      %s260 = sphi 0, %s257
      %s261 = sphi 0, %s260
      %s277 = sphi 0, %s261
      %s283 = sphi 0, %s285
      %s286 = sphi 0, %s283
      %s287 = sphi 0, %s286
      %s303 = sphi 0, %s287
      %s309 = sphi 0, %s311
      %s312 = sphi 0, %s309
      %s313 = sphi 0, %s312
      %s329 = sphi 0, %s313
      %s335 = sphi 0, %s337
      %s338 = sphi 0, %s335
      %s339 = sphi 0, %s338
      %s355 = sphi 0, %s339
      %s361 = sphi 0, %s363
      %s364 = sphi 0, %s361
      %s365 = sphi 0, %s364
      %s381 = sphi 0, %s365
      %s387 = sphi 0, %s389
      %s390 = sphi 0, %s387
      %s391 = sphi 0, %s390
      %s407 = sphi 0, %s391
    $region4: #{tpu_custom_call.1} parent=1 // loop_header_branch
      %30 = sbr.rel (%p28) target = $region8
    $region5: #{tpu_custom_call.1} parent=1 // loop_body
      %s32 = ssub.s32 %s27, 1
      %s33 = ssub.s32 %s27, 2
      %s40 = sadd.s32 1, %s35
      %p41 = scmp.ge.s32.totalorder %s40, 2
      %s42 = scalar_select %p41, 0, %s40
      %s43 = sadd.s32 1, %s34
      %s44 = scalar_select %p41, %s43, %s34
      %p45 = scmp.ge.s32.totalorder %s44, 2
      %s46 = scalar_select %p45, 0, %s44
      %s47 = ssub.s32 %s34, %s46
      %p48 = scmp.eq.s32.totalorder %s47, 0
      %s50 = sadd.s32 %s49, 1
      %s51 = scalar_select %p48, %s49, %s50
      %p54 = pneg %p48
      %p55 = scmp.eq.s32.totalorder %s27, 3
      %p56 = por %p54, %p55
      %p57 = scmp.ne.s32.totalorder %s49, %s52
      %p58 = scmp.eq.s32.totalorder %s27, 0
      %p59 = por %p57, %p58
      %p60 = scmp.ne.s32.totalorder %s49, %s52
      %p61 = scmp.eq.s32.totalorder %s32, 3
      %p62 = por %p60, %p61
      %p63 = scmp.ne.s32.totalorder %s52, %s53
      %p64 = scmp.eq.s32.totalorder %s32, 0
      %p65 = por %p63, %p64
      %p66 = scmp.ne.s32.totalorder %s52, %s53
      %p67 = scmp.eq.s32.totalorder %s33, 3
      %p68 = por %p66, %p67
      %p70 = scmp.ne.s32.totalorder %s53, %s69
      %p71 = scmp.eq.s32.totalorder %s33, 0
      %p72 = por %p70, %p71
      %s73 = ssub.s32 %s35, %s42
      %p74 = scmp.eq.s32.totalorder %s73, 0
      %s76 = sadd.s32 %s75, 1
      %s77 = scalar_select %p74, %s75, %s76
      %p80 = pneg %p74
      %p81 = scmp.eq.s32.totalorder %s27, 3
      %p82 = por %p80, %p81
      %p83 = scmp.ne.s32.totalorder %s75, %s78
      %p84 = scmp.eq.s32.totalorder %s27, 0
      %p85 = por %p83, %p84
      %p86 = scmp.ne.s32.totalorder %s75, %s78
      %p87 = scmp.eq.s32.totalorder %s32, 3
      %p88 = por %p86, %p87
      %p89 = scmp.ne.s32.totalorder %s78, %s79
      %p90 = scmp.eq.s32.totalorder %s32, 0
      %p91 = por %p89, %p90
      %p92 = scmp.ne.s32.totalorder %s78, %s79
      %p93 = scmp.eq.s32.totalorder %s33, 3
      %p94 = por %p92, %p93
      %p96 = scmp.ne.s32.totalorder %s79, %s95
      %p97 = scmp.eq.s32.totalorder %s33, 0
      %p98 = por %p96, %p97
      %s99 = ssub.s32 %s35, %s42
      %p100 = scmp.eq.s32.totalorder %s99, 0
      %s102 = sadd.s32 %s101, 1
      %s103 = scalar_select %p100, %s101, %s102
      %p106 = pneg %p100
      %p107 = scmp.eq.s32.totalorder %s27, 3
      %p108 = por %p106, %p107
      %p109 = scmp.ne.s32.totalorder %s101, %s104
      %p110 = scmp.eq.s32.totalorder %s27, 0
      %p111 = por %p109, %p110
      %p112 = scmp.ne.s32.totalorder %s101, %s104
      %p113 = scmp.eq.s32.totalorder %s32, 3
      %p114 = por %p112, %p113
      %p115 = scmp.ne.s32.totalorder %s104, %s105
      %p116 = scmp.eq.s32.totalorder %s32, 0
      %p117 = por %p115, %p116
      %p118 = scmp.ne.s32.totalorder %s104, %s105
      %p119 = scmp.eq.s32.totalorder %s33, 3
      %p120 = por %p118, %p119
      %p122 = scmp.ne.s32.totalorder %s105, %s121
      %p123 = scmp.eq.s32.totalorder %s33, 0
      %p124 = por %p122, %p123
      %s125 = ssub.s32 %s35, %s42
      %p126 = scmp.eq.s32.totalorder %s125, 0
      %s128 = sadd.s32 %s127, 1
      %s129 = scalar_select %p126, %s127, %s128
      %p132 = pneg %p126
      %p133 = scmp.eq.s32.totalorder %s27, 3
      %p134 = por %p132, %p133
      %p135 = scmp.ne.s32.totalorder %s127, %s130
      %p136 = scmp.eq.s32.totalorder %s27, 0
      %p137 = por %p135, %p136
      %p138 = scmp.ne.s32.totalorder %s127, %s130
      %p139 = scmp.eq.s32.totalorder %s32, 3
      %p140 = por %p138, %p139
      %p141 = scmp.ne.s32.totalorder %s130, %s131
      %p142 = scmp.eq.s32.totalorder %s32, 0
      %p143 = por %p141, %p142
      %p144 = scmp.ne.s32.totalorder %s130, %s131
      %p145 = scmp.eq.s32.totalorder %s33, 3
      %p146 = por %p144, %p145
      %p148 = scmp.ne.s32.totalorder %s131, %s147
      %p149 = scmp.eq.s32.totalorder %s33, 0
      %p150 = por %p148, %p149
      %s151 = ssub.s32 %s35, %s42
      %p152 = scmp.eq.s32.totalorder %s151, 0
      %s154 = sadd.s32 %s153, 1
      %s155 = scalar_select %p152, %s153, %s154
      %p158 = pneg %p152
      %p159 = scmp.eq.s32.totalorder %s27, 3
      %p160 = por %p158, %p159
      %p161 = scmp.ne.s32.totalorder %s153, %s156
      %p162 = scmp.eq.s32.totalorder %s27, 0
      %p163 = por %p161, %p162
      %p164 = scmp.ne.s32.totalorder %s153, %s156
      %p165 = scmp.eq.s32.totalorder %s32, 3
      %p166 = por %p164, %p165
      %p167 = scmp.ne.s32.totalorder %s156, %s157
      %p168 = scmp.eq.s32.totalorder %s32, 0
      %p169 = por %p167, %p168
      %p170 = scmp.ne.s32.totalorder %s156, %s157
      %p171 = scmp.eq.s32.totalorder %s33, 3
      %p172 = por %p170, %p171
      %p174 = scmp.ne.s32.totalorder %s157, %s173
      %p175 = scmp.eq.s32.totalorder %s33, 0
      %p176 = por %p174, %p175
      %s177 = ssub.s32 %s35, %s42
      %p178 = scmp.eq.s32.totalorder %s177, 0
      %s180 = sadd.s32 %s179, 1
      %s181 = scalar_select %p178, %s179, %s180
      %p184 = pneg %p178
      %p185 = scmp.eq.s32.totalorder %s27, 3
      %p186 = por %p184, %p185
      %p187 = scmp.ne.s32.totalorder %s179, %s182
      %p188 = scmp.eq.s32.totalorder %s27, 0
      %p189 = por %p187, %p188
      %p190 = scmp.ne.s32.totalorder %s179, %s182
      %p191 = scmp.eq.s32.totalorder %s32, 3
      %p192 = por %p190, %p191
      %p193 = scmp.ne.s32.totalorder %s182, %s183
      %p194 = scmp.eq.s32.totalorder %s32, 0
      %p195 = por %p193, %p194
      %p196 = scmp.ne.s32.totalorder %s182, %s183
      %p197 = scmp.eq.s32.totalorder %s33, 3
      %p198 = por %p196, %p197
      %p200 = scmp.ne.s32.totalorder %s183, %s199
      %p201 = scmp.eq.s32.totalorder %s33, 0
      %p202 = por %p200, %p201
      %s203 = ssub.s32 %s35, %s42
      %p204 = scmp.eq.s32.totalorder %s203, 0
      %s206 = sadd.s32 %s205, 1
      %s207 = scalar_select %p204, %s205, %s206
      %p210 = pneg %p204
      %p211 = scmp.eq.s32.totalorder %s27, 3
      %p212 = por %p210, %p211
      %p213 = scmp.ne.s32.totalorder %s205, %s208
      %p214 = scmp.eq.s32.totalorder %s27, 0
      %p215 = por %p213, %p214
      %p216 = scmp.ne.s32.totalorder %s205, %s208
      %p217 = scmp.eq.s32.totalorder %s32, 3
      %p218 = por %p216, %p217
      %p219 = scmp.ne.s32.totalorder %s208, %s209
      %p220 = scmp.eq.s32.totalorder %s32, 0
      %p221 = por %p219, %p220
      %p222 = scmp.ne.s32.totalorder %s208, %s209
      %p223 = scmp.eq.s32.totalorder %s33, 3
      %p224 = por %p222, %p223
      %p226 = scmp.ne.s32.totalorder %s209, %s225
      %p227 = scmp.eq.s32.totalorder %s33, 0
      %p228 = por %p226, %p227
      %s229 = ssub.s32 %s35, %s42
      %p230 = scmp.eq.s32.totalorder %s229, 0
      %s232 = sadd.s32 %s231, 1
      %s233 = scalar_select %p230, %s231, %s232
      %p236 = pneg %p230
      %p237 = scmp.eq.s32.totalorder %s27, 3
      %p238 = por %p236, %p237
      %p239 = scmp.ne.s32.totalorder %s231, %s234
      %p240 = scmp.eq.s32.totalorder %s27, 0
      %p241 = por %p239, %p240
      %p242 = scmp.ne.s32.totalorder %s231, %s234
      %p243 = scmp.eq.s32.totalorder %s32, 3
      %p244 = por %p242, %p243
      %p245 = scmp.ne.s32.totalorder %s234, %s235
      %p246 = scmp.eq.s32.totalorder %s32, 0
      %p247 = por %p245, %p246
      %p248 = scmp.ne.s32.totalorder %s234, %s235
      %p249 = scmp.eq.s32.totalorder %s33, 3
      %p250 = por %p248, %p249
      %p252 = scmp.ne.s32.totalorder %s235, %s251
      %p253 = scmp.eq.s32.totalorder %s33, 0
      %p254 = por %p252, %p253
      %s255 = ssub.s32 %s35, %s42
      %p256 = scmp.eq.s32.totalorder %s255, 0
      %s258 = sadd.s32 %s257, 1
      %s259 = scalar_select %p256, %s257, %s258
      %p262 = pneg %p256
      %p263 = scmp.eq.s32.totalorder %s27, 3
      %p264 = por %p262, %p263
      %p265 = scmp.ne.s32.totalorder %s257, %s260
      %p266 = scmp.eq.s32.totalorder %s27, 0
      %p267 = por %p265, %p266
      %p268 = scmp.ne.s32.totalorder %s257, %s260
      %p269 = scmp.eq.s32.totalorder %s32, 3
      %p270 = por %p268, %p269
      %p271 = scmp.ne.s32.totalorder %s260, %s261
      %p272 = scmp.eq.s32.totalorder %s32, 0
      %p273 = por %p271, %p272
      %p274 = scmp.ne.s32.totalorder %s260, %s261
      %p275 = scmp.eq.s32.totalorder %s33, 3
      %p276 = por %p274, %p275
      %p278 = scmp.ne.s32.totalorder %s261, %s277
      %p279 = scmp.eq.s32.totalorder %s33, 0
      %p280 = por %p278, %p279
      %s281 = ssub.s32 %s35, %s42
      %p282 = scmp.eq.s32.totalorder %s281, 0
      %s284 = sadd.s32 %s283, 1
      %s285 = scalar_select %p282, %s283, %s284
      %p288 = pneg %p282
      %p289 = scmp.eq.s32.totalorder %s27, 3
      %p290 = por %p288, %p289
      %p291 = scmp.ne.s32.totalorder %s283, %s286
      %p292 = scmp.eq.s32.totalorder %s27, 0
      %p293 = por %p291, %p292
      %p294 = scmp.ne.s32.totalorder %s283, %s286
      %p295 = scmp.eq.s32.totalorder %s32, 3
      %p296 = por %p294, %p295
      %p297 = scmp.ne.s32.totalorder %s286, %s287
      %p298 = scmp.eq.s32.totalorder %s32, 0
      %p299 = por %p297, %p298
      %p300 = scmp.ne.s32.totalorder %s286, %s287
      %p301 = scmp.eq.s32.totalorder %s33, 3
      %p302 = por %p300, %p301
      %p304 = scmp.ne.s32.totalorder %s287, %s303
      %p305 = scmp.eq.s32.totalorder %s33, 0
      %p306 = por %p304, %p305
      %s307 = ssub.s32 %s35, %s42
      %p308 = scmp.eq.s32.totalorder %s307, 0
      %s310 = sadd.s32 %s309, 1
      %s311 = scalar_select %p308, %s309, %s310
      %p314 = pneg %p308
      %p315 = scmp.eq.s32.totalorder %s27, 3
      %p316 = por %p314, %p315
      %p317 = scmp.ne.s32.totalorder %s309, %s312
      %p318 = scmp.eq.s32.totalorder %s27, 0
      %p319 = por %p317, %p318
      %p320 = scmp.ne.s32.totalorder %s309, %s312
      %p321 = scmp.eq.s32.totalorder %s32, 3
      %p322 = por %p320, %p321
      %p323 = scmp.ne.s32.totalorder %s312, %s313
      %p324 = scmp.eq.s32.totalorder %s32, 0
      %p325 = por %p323, %p324
      %p326 = scmp.ne.s32.totalorder %s312, %s313
      %p327 = scmp.eq.s32.totalorder %s33, 3
      %p328 = por %p326, %p327
      %p330 = scmp.ne.s32.totalorder %s313, %s329
      %p331 = scmp.eq.s32.totalorder %s33, 0
      %p332 = por %p330, %p331
      %s333 = ssub.s32 %s35, %s42
      %p334 = scmp.eq.s32.totalorder %s333, 0
      %s336 = sadd.s32 %s335, 1
      %s337 = scalar_select %p334, %s335, %s336
      %p340 = pneg %p334
      %p341 = scmp.eq.s32.totalorder %s27, 3
      %p342 = por %p340, %p341
      %p343 = scmp.ne.s32.totalorder %s335, %s338
      %p344 = scmp.eq.s32.totalorder %s27, 0
      %p345 = por %p343, %p344
      %p346 = scmp.ne.s32.totalorder %s335, %s338
      %p347 = scmp.eq.s32.totalorder %s32, 3
      %p348 = por %p346, %p347
      %p349 = scmp.ne.s32.totalorder %s338, %s339
      %p350 = scmp.eq.s32.totalorder %s32, 0
      %p351 = por %p349, %p350
      %p352 = scmp.ne.s32.totalorder %s338, %s339
      %p353 = scmp.eq.s32.totalorder %s33, 3
      %p354 = por %p352, %p353
      %p356 = scmp.ne.s32.totalorder %s339, %s355
      %p357 = scmp.eq.s32.totalorder %s33, 0
      %p358 = por %p356, %p357
      %s359 = ssub.s32 %s34, %s46
      %p360 = scmp.eq.s32.totalorder %s359, 0
      %s362 = sadd.s32 %s361, 1
      %s363 = scalar_select %p360, %s361, %s362
      %p366 = pneg %p360
      %p367 = scmp.eq.s32.totalorder %s27, 3
      %p368 = por %p366, %p367
      %p369 = scmp.ne.s32.totalorder %s361, %s364
      %p370 = scmp.eq.s32.totalorder %s27, 0
      %p371 = por %p369, %p370
      %p372 = scmp.ne.s32.totalorder %s361, %s364
      %p373 = scmp.eq.s32.totalorder %s32, 3
      %p374 = por %p372, %p373
      %p375 = scmp.ne.s32.totalorder %s364, %s365
      %p376 = scmp.eq.s32.totalorder %s32, 0
      %p377 = por %p375, %p376
      %p378 = scmp.ne.s32.totalorder %s364, %s365
      %p379 = scmp.eq.s32.totalorder %s33, 3
      %p380 = por %p378, %p379
      %p382 = scmp.ne.s32.totalorder %s365, %s381
      %p383 = scmp.eq.s32.totalorder %s33, 0
      %p384 = por %p382, %p383
      %s385 = ssub.s32 %s34, %s46
      %p386 = scmp.eq.s32.totalorder %s385, 0
      %s388 = sadd.s32 %s387, 1
      %s389 = scalar_select %p386, %s387, %s388
      %p392 = pneg %p386
      %p393 = scmp.eq.s32.totalorder %s27, 3
      %p394 = por %p392, %p393
      %p395 = scmp.ne.s32.totalorder %s387, %s390
      %p396 = scmp.eq.s32.totalorder %s27, 0
      %p397 = por %p395, %p396
      %p398 = scmp.ne.s32.totalorder %s387, %s390
      %p399 = scmp.eq.s32.totalorder %s32, 3
      %p400 = por %p398, %p399
      %p401 = scmp.ne.s32.totalorder %s390, %s391
      %p402 = scmp.eq.s32.totalorder %s32, 0
      %p403 = por %p401, %p402
      %p404 = scmp.ne.s32.totalorder %s390, %s391
      %p405 = scmp.eq.s32.totalorder %s33, 3
      %p406 = por %p404, %p405
      %p408 = scmp.ne.s32.totalorder %s391, %s407
      %p409 = scmp.eq.s32.totalorder %s33, 0
      %p410 = por %p408, %p409
      %p411 = scmp.le.s32.totalorder 1, %s27
      %p412 = scmp.lt.s32.totalorder %s27, 5
      %p413 = pnand %p411, %p412
      %p414 = pneg %p413
      // Predicated region
      $region9: #{tpu_custom_call.1} parent=5 // pred_check
        _
      $region10: #{tpu_custom_call.1} parent=5 // pred_check_branch
        %416 = sbr.rel (%p413) target = $region12
      $region11: #{tpu_custom_call.1} parent=5 // pred_region
        %s417 = ssub.s32 %s27, 1
      $region12: #{tpu_custom_call.1} parent=5 // pred_fallthru
        _
      %p418 = scmp.lt.s32.totalorder %s27, 4
      // Predicated region
      $region13: #{tpu_custom_call.1} parent=5 // pred_check
        %p419 = pneg %p418
      $region14: #{tpu_custom_call.1} parent=5 // pred_check_branch
        %421 = sbr.rel (%p419) target = $region16
      $region15: #{tpu_custom_call.1} parent=5 // pred_region
        // Predicated region
        $region17: #{tpu_custom_call.1} parent=15 // pred_check
          %p422 = pneg %p59
        $region18: #{tpu_custom_call.1} parent=15 // pred_check_branch
          %424 = sbr.rel (%p422) target = $region20
        $region19: #{tpu_custom_call.1} parent=15 // pred_region
          %p425 = scmp.lt.s32.totalorder %s34, 1
          %s426 = scalar_select %p425, %s34, 1
          %s427 = smul.addr %s426, 2
          %s428 = smul.addr %s427, 8
          %s429 = scalar_lea.vmem %s0, %s428
        $region20: #{tpu_custom_call.1} parent=15 // pred_fallthru
          _
        // Predicated region
        $region21: #{tpu_custom_call.1} parent=15 // pred_check
          %p430 = pneg %p85
        $region22: #{tpu_custom_call.1} parent=15 // pred_check_branch
          %432 = sbr.rel (%p430) target = $region24
        $region23: #{tpu_custom_call.1} parent=15 // pred_region
          %p433 = scmp.lt.s32.totalorder %s35, 1
          %s434 = scalar_select %p433, %s35, 1
          %s435 = smul.addr %s434, 4
          %s436 = scalar_lea.vmem %s2, %s435
        $region24: #{tpu_custom_call.1} parent=15 // pred_fallthru
          _
        // Predicated region
        $region25: #{tpu_custom_call.1} parent=15 // pred_check
          %p437 = pneg %p111
        $region26: #{tpu_custom_call.1} parent=15 // pred_check_branch
          %439 = sbr.rel (%p437) target = $region28
        $region27: #{tpu_custom_call.1} parent=15 // pred_region
          %p440 = scmp.lt.s32.totalorder %s35, 1
          %s441 = scalar_select %p440, %s35, 1
          %s442 = smul.addr %s441, 2
          %s443 = scalar_lea.vmem %s3, %s442
        $region28: #{tpu_custom_call.1} parent=15 // pred_fallthru
          _
        // Predicated region
        $region29: #{tpu_custom_call.1} parent=15 // pred_check
          %p444 = pneg %p137
        $region30: #{tpu_custom_call.1} parent=15 // pred_check_branch
          %446 = sbr.rel (%p444) target = $region32
        $region31: #{tpu_custom_call.1} parent=15 // pred_region
          %p447 = scmp.lt.s32.totalorder %s35, 1
          %s448 = scalar_select %p447, %s35, 1
          %s449 = smul.addr %s448, 4
          %s450 = smul.addr %s449, 4
          %s451 = scalar_lea.vmem %s4, %s450
        $region32: #{tpu_custom_call.1} parent=15 // pred_fallthru
          _
        // Predicated region
        $region33: #{tpu_custom_call.1} parent=15 // pred_check
          %p452 = pneg %p163
        $region34: #{tpu_custom_call.1} parent=15 // pred_check_branch
          %454 = sbr.rel (%p452) target = $region36
        $region35: #{tpu_custom_call.1} parent=15 // pred_region
          %p455 = scmp.lt.s32.totalorder %s35, 1
          %s456 = scalar_select %p455, %s35, 1
          %s457 = smul.addr %s456, 4
          %s458 = smul.addr %s457, 4
          %s459 = scalar_lea.vmem %s5, %s458
        $region36: #{tpu_custom_call.1} parent=15 // pred_fallthru
          _
        // Predicated region
        $region37: #{tpu_custom_call.1} parent=15 // pred_check
          %p460 = pneg %p189
        $region38: #{tpu_custom_call.1} parent=15 // pred_check_branch
          %462 = sbr.rel (%p460) target = $region40
        $region39: #{tpu_custom_call.1} parent=15 // pred_region
          %p463 = scmp.lt.s32.totalorder %s35, 1
          %s464 = scalar_select %p463, %s35, 1
          %s465 = smul.addr %s464, 4
          %s466 = smul.addr %s465, 4
          %s467 = scalar_lea.vmem %s6, %s466
        $region40: #{tpu_custom_call.1} parent=15 // pred_fallthru
          _
        // Predicated region
        $region41: #{tpu_custom_call.1} parent=15 // pred_check
          %p468 = pneg %p215
        $region42: #{tpu_custom_call.1} parent=15 // pred_check_branch
          %470 = sbr.rel (%p468) target = $region44
        $region43: #{tpu_custom_call.1} parent=15 // pred_region
          %p471 = scmp.lt.s32.totalorder %s35, 1
          %s472 = scalar_select %p471, %s35, 1
          %s473 = smul.addr %s472, 4
          %s474 = scalar_lea.vmem %s7, %s473
        $region44: #{tpu_custom_call.1} parent=15 // pred_fallthru
          _
        // Predicated region
        $region45: #{tpu_custom_call.1} parent=15 // pred_check
          %p475 = pneg %p241
        $region46: #{tpu_custom_call.1} parent=15 // pred_check_branch
          %477 = sbr.rel (%p475) target = $region48
        $region47: #{tpu_custom_call.1} parent=15 // pred_region
          %p478 = scmp.lt.s32.totalorder %s35, 1
          %s479 = scalar_select %p478, %s35, 1
          %s480 = smul.addr %s479, 4
          %s481 = smul.addr %s480, 4
          %s482 = scalar_lea.vmem %s8, %s481
        $region48: #{tpu_custom_call.1} parent=15 // pred_fallthru
          _
        // Predicated region
        $region49: #{tpu_custom_call.1} parent=15 // pred_check
          %p483 = pneg %p267
        $region50: #{tpu_custom_call.1} parent=15 // pred_check_branch
          %485 = sbr.rel (%p483) target = $region52
        $region51: #{tpu_custom_call.1} parent=15 // pred_region
          %p486 = scmp.lt.s32.totalorder %s35, 1
          %s487 = scalar_select %p486, %s35, 1
          %s488 = smul.addr %s487, 16
          %s489 = smul.addr %s488, 4
          %s490 = scalar_lea.vmem %s9, %s489
        $region52: #{tpu_custom_call.1} parent=15 // pred_fallthru
          _
        // Predicated region
        $region53: #{tpu_custom_call.1} parent=15 // pred_check
          %p491 = pneg %p293
        $region54: #{tpu_custom_call.1} parent=15 // pred_check_branch
          %493 = sbr.rel (%p491) target = $region56
        $region55: #{tpu_custom_call.1} parent=15 // pred_region
          %p494 = scmp.lt.s32.totalorder %s35, 1
          %s495 = scalar_select %p494, %s35, 1
          %s496 = smul.addr %s495, 4
          %s497 = smul.addr %s496, 4
          %s498 = scalar_lea.vmem %s10, %s497
        $region56: #{tpu_custom_call.1} parent=15 // pred_fallthru
          _
        // Predicated region
        $region57: #{tpu_custom_call.1} parent=15 // pred_check
          %p499 = pneg %p319
        $region58: #{tpu_custom_call.1} parent=15 // pred_check_branch
          %501 = sbr.rel (%p499) target = $region60
        $region59: #{tpu_custom_call.1} parent=15 // pred_region
          %p502 = scmp.lt.s32.totalorder %s35, 1
          %s503 = scalar_select %p502, %s35, 1
          %s504 = smul.addr %s503, 4
          %s505 = smul.addr %s504, 4
          %s506 = scalar_lea.vmem %s11, %s505
        $region60: #{tpu_custom_call.1} parent=15 // pred_fallthru
          _
        // Predicated region
        $region61: #{tpu_custom_call.1} parent=15 // pred_check
          %p507 = pneg %p345
        $region62: #{tpu_custom_call.1} parent=15 // pred_check_branch
          %509 = sbr.rel (%p507) target = $region64
        $region63: #{tpu_custom_call.1} parent=15 // pred_region
          %p510 = scmp.lt.s32.totalorder %s35, 1
          %s511 = scalar_select %p510, %s35, 1
          %s512 = smul.addr %s511, 4
          %s513 = scalar_lea.vmem %s12, %s512
        $region64: #{tpu_custom_call.1} parent=15 // pred_fallthru
          _
      $region16: #{tpu_custom_call.1} parent=5 // pred_fallthru
        _
      %p514 = scmp.le.s32.totalorder 1, %s27
      %p515 = scmp.lt.s32.totalorder %s27, 5
      %p516 = pnand %p514, %p515
      %p517 = pneg %p516
      // Predicated region
      $region65: #{tpu_custom_call.1} parent=5 // pred_check
        _
      $region66: #{tpu_custom_call.1} parent=5 // pred_check_branch
        %519 = sbr.rel (%p516) target = $region68
      $region67: #{tpu_custom_call.1} parent=5 // pred_region
        %s520 = ssub.s32 %s27, 1
        %p521 = scmp.lt.s32.totalorder %s36, 1
        %s522 = scalar_select %p521, %s36, 1
        %s523 = smul.addr %s522, 2
        %s524 = smul.addr %s523, 8
        %s525 = scalar_lea.vmem %s0, %s524
        %p526 = pneg %p65
        %p527 = pneg %p62
        %p528 = scmp.lt.s32.totalorder %s37, 1
        %s529 = scalar_select %p528, %s37, 1
        %s530 = smul.addr %s529, 4
        %s531 = scalar_lea.vmem %s2, %s530
        %p532 = pneg %p91
        %p533 = pneg %p88
        %p534 = scmp.lt.s32.totalorder %s37, 1
        %s535 = scalar_select %p534, %s37, 1
        %s536 = smul.addr %s535, 2
        %s537 = scalar_lea.vmem %s3, %s536
        %p538 = pneg %p117
        %p539 = pneg %p114
        %p540 = scmp.lt.s32.totalorder %s37, 1
        %s541 = scalar_select %p540, %s37, 1
        %s542 = smul.addr %s541, 4
        %s543 = smul.addr %s542, 4
        %s544 = scalar_lea.vmem %s4, %s543
        %p545 = pneg %p143
        %p546 = pneg %p140
        %p547 = scmp.lt.s32.totalorder %s37, 1
        %s548 = scalar_select %p547, %s37, 1
        %s549 = smul.addr %s548, 4
        %s550 = smul.addr %s549, 4
        %s551 = scalar_lea.vmem %s5, %s550
        %p552 = pneg %p169
        %p553 = pneg %p166
        %p554 = scmp.lt.s32.totalorder %s37, 1
        %s555 = scalar_select %p554, %s37, 1
        %s556 = smul.addr %s555, 4
        %s557 = smul.addr %s556, 4
        %s558 = scalar_lea.vmem %s6, %s557
        %p559 = pneg %p195
        %p560 = pneg %p192
        %p561 = scmp.lt.s32.totalorder %s37, 1
        %s562 = scalar_select %p561, %s37, 1
        %s563 = smul.addr %s562, 4
        %s564 = scalar_lea.vmem %s7, %s563
        %p565 = pneg %p221
        %p566 = pneg %p218
        %p567 = scmp.lt.s32.totalorder %s37, 1
        %s568 = scalar_select %p567, %s37, 1
        %s569 = smul.addr %s568, 4
        %s570 = smul.addr %s569, 4
        %s571 = scalar_lea.vmem %s8, %s570
        %p572 = pneg %p247
        %p573 = pneg %p244
        %p574 = scmp.lt.s32.totalorder %s37, 1
        %s575 = scalar_select %p574, %s37, 1
        %s576 = smul.addr %s575, 16
        %s577 = smul.addr %s576, 4
        %s578 = scalar_lea.vmem %s9, %s577
        %p579 = pneg %p273
        %p580 = pneg %p270
        %p581 = scmp.lt.s32.totalorder %s37, 1
        %s582 = scalar_select %p581, %s37, 1
        %s583 = smul.addr %s582, 4
        %s584 = smul.addr %s583, 4
        %s585 = scalar_lea.vmem %s10, %s584
        %p586 = pneg %p299
        %p587 = pneg %p296
        %p588 = scmp.lt.s32.totalorder %s37, 1
        %s589 = scalar_select %p588, %s37, 1
        %s590 = smul.addr %s589, 4
        %s591 = smul.addr %s590, 4
        %s592 = scalar_lea.vmem %s11, %s591
        %p593 = pneg %p325
        %p594 = pneg %p322
        %p595 = scmp.lt.s32.totalorder %s37, 1
        %s596 = scalar_select %p595, %s37, 1
        %s597 = smul.addr %s596, 4
        %s598 = scalar_lea.vmem %s12, %s597
        %p599 = pneg %p351
        %p600 = pneg %p348
        %p601 = pneg %p377
        %p602 = pneg %p374
        %s603 = sand.u32 %s364, 1
        %s604 = scalar_lea.sflag [#allocation4], %s603
        %s605 = sand.u32 %s364, 1
        %s606 = smul.addr %s605, 16
        %s607 = scalar_lea.vmem [#allocation3], %s606
        %p608 = pneg %p403
        %p609 = pneg %p400
        %s610 = sand.u32 %s390, 1
        %s611 = scalar_lea.sflag [#allocation6], %s610
        %s612 = sand.u32 %s390, 1
        %s613 = smul.addr %s612, 256
        %s614 = scalar_lea.vmem [#allocation5], %s613
        %p615 = scmp.lt.s32.totalorder %s36, 1
        %s616 = scalar_select %p615, %s36, 1
        %s617 = smul.addr %s616, 2
        %s618 = smul.addr %s617, 8
        %s619 = scalar_lea.vmem %s0, %s618
        %p620 = scmp.lt.s32.totalorder %s37, 1
        %s621 = scalar_select %p620, %s37, 1
        %s622 = smul.addr %s621, 4
        %s623 = scalar_lea.vmem %s2, %s622
        %p624 = scmp.lt.s32.totalorder %s37, 1
        %s625 = scalar_select %p624, %s37, 1
        %s626 = smul.addr %s625, 2
        %s627 = scalar_lea.vmem %s3, %s626
        %p628 = scmp.lt.s32.totalorder %s37, 1
        %s629 = scalar_select %p628, %s37, 1
        %s630 = smul.addr %s629, 4
        %s631 = smul.addr %s630, 4
        %s632 = scalar_lea.vmem %s4, %s631
        %p633 = scmp.lt.s32.totalorder %s37, 1
        %s634 = scalar_select %p633, %s37, 1
        %s635 = smul.addr %s634, 4
        %s636 = smul.addr %s635, 4
        %s637 = scalar_lea.vmem %s5, %s636
        %p638 = scmp.lt.s32.totalorder %s37, 1
        %s639 = scalar_select %p638, %s37, 1
        %s640 = smul.addr %s639, 4
        %s641 = smul.addr %s640, 4
        %s642 = scalar_lea.vmem %s6, %s641
        %p643 = scmp.lt.s32.totalorder %s37, 1
        %s644 = scalar_select %p643, %s37, 1
        %s645 = smul.addr %s644, 4
        %s646 = scalar_lea.vmem %s7, %s645
        %p647 = scmp.lt.s32.totalorder %s37, 1
        %s648 = scalar_select %p647, %s37, 1
        %s649 = smul.addr %s648, 4
        %s650 = smul.addr %s649, 4
        %s651 = scalar_lea.vmem %s8, %s650
        %p652 = scmp.lt.s32.totalorder %s37, 1
        %s653 = scalar_select %p652, %s37, 1
        %s654 = smul.addr %s653, 16
        %s655 = smul.addr %s654, 4
        %s656 = scalar_lea.vmem %s9, %s655
        %p657 = scmp.lt.s32.totalorder %s37, 1
        %s658 = scalar_select %p657, %s37, 1
        %s659 = smul.addr %s658, 4
        %s660 = smul.addr %s659, 4
        %s661 = scalar_lea.vmem %s10, %s660
        %p662 = scmp.lt.s32.totalorder %s37, 1
        %s663 = scalar_select %p662, %s37, 1
        %s664 = smul.addr %s663, 4
        %s665 = smul.addr %s664, 4
        %s666 = scalar_lea.vmem %s11, %s665
        %p667 = scmp.lt.s32.totalorder %s37, 1
        %s668 = scalar_select %p667, %s37, 1
        %s669 = smul.addr %s668, 4
        %s670 = scalar_lea.vmem %s12, %s669
        %p672 = scmp.eq.s32.totalorder %s37, 0
        // Predicated region
        $region69: #{tpu_custom_call.1} parent=67 // pred_check
          %p673 = pneg %p672
        $region70: #{tpu_custom_call.1} parent=67 // pred_check_branch
          %675 = sbr.rel (%p673) target = $region72
        $region71: #{tpu_custom_call.1} parent=67 // pred_region
          %v676 = vld [vmem:[%s619] sm:$0xff]
          %v677 = vld [vmem:[%s619 + $0x8] sm:$0xff]
          %vm678 = vcmask 261120
          %679 = vst.msk [vmem:[%s607] sm:$0xff] %vm678, %v676
          %680 = vst.msk [vmem:[%s607 + $0x8] sm:$0xff] %vm678, %v677
          %s681 = smul.u32 %s36, 256
          %s682 = smul.addr %s681, 16
          %s683 = scalar_lea.hbm %s1, %s682
          // Predicated region
          $region73: #{tpu_custom_call.1} parent=71 // pred_check
            _
          $region74: #{tpu_custom_call.1} parent=71 // pred_check_branch
            %685 = sbr.rel target = $region76
          $region75: #{tpu_custom_call.1} parent=71 // pred_region
            %686 = sst [smem:[#allocation9]] [#allocation8]
            %687 = sst [smem:[#allocation10]] [#allocation7]
          $region76: #{tpu_custom_call.1} parent=71 // pred_fallthru
            _
          %689 = shalt.err (0)
          %s691 = sshll.u32 %s614, 4
          %s692 = int_to_ptr.vmem [resolvable:$true] %s691
          %694 = dma.hbm_to_vmem [thread:$0]  %s683, 4096, %s692, [#allocation2]
          %s695 = smul.u32 16, 16
          %s696 = smul.u32 %s695, 1
          %s697 = sshll.u32 %s696, 4
          %698 = dma.done [#allocation2], %s697
        $region72: #{tpu_custom_call.1} parent=67 // pred_fallthru
          _
        %v699 = vld [vmem:[%s623] sm:$0xf]
        %v700 = vld [vmem:[%s607] sm:$0xff]
        %v701 = vld [vmem:[%s607 + $0x8] sm:$0xff]
        %vm702 = vcmask 261120
        %v703 = vsel %vm702, %v700, 0.0
        %704 = vadd.xlane.f32.xlu0 %v703
        %v705 = vpop.xlane.xlu0 %704
        %v706 = vsel %vm702, %v701, 0.0
        %707 = vadd.xlane.f32.xlu0 %v706
        %v708 = vpop.xlane.xlu0 %707
        %v709 = vrcp.pop 32.0
        %v710 = vmul.f32 %v705, %v709
        %v711 = vmul.f32 %v708, %v709
        %v712 = vsub.f32 %v700, %v710
        %v713 = vsub.f32 %v701, %v711
        %v714 = vmul.f32 %v712, %v712
        %v715 = vmul.f32 %v713, %v713
        %v716 = vsel %vm702, %v714, 0.0
        %717 = vadd.xlane.f32.xlu0 %v716
        %v718 = vpop.xlane.xlu0 %717
        %v719 = vsel %vm702, %v715, 0.0
        %720 = vadd.xlane.f32.xlu0 %v719
        %v721 = vpop.xlane.xlu0 %720
        %v722 = vmul.f32 %v718, %v709
        %v723 = vmul.f32 %v721, %v709
        %v724 = vadd.f32 %v722, 1e-05
        %v725 = vadd.f32 %v723, 1e-05
        %v726 = vrsqrt.pop %v724
        %v727 = vrsqrt.pop %v725
        %v728 = vmul.f32 %v712, %v726
        %v729 = vmul.f32 %v713, %v727
        %v731 = vlaneseq
        %v732 = vshrl.u32 %v731, 7
        %v733 = vsub.s32 0, %v732
        %v734 = vrot.slane %v699, %v733
        %v736 = vmul.f32 %v728, %v734
        %v737 = vmul.f32 %v729, %v734
        %738 = vrot.lane.b32.xlu0 %v734, 96
        %v739 = vpop.permute.xlu0 %738
        %v741 = vadd.f32 %v736, %v739
        %v742 = vadd.f32 %v737, %v739
        %v743 = vpack.c.bf16 %v742, %v741
        %v744 = vld [vmem:[%s632] sm:$0xf]
        %v745 = vld [vmem:[%s632 + $0x4] sm:$0xf]
        %v746 = vld [vmem:[%s632 + $0x8] sm:$0xf]
        %v747 = vld [vmem:[%s632 + $0xc] sm:$0xf]
        %v752 = vunpack.c.l.b16 %v744
        %v753 = vunpack.c.l.b16 %v745
        %v754 = vunpack.c.l.b16 %v746
        %v755 = vunpack.c.l.b16 %v747
        %v756 = vpack.c.b16 %v753, %v752
        %v757 = vpack.c.b16 %v755, %v754
        %v761 = vsel %vm702, %v743, 0
        %763 = vmatprep.subr.bf16.mxu0 0
        %764 = vmatpush1.bf16.msra.mxu0 0
        %765 = vmatprep.subr.bf16.mxu0 0
        %766 = vmatpush1.bf16.msra.mxu0 0
        %767 = vmatprep.subr.bf16.mxu0 0
        %768 = vmatpush1.bf16.msra.mxu0 0
        %769 = vmatprep.subr.bf16.mxu0 0
        %770 = vmatpush1.bf16.msra.mxu0 0
        %771 = vmatprep.subr.bf16.mxu0 0
        %772 = vmatpush1.bf16.msra.mxu0 0
        %773 = vmatprep.subr.bf16.mxu0 0
        %774 = vmatpush1.bf16.msra.mxu0 0
        %775 = vmatprep.subr.bf16.mxu0 0
        %776 = vmatpush1.bf16.msra.mxu0 %v757
        %777 = vmatprep.subr.bf16.mxu0 0
        %778 = vmatpush1.bf16.msra.mxu0 %v756
        %779 = vmatprep.subr.bf16.mxu0 0
        %780 = vmatpush2.bf16.msra.mxu0 0
        %781 = vmatprep.subr.bf16.mxu0 0
        %782 = vmatpush2.bf16.msra.mxu0 0
        %783 = vmatprep.subr.bf16.mxu0 0
        %784 = vmatpush2.bf16.msra.mxu0 0
        %785 = vmatprep.subr.bf16.mxu0 0
        %786 = vmatpush2.bf16.msra.mxu0 0
        %787 = vmatprep.subr.bf16.mxu0 0
        %788 = vmatpush2.bf16.msra.mxu0 0
        %789 = vmatprep.subr.bf16.mxu0 0
        %790 = vmatpush2.bf16.msra.mxu0 0
        %791 = vmatprep.subr.bf16.mxu0 0
        %792 = vmatpush2.bf16.msra.mxu0 0
        %793 = vmatprep.subr.bf16.mxu0 0
        %794 = vmatpush2.bf16.msra.mxu0 0
        %795 = vmatprep.mubr.bf16.mxu0 0
        %796 = vmatmul.mubr.bf16.gmra.mxu0 %v761
        %v797 = vpop.f32.mrf.mxu0
        %v798 = vadd.f32 0.0, %v797
        %v799 = vpop.f32.mrf.mxu0
        %v800 = vpop.f32.mrf.mxu0
        %v801 = vadd.f32 0.0, %v800
        %v802 = vpop.f32.mrf.mxu0
        %803 = vdwg.mxu0
        %v804 = vld [vmem:[%s637] sm:$0xf]
        %v805 = vld [vmem:[%s637 + $0x4] sm:$0xf]
        %v806 = vld [vmem:[%s637 + $0x8] sm:$0xf]
        %v807 = vld [vmem:[%s637 + $0xc] sm:$0xf]
        %v812 = vunpack.c.l.b16 %v804
        %v813 = vunpack.c.l.b16 %v805
        %v814 = vunpack.c.l.b16 %v806
        %v815 = vunpack.c.l.b16 %v807
        %v816 = vpack.c.b16 %v813, %v812
        %v817 = vpack.c.b16 %v815, %v814
        %820 = vmatprep.subr.bf16.mxu0 0
        %821 = vmatpush1.bf16.msra.mxu0 0
        %822 = vmatprep.subr.bf16.mxu0 0
        %823 = vmatpush1.bf16.msra.mxu0 0
        %824 = vmatprep.subr.bf16.mxu0 0
        %825 = vmatpush1.bf16.msra.mxu0 0
        %826 = vmatprep.subr.bf16.mxu0 0
        %827 = vmatpush1.bf16.msra.mxu0 0
        %828 = vmatprep.subr.bf16.mxu0 0
        %829 = vmatpush1.bf16.msra.mxu0 0
        %830 = vmatprep.subr.bf16.mxu0 0
        %831 = vmatpush1.bf16.msra.mxu0 0
        %832 = vmatprep.subr.bf16.mxu0 0
        %833 = vmatpush1.bf16.msra.mxu0 %v817
        %834 = vmatprep.subr.bf16.mxu0 0
        %835 = vmatpush1.bf16.msra.mxu0 %v816
        %836 = vmatprep.subr.bf16.mxu0 0
        %837 = vmatpush2.bf16.msra.mxu0 0
        %838 = vmatprep.subr.bf16.mxu0 0
        %839 = vmatpush2.bf16.msra.mxu0 0
        %840 = vmatprep.subr.bf16.mxu0 0
        %841 = vmatpush2.bf16.msra.mxu0 0
        %842 = vmatprep.subr.bf16.mxu0 0
        %843 = vmatpush2.bf16.msra.mxu0 0
        %844 = vmatprep.subr.bf16.mxu0 0
        %845 = vmatpush2.bf16.msra.mxu0 0
        %846 = vmatprep.subr.bf16.mxu0 0
        %847 = vmatpush2.bf16.msra.mxu0 0
        %848 = vmatprep.subr.bf16.mxu0 0
        %849 = vmatpush2.bf16.msra.mxu0 0
        %850 = vmatprep.subr.bf16.mxu0 0
        %851 = vmatpush2.bf16.msra.mxu0 0
        %852 = vmatprep.mubr.bf16.mxu0 0
        %853 = vmatmul.mubr.bf16.gmra.mxu0 %v761
        %v854 = vpop.f32.mrf.mxu0
        %v855 = vadd.f32 0.0, %v854
        %v856 = vpop.f32.mrf.mxu0
        %v857 = vpop.f32.mrf.mxu0
        %v858 = vadd.f32 0.0, %v857
        %v859 = vpop.f32.mrf.mxu0
        %860 = vdwg.mxu0
        %v861 = vld [vmem:[%s642] sm:$0xf]
        %v862 = vld [vmem:[%s642 + $0x4] sm:$0xf]
        %v863 = vld [vmem:[%s642 + $0x8] sm:$0xf]
        %v864 = vld [vmem:[%s642 + $0xc] sm:$0xf]
        %v869 = vunpack.c.l.b16 %v861
        %v870 = vunpack.c.l.b16 %v862
        %v871 = vunpack.c.l.b16 %v863
        %v872 = vunpack.c.l.b16 %v864
        %v873 = vpack.c.b16 %v870, %v869
        %v874 = vpack.c.b16 %v872, %v871
        %877 = vmatprep.subr.bf16.mxu0 0
        %878 = vmatpush1.bf16.msra.mxu0 0
        %879 = vmatprep.subr.bf16.mxu0 0
        %880 = vmatpush1.bf16.msra.mxu0 0
        %881 = vmatprep.subr.bf16.mxu0 0
        %882 = vmatpush1.bf16.msra.mxu0 0
        %883 = vmatprep.subr.bf16.mxu0 0
        %884 = vmatpush1.bf16.msra.mxu0 0
        %885 = vmatprep.subr.bf16.mxu0 0
        %886 = vmatpush1.bf16.msra.mxu0 0
        %887 = vmatprep.subr.bf16.mxu0 0
        %888 = vmatpush1.bf16.msra.mxu0 0
        %889 = vmatprep.subr.bf16.mxu0 0
        %890 = vmatpush1.bf16.msra.mxu0 %v874
        %891 = vmatprep.subr.bf16.mxu0 0
        %892 = vmatpush1.bf16.msra.mxu0 %v873
        %893 = vmatprep.subr.bf16.mxu0 0
        %894 = vmatpush2.bf16.msra.mxu0 0
        %895 = vmatprep.subr.bf16.mxu0 0
        %896 = vmatpush2.bf16.msra.mxu0 0
        %897 = vmatprep.subr.bf16.mxu0 0
        %898 = vmatpush2.bf16.msra.mxu0 0
        %899 = vmatprep.subr.bf16.mxu0 0
        %900 = vmatpush2.bf16.msra.mxu0 0
        %901 = vmatprep.subr.bf16.mxu0 0
        %902 = vmatpush2.bf16.msra.mxu0 0
        %903 = vmatprep.subr.bf16.mxu0 0
        %904 = vmatpush2.bf16.msra.mxu0 0
        %905 = vmatprep.subr.bf16.mxu0 0
        %906 = vmatpush2.bf16.msra.mxu0 0
        %907 = vmatprep.subr.bf16.mxu0 0
        %908 = vmatpush2.bf16.msra.mxu0 0
        %909 = vmatprep.mubr.bf16.mxu0 0
        %910 = vmatmul.mubr.bf16.gmra.mxu0 %v761
        %v911 = vpop.f32.mrf.mxu0
        %v912 = vadd.f32 0.0, %v911
        %v913 = vpop.f32.mrf.mxu0
        %v914 = vpop.f32.mrf.mxu0
        %v915 = vadd.f32 0.0, %v914
        %v916 = vpop.f32.mrf.mxu0
        %917 = vdwg.mxu0
        %920 = vrot.lane.b32.xlu0 %v798, 126
        %v921 = vpop.permute.xlu0 %920
        %922 = vrot.lane.b32.xlu0 %v801, 126
        %v923 = vpop.permute.xlu0 %922
        %926 = vrot.lane.b32.xlu0 %v798, 124
        %v927 = vpop.permute.xlu0 %926
        %928 = vrot.lane.b32.xlu0 %v801, 124
        %v929 = vpop.permute.xlu0 %928
        %932 = vrot.lane.b32.xlu0 %v798, 122
        %v933 = vpop.permute.xlu0 %932
        %934 = vrot.lane.b32.xlu0 %v801, 122
        %v935 = vpop.permute.xlu0 %934
        %v938 = vcombine.low %v798, %v927
        %v939 = vcombine.high %v798, %v927
        %v941 = vunpack.c.l.s4 1983009808
        %v942 = vunpack.c.0.s8 %v941
        %v943 = vlaneseq
        %v944 = vshrl.u32 %v943, 7
        %v945 = vsub.s32 %v942, %v944
        %v946 = vrot.slane %v938, %v945
        %v948 = vunpack.c.l.s4 1983009808
        %v949 = vunpack.c.0.s8 %v948
        %v950 = vlaneseq
        %v951 = vshrl.u32 %v950, 7
        %v952 = vsub.s32 %v949, %v951
        %v953 = vrot.slane %v939, %v952
        %v954 = vcombine.low %v921, %v933
        %v955 = vcombine.high %v921, %v933
        %v957 = vunpack.c.l.s4 1983009808
        %v958 = vunpack.c.0.s8 %v957
        %v959 = vlaneseq
        %v960 = vshrl.u32 %v959, 7
        %v961 = vsub.s32 %v958, %v960
        %v962 = vrot.slane %v954, %v961
        %v964 = vunpack.c.l.s4 1983009808
        %v965 = vunpack.c.0.s8 %v964
        %v966 = vlaneseq
        %v967 = vshrl.u32 %v966, 7
        %v968 = vsub.s32 %v965, %v967
        %v969 = vrot.slane %v955, %v968
        %v970 = vcombine.low %v946, %v962
        %v971 = vcombine.high %v946, %v962
        %v973 = vunpack.c.l.s4 1934713408
        %v974 = vunpack.c.0.s8 %v973
        %v975 = vlaneseq
        %v976 = vshrl.u32 %v975, 7
        %v977 = vsub.s32 %v974, %v976
        %v978 = vrot.slane %v970, %v977
        %v980 = vunpack.c.l.s4 1934713408
        %v981 = vunpack.c.0.s8 %v980
        %v982 = vlaneseq
        %v983 = vshrl.u32 %v982, 7
        %v984 = vsub.s32 %v981, %v983
        %v985 = vrot.slane %v971, %v984
        %v986 = vcombine.low %v953, %v969
        %v987 = vcombine.high %v953, %v969
        %v989 = vunpack.c.l.s4 1934713408
        %v990 = vunpack.c.0.s8 %v989
        %v991 = vlaneseq
        %v992 = vshrl.u32 %v991, 7
        %v993 = vsub.s32 %v990, %v992
        %v994 = vrot.slane %v986, %v993
        %v996 = vunpack.c.l.s4 1934713408
        %v997 = vunpack.c.0.s8 %v996
        %v998 = vlaneseq
        %v999 = vshrl.u32 %v998, 7
        %v1000 = vsub.s32 %v997, %v999
        %v1001 = vrot.slane %v987, %v1000
        %v1002 = vcombine.high %v978, 0.0
        %v1003 = vcombine.high %v985, 0.0
        %v1004 = vcombine.high %v994, 0.0
        %v1005 = vcombine.high %v1001, 0.0
        %v1006 = vcombine.low %v801, %v929
        %v1007 = vcombine.high %v801, %v929
        %v1009 = vunpack.c.l.s4 1983009808
        %v1010 = vunpack.c.0.s8 %v1009
        %v1011 = vlaneseq
        %v1012 = vshrl.u32 %v1011, 7
        %v1013 = vsub.s32 %v1010, %v1012
        %v1014 = vrot.slane %v1006, %v1013
        %v1016 = vunpack.c.l.s4 1983009808
        %v1017 = vunpack.c.0.s8 %v1016
        %v1018 = vlaneseq
        %v1019 = vshrl.u32 %v1018, 7
        %v1020 = vsub.s32 %v1017, %v1019
        %v1021 = vrot.slane %v1007, %v1020
        %v1022 = vcombine.low %v923, %v935
        %v1023 = vcombine.high %v923, %v935
        %v1025 = vunpack.c.l.s4 1983009808
        %v1026 = vunpack.c.0.s8 %v1025
        %v1027 = vlaneseq
        %v1028 = vshrl.u32 %v1027, 7
        %v1029 = vsub.s32 %v1026, %v1028
        %v1030 = vrot.slane %v1022, %v1029
        %v1032 = vunpack.c.l.s4 1983009808
        %v1033 = vunpack.c.0.s8 %v1032
        %v1034 = vlaneseq
        %v1035 = vshrl.u32 %v1034, 7
        %v1036 = vsub.s32 %v1033, %v1035
        %v1037 = vrot.slane %v1023, %v1036
        %v1038 = vcombine.low %v1014, %v1030
        %v1039 = vcombine.high %v1014, %v1030
        %v1041 = vunpack.c.l.s4 1934713408
        %v1042 = vunpack.c.0.s8 %v1041
        %v1043 = vlaneseq
        %v1044 = vshrl.u32 %v1043, 7
        %v1045 = vsub.s32 %v1042, %v1044
        %v1046 = vrot.slane %v1038, %v1045
        %v1048 = vunpack.c.l.s4 1934713408
        %v1049 = vunpack.c.0.s8 %v1048
        %v1050 = vlaneseq
        %v1051 = vshrl.u32 %v1050, 7
        %v1052 = vsub.s32 %v1049, %v1051
        %v1053 = vrot.slane %v1039, %v1052
        %v1054 = vcombine.low %v1021, %v1037
        %v1055 = vcombine.high %v1021, %v1037
        %v1057 = vunpack.c.l.s4 1934713408
        %v1058 = vunpack.c.0.s8 %v1057
        %v1059 = vlaneseq
        %v1060 = vshrl.u32 %v1059, 7
        %v1061 = vsub.s32 %v1058, %v1060
        %v1062 = vrot.slane %v1054, %v1061
        %v1064 = vunpack.c.l.s4 1934713408
        %v1065 = vunpack.c.0.s8 %v1064
        %v1066 = vlaneseq
        %v1067 = vshrl.u32 %v1066, 7
        %v1068 = vsub.s32 %v1065, %v1067
        %v1069 = vrot.slane %v1055, %v1068
        %v1070 = vcombine.high %v1046, 0.0
        %v1071 = vcombine.high %v1053, 0.0
        %v1072 = vcombine.high %v1062, 0.0
        %v1073 = vcombine.high %v1069, 0.0
        %v1074 = vcombine.low %v978, %v985
        %v1076 = vunpack.c.l.s4 1983009808
        %v1077 = vunpack.c.0.s8 %v1076
        %v1078 = vlaneseq
        %v1079 = vshrl.u32 %v1078, 7
        %v1080 = vsub.s32 %v1077, %v1079
        %v1081 = vrot.slane %v1074, %v1080
        %v1082 = vcombine.low %v1002, %v1003
        %v1084 = vunpack.c.l.s4 1983009808
        %v1085 = vunpack.c.0.s8 %v1084
        %v1086 = vlaneseq
        %v1087 = vshrl.u32 %v1086, 7
        %v1088 = vsub.s32 %v1085, %v1087
        %v1089 = vrot.slane %v1082, %v1088
        %v1090 = vcombine.low %v994, %v1001
        %v1092 = vunpack.c.l.s4 1983009808
        %v1093 = vunpack.c.0.s8 %v1092
        %v1094 = vlaneseq
        %v1095 = vshrl.u32 %v1094, 7
        %v1096 = vsub.s32 %v1093, %v1095
        %v1097 = vrot.slane %v1090, %v1096
        %v1098 = vcombine.low %v1004, %v1005
        %v1100 = vunpack.c.l.s4 1983009808
        %v1101 = vunpack.c.0.s8 %v1100
        %v1102 = vlaneseq
        %v1103 = vshrl.u32 %v1102, 7
        %v1104 = vsub.s32 %v1101, %v1103
        %v1105 = vrot.slane %v1098, %v1104
        %v1106 = vcombine.low %v1081, %v1089
        %v1107 = vcombine.high %v1081, %v1089
        %v1109 = vunpack.c.l.s4 1934713408
        %v1110 = vunpack.c.0.s8 %v1109
        %v1111 = vlaneseq
        %v1112 = vshrl.u32 %v1111, 7
        %v1113 = vsub.s32 %v1110, %v1112
        %v1114 = vrot.slane %v1106, %v1113
        %v1116 = vunpack.c.l.s4 1934713408
        %v1117 = vunpack.c.0.s8 %v1116
        %v1118 = vlaneseq
        %v1119 = vshrl.u32 %v1118, 7
        %v1120 = vsub.s32 %v1117, %v1119
        %v1121 = vrot.slane %v1107, %v1120
        %v1122 = vcombine.low %v1097, %v1105
        %v1123 = vcombine.high %v1097, %v1105
        %v1125 = vunpack.c.l.s4 1934713408
        %v1126 = vunpack.c.0.s8 %v1125
        %v1127 = vlaneseq
        %v1128 = vshrl.u32 %v1127, 7
        %v1129 = vsub.s32 %v1126, %v1128
        %v1130 = vrot.slane %v1122, %v1129
        %v1132 = vunpack.c.l.s4 1934713408
        %v1133 = vunpack.c.0.s8 %v1132
        %v1134 = vlaneseq
        %v1135 = vshrl.u32 %v1134, 7
        %v1136 = vsub.s32 %v1133, %v1135
        %v1137 = vrot.slane %v1123, %v1136
        %v1138 = vcombine.low %v1114, %v1130
        %v1139 = vcombine.high %v1114, %v1130
        %v1140 = vcombine.low %v1121, %v1137
        %v1141 = vcombine.high %v1121, %v1137
        %v1142 = vcombine.low %v1046, %v1053
        %v1144 = vunpack.c.l.s4 1983009808
        %v1145 = vunpack.c.0.s8 %v1144
        %v1146 = vlaneseq
        %v1147 = vshrl.u32 %v1146, 7
        %v1148 = vsub.s32 %v1145, %v1147
        %v1149 = vrot.slane %v1142, %v1148
        %v1150 = vcombine.low %v1070, %v1071
        %v1152 = vunpack.c.l.s4 1983009808
        %v1153 = vunpack.c.0.s8 %v1152
        %v1154 = vlaneseq
        %v1155 = vshrl.u32 %v1154, 7
        %v1156 = vsub.s32 %v1153, %v1155
        %v1157 = vrot.slane %v1150, %v1156
        %v1158 = vcombine.low %v1062, %v1069
        %v1160 = vunpack.c.l.s4 1983009808
        %v1161 = vunpack.c.0.s8 %v1160
        %v1162 = vlaneseq
        %v1163 = vshrl.u32 %v1162, 7
        %v1164 = vsub.s32 %v1161, %v1163
        %v1165 = vrot.slane %v1158, %v1164
        %v1166 = vcombine.low %v1072, %v1073
        %v1168 = vunpack.c.l.s4 1983009808
        %v1169 = vunpack.c.0.s8 %v1168
        %v1170 = vlaneseq
        %v1171 = vshrl.u32 %v1170, 7
        %v1172 = vsub.s32 %v1169, %v1171
        %v1173 = vrot.slane %v1166, %v1172
        %v1174 = vcombine.low %v1149, %v1157
        %v1175 = vcombine.high %v1149, %v1157
        %v1177 = vunpack.c.l.s4 1934713408
        %v1178 = vunpack.c.0.s8 %v1177
        %v1179 = vlaneseq
        %v1180 = vshrl.u32 %v1179, 7
        %v1181 = vsub.s32 %v1178, %v1180
        %v1182 = vrot.slane %v1174, %v1181
        %v1184 = vunpack.c.l.s4 1934713408
        %v1185 = vunpack.c.0.s8 %v1184
        %v1186 = vlaneseq
        %v1187 = vshrl.u32 %v1186, 7
        %v1188 = vsub.s32 %v1185, %v1187
        %v1189 = vrot.slane %v1175, %v1188
        %v1190 = vcombine.low %v1165, %v1173
        %v1191 = vcombine.high %v1165, %v1173
        %v1193 = vunpack.c.l.s4 1934713408
        %v1194 = vunpack.c.0.s8 %v1193
        %v1195 = vlaneseq
        %v1196 = vshrl.u32 %v1195, 7
        %v1197 = vsub.s32 %v1194, %v1196
        %v1198 = vrot.slane %v1190, %v1197
        %v1200 = vunpack.c.l.s4 1934713408
        %v1201 = vunpack.c.0.s8 %v1200
        %v1202 = vlaneseq
        %v1203 = vshrl.u32 %v1202, 7
        %v1204 = vsub.s32 %v1201, %v1203
        %v1205 = vrot.slane %v1191, %v1204
        %v1206 = vcombine.low %v1182, %v1198
        %v1207 = vcombine.high %v1182, %v1198
        %v1208 = vcombine.low %v1189, %v1205
        %v1209 = vcombine.high %v1189, %v1205
        %v1210 = vpack.c.bf16 %v1206, %v1138
        %v1211 = vpack.c.bf16 %v1207, %v1139
        %v1212 = vpack.c.bf16 %v1208, %v1140
        %v1213 = vpack.c.bf16 %v1209, %v1141
        %1216 = vrot.lane.b32.xlu0 %v855, 126
        %v1217 = vpop.permute.xlu0 %1216
        %1218 = vrot.lane.b32.xlu0 %v858, 126
        %v1219 = vpop.permute.xlu0 %1218
        %1222 = vrot.lane.b32.xlu0 %v855, 124
        %v1223 = vpop.permute.xlu0 %1222
        %1224 = vrot.lane.b32.xlu0 %v858, 124
        %v1225 = vpop.permute.xlu0 %1224
        %1228 = vrot.lane.b32.xlu0 %v855, 122
        %v1229 = vpop.permute.xlu0 %1228
        %1230 = vrot.lane.b32.xlu0 %v858, 122
        %v1231 = vpop.permute.xlu0 %1230
        %v1234 = vcombine.low %v855, %v1223
        %v1235 = vcombine.high %v855, %v1223
        %v1237 = vunpack.c.l.s4 1983009808
        %v1238 = vunpack.c.0.s8 %v1237
        %v1239 = vlaneseq
        %v1240 = vshrl.u32 %v1239, 7
        %v1241 = vsub.s32 %v1238, %v1240
        %v1242 = vrot.slane %v1234, %v1241
        %v1244 = vunpack.c.l.s4 1983009808
        %v1245 = vunpack.c.0.s8 %v1244
        %v1246 = vlaneseq
        %v1247 = vshrl.u32 %v1246, 7
        %v1248 = vsub.s32 %v1245, %v1247
        %v1249 = vrot.slane %v1235, %v1248
        %v1250 = vcombine.low %v1217, %v1229
        %v1251 = vcombine.high %v1217, %v1229
        %v1253 = vunpack.c.l.s4 1983009808
        %v1254 = vunpack.c.0.s8 %v1253
        %v1255 = vlaneseq
        %v1256 = vshrl.u32 %v1255, 7
        %v1257 = vsub.s32 %v1254, %v1256
        %v1258 = vrot.slane %v1250, %v1257
        %v1260 = vunpack.c.l.s4 1983009808
        %v1261 = vunpack.c.0.s8 %v1260
        %v1262 = vlaneseq
        %v1263 = vshrl.u32 %v1262, 7
        %v1264 = vsub.s32 %v1261, %v1263
        %v1265 = vrot.slane %v1251, %v1264
        %v1266 = vcombine.low %v1242, %v1258
        %v1267 = vcombine.high %v1242, %v1258
        %v1269 = vunpack.c.l.s4 1934713408
        %v1270 = vunpack.c.0.s8 %v1269
        %v1271 = vlaneseq
        %v1272 = vshrl.u32 %v1271, 7
        %v1273 = vsub.s32 %v1270, %v1272
        %v1274 = vrot.slane %v1266, %v1273
        %v1276 = vunpack.c.l.s4 1934713408
        %v1277 = vunpack.c.0.s8 %v1276
        %v1278 = vlaneseq
        %v1279 = vshrl.u32 %v1278, 7
        %v1280 = vsub.s32 %v1277, %v1279
        %v1281 = vrot.slane %v1267, %v1280
        %v1282 = vcombine.low %v1249, %v1265
        %v1283 = vcombine.high %v1249, %v1265
        %v1285 = vunpack.c.l.s4 1934713408
        %v1286 = vunpack.c.0.s8 %v1285
        %v1287 = vlaneseq
        %v1288 = vshrl.u32 %v1287, 7
        %v1289 = vsub.s32 %v1286, %v1288
        %v1290 = vrot.slane %v1282, %v1289
        %v1292 = vunpack.c.l.s4 1934713408
        %v1293 = vunpack.c.0.s8 %v1292
        %v1294 = vlaneseq
        %v1295 = vshrl.u32 %v1294, 7
        %v1296 = vsub.s32 %v1293, %v1295
        %v1297 = vrot.slane %v1283, %v1296
        %v1298 = vcombine.high %v1274, 0.0
        %v1299 = vcombine.high %v1281, 0.0
        %v1300 = vcombine.high %v1290, 0.0
        %v1301 = vcombine.high %v1297, 0.0
        %v1302 = vcombine.low %v858, %v1225
        %v1303 = vcombine.high %v858, %v1225
        %v1305 = vunpack.c.l.s4 1983009808
        %v1306 = vunpack.c.0.s8 %v1305
        %v1307 = vlaneseq
        %v1308 = vshrl.u32 %v1307, 7
        %v1309 = vsub.s32 %v1306, %v1308
        %v1310 = vrot.slane %v1302, %v1309
        %v1312 = vunpack.c.l.s4 1983009808
        %v1313 = vunpack.c.0.s8 %v1312
        %v1314 = vlaneseq
        %v1315 = vshrl.u32 %v1314, 7
        %v1316 = vsub.s32 %v1313, %v1315
        %v1317 = vrot.slane %v1303, %v1316
        %v1318 = vcombine.low %v1219, %v1231
        %v1319 = vcombine.high %v1219, %v1231
        %v1321 = vunpack.c.l.s4 1983009808
        %v1322 = vunpack.c.0.s8 %v1321
        %v1323 = vlaneseq
        %v1324 = vshrl.u32 %v1323, 7
        %v1325 = vsub.s32 %v1322, %v1324
        %v1326 = vrot.slane %v1318, %v1325
        %v1328 = vunpack.c.l.s4 1983009808
        %v1329 = vunpack.c.0.s8 %v1328
        %v1330 = vlaneseq
        %v1331 = vshrl.u32 %v1330, 7
        %v1332 = vsub.s32 %v1329, %v1331
        %v1333 = vrot.slane %v1319, %v1332
        %v1334 = vcombine.low %v1310, %v1326
        %v1335 = vcombine.high %v1310, %v1326
        %v1337 = vunpack.c.l.s4 1934713408
        %v1338 = vunpack.c.0.s8 %v1337
        %v1339 = vlaneseq
        %v1340 = vshrl.u32 %v1339, 7
        %v1341 = vsub.s32 %v1338, %v1340
        %v1342 = vrot.slane %v1334, %v1341
        %v1344 = vunpack.c.l.s4 1934713408
        %v1345 = vunpack.c.0.s8 %v1344
        %v1346 = vlaneseq
        %v1347 = vshrl.u32 %v1346, 7
        %v1348 = vsub.s32 %v1345, %v1347
        %v1349 = vrot.slane %v1335, %v1348
        %v1350 = vcombine.low %v1317, %v1333
        %v1351 = vcombine.high %v1317, %v1333
        %v1353 = vunpack.c.l.s4 1934713408
        %v1354 = vunpack.c.0.s8 %v1353
        %v1355 = vlaneseq
        %v1356 = vshrl.u32 %v1355, 7
        %v1357 = vsub.s32 %v1354, %v1356
        %v1358 = vrot.slane %v1350, %v1357
        %v1360 = vunpack.c.l.s4 1934713408
        %v1361 = vunpack.c.0.s8 %v1360
        %v1362 = vlaneseq
        %v1363 = vshrl.u32 %v1362, 7
        %v1364 = vsub.s32 %v1361, %v1363
        %v1365 = vrot.slane %v1351, %v1364
        %v1366 = vcombine.high %v1342, 0.0
        %v1367 = vcombine.high %v1349, 0.0
        %v1368 = vcombine.high %v1358, 0.0
        %v1369 = vcombine.high %v1365, 0.0
        %v1370 = vcombine.low %v1274, %v1281
        %v1372 = vunpack.c.l.s4 1983009808
        %v1373 = vunpack.c.0.s8 %v1372
        %v1374 = vlaneseq
        %v1375 = vshrl.u32 %v1374, 7
        %v1376 = vsub.s32 %v1373, %v1375
        %v1377 = vrot.slane %v1370, %v1376
        %v1378 = vcombine.low %v1298, %v1299
        %v1380 = vunpack.c.l.s4 1983009808
        %v1381 = vunpack.c.0.s8 %v1380
        %v1382 = vlaneseq
        %v1383 = vshrl.u32 %v1382, 7
        %v1384 = vsub.s32 %v1381, %v1383
        %v1385 = vrot.slane %v1378, %v1384
        %v1386 = vcombine.low %v1290, %v1297
        %v1388 = vunpack.c.l.s4 1983009808
        %v1389 = vunpack.c.0.s8 %v1388
        %v1390 = vlaneseq
        %v1391 = vshrl.u32 %v1390, 7
        %v1392 = vsub.s32 %v1389, %v1391
        %v1393 = vrot.slane %v1386, %v1392
        %v1394 = vcombine.low %v1300, %v1301
        %v1396 = vunpack.c.l.s4 1983009808
        %v1397 = vunpack.c.0.s8 %v1396
        %v1398 = vlaneseq
        %v1399 = vshrl.u32 %v1398, 7
        %v1400 = vsub.s32 %v1397, %v1399
        %v1401 = vrot.slane %v1394, %v1400
        %v1402 = vcombine.low %v1377, %v1385
        %v1403 = vcombine.high %v1377, %v1385
        %v1405 = vunpack.c.l.s4 1934713408
        %v1406 = vunpack.c.0.s8 %v1405
        %v1407 = vlaneseq
        %v1408 = vshrl.u32 %v1407, 7
        %v1409 = vsub.s32 %v1406, %v1408
        %v1410 = vrot.slane %v1402, %v1409
        %v1412 = vunpack.c.l.s4 1934713408
        %v1413 = vunpack.c.0.s8 %v1412
        %v1414 = vlaneseq
        %v1415 = vshrl.u32 %v1414, 7
        %v1416 = vsub.s32 %v1413, %v1415
        %v1417 = vrot.slane %v1403, %v1416
        %v1418 = vcombine.low %v1393, %v1401
        %v1419 = vcombine.high %v1393, %v1401
        %v1421 = vunpack.c.l.s4 1934713408
        %v1422 = vunpack.c.0.s8 %v1421
        %v1423 = vlaneseq
        %v1424 = vshrl.u32 %v1423, 7
        %v1425 = vsub.s32 %v1422, %v1424
        %v1426 = vrot.slane %v1418, %v1425
        %v1428 = vunpack.c.l.s4 1934713408
        %v1429 = vunpack.c.0.s8 %v1428
        %v1430 = vlaneseq
        %v1431 = vshrl.u32 %v1430, 7
        %v1432 = vsub.s32 %v1429, %v1431
        %v1433 = vrot.slane %v1419, %v1432
        %v1434 = vcombine.low %v1410, %v1426
        %v1435 = vcombine.high %v1410, %v1426
        %v1436 = vcombine.low %v1417, %v1433
        %v1437 = vcombine.high %v1417, %v1433
        %v1438 = vcombine.low %v1342, %v1349
        %v1440 = vunpack.c.l.s4 1983009808
        %v1441 = vunpack.c.0.s8 %v1440
        %v1442 = vlaneseq
        %v1443 = vshrl.u32 %v1442, 7
        %v1444 = vsub.s32 %v1441, %v1443
        %v1445 = vrot.slane %v1438, %v1444
        %v1446 = vcombine.low %v1366, %v1367
        %v1448 = vunpack.c.l.s4 1983009808
        %v1449 = vunpack.c.0.s8 %v1448
        %v1450 = vlaneseq
        %v1451 = vshrl.u32 %v1450, 7
        %v1452 = vsub.s32 %v1449, %v1451
        %v1453 = vrot.slane %v1446, %v1452
        %v1454 = vcombine.low %v1358, %v1365
        %v1456 = vunpack.c.l.s4 1983009808
        %v1457 = vunpack.c.0.s8 %v1456
        %v1458 = vlaneseq
        %v1459 = vshrl.u32 %v1458, 7
        %v1460 = vsub.s32 %v1457, %v1459
        %v1461 = vrot.slane %v1454, %v1460
        %v1462 = vcombine.low %v1368, %v1369
        %v1464 = vunpack.c.l.s4 1983009808
        %v1465 = vunpack.c.0.s8 %v1464
        %v1466 = vlaneseq
        %v1467 = vshrl.u32 %v1466, 7
        %v1468 = vsub.s32 %v1465, %v1467
        %v1469 = vrot.slane %v1462, %v1468
        %v1470 = vcombine.low %v1445, %v1453
        %v1471 = vcombine.high %v1445, %v1453
        %v1473 = vunpack.c.l.s4 1934713408
        %v1474 = vunpack.c.0.s8 %v1473
        %v1475 = vlaneseq
        %v1476 = vshrl.u32 %v1475, 7
        %v1477 = vsub.s32 %v1474, %v1476
        %v1478 = vrot.slane %v1470, %v1477
        %v1480 = vunpack.c.l.s4 1934713408
        %v1481 = vunpack.c.0.s8 %v1480
        %v1482 = vlaneseq
        %v1483 = vshrl.u32 %v1482, 7
        %v1484 = vsub.s32 %v1481, %v1483
        %v1485 = vrot.slane %v1471, %v1484
        %v1486 = vcombine.low %v1461, %v1469
        %v1487 = vcombine.high %v1461, %v1469
        %v1489 = vunpack.c.l.s4 1934713408
        %v1490 = vunpack.c.0.s8 %v1489
        %v1491 = vlaneseq
        %v1492 = vshrl.u32 %v1491, 7
        %v1493 = vsub.s32 %v1490, %v1492
        %v1494 = vrot.slane %v1486, %v1493
        %v1496 = vunpack.c.l.s4 1934713408
        %v1497 = vunpack.c.0.s8 %v1496
        %v1498 = vlaneseq
        %v1499 = vshrl.u32 %v1498, 7
        %v1500 = vsub.s32 %v1497, %v1499
        %v1501 = vrot.slane %v1487, %v1500
        %v1502 = vcombine.low %v1478, %v1494
        %v1503 = vcombine.high %v1478, %v1494
        %v1504 = vcombine.low %v1485, %v1501
        %v1505 = vcombine.high %v1485, %v1501
        %v1506 = vpack.c.bf16 %v1502, %v1434
        %v1507 = vpack.c.bf16 %v1503, %v1435
        %v1508 = vpack.c.bf16 %v1504, %v1436
        %v1509 = vpack.c.bf16 %v1505, %v1437
        %1512 = vrot.lane.b32.xlu0 %v912, 126
        %v1513 = vpop.permute.xlu0 %1512
        %1514 = vrot.lane.b32.xlu0 %v915, 126
        %v1515 = vpop.permute.xlu0 %1514
        %1518 = vrot.lane.b32.xlu0 %v912, 124
        %v1519 = vpop.permute.xlu0 %1518
        %1520 = vrot.lane.b32.xlu0 %v915, 124
        %v1521 = vpop.permute.xlu0 %1520
        %1524 = vrot.lane.b32.xlu0 %v912, 122
        %v1525 = vpop.permute.xlu0 %1524
        %1526 = vrot.lane.b32.xlu0 %v915, 122
        %v1527 = vpop.permute.xlu0 %1526
        %v1530 = vcombine.low %v912, %v1519
        %v1531 = vcombine.high %v912, %v1519
        %v1533 = vunpack.c.l.s4 1983009808
        %v1534 = vunpack.c.0.s8 %v1533
        %v1535 = vlaneseq
        %v1536 = vshrl.u32 %v1535, 7
        %v1537 = vsub.s32 %v1534, %v1536
        %v1538 = vrot.slane %v1530, %v1537
        %v1540 = vunpack.c.l.s4 1983009808
        %v1541 = vunpack.c.0.s8 %v1540
        %v1542 = vlaneseq
        %v1543 = vshrl.u32 %v1542, 7
        %v1544 = vsub.s32 %v1541, %v1543
        %v1545 = vrot.slane %v1531, %v1544
        %v1546 = vcombine.low %v1513, %v1525
        %v1547 = vcombine.high %v1513, %v1525
        %v1549 = vunpack.c.l.s4 1983009808
        %v1550 = vunpack.c.0.s8 %v1549
        %v1551 = vlaneseq
        %v1552 = vshrl.u32 %v1551, 7
        %v1553 = vsub.s32 %v1550, %v1552
        %v1554 = vrot.slane %v1546, %v1553
        %v1556 = vunpack.c.l.s4 1983009808
        %v1557 = vunpack.c.0.s8 %v1556
        %v1558 = vlaneseq
        %v1559 = vshrl.u32 %v1558, 7
        %v1560 = vsub.s32 %v1557, %v1559
        %v1561 = vrot.slane %v1547, %v1560
        %v1562 = vcombine.low %v1538, %v1554
        %v1563 = vcombine.high %v1538, %v1554
        %v1565 = vunpack.c.l.s4 1934713408
        %v1566 = vunpack.c.0.s8 %v1565
        %v1567 = vlaneseq
        %v1568 = vshrl.u32 %v1567, 7
        %v1569 = vsub.s32 %v1566, %v1568
        %v1570 = vrot.slane %v1562, %v1569
        %v1572 = vunpack.c.l.s4 1934713408
        %v1573 = vunpack.c.0.s8 %v1572
        %v1574 = vlaneseq
        %v1575 = vshrl.u32 %v1574, 7
        %v1576 = vsub.s32 %v1573, %v1575
        %v1577 = vrot.slane %v1563, %v1576
        %v1578 = vcombine.low %v1545, %v1561
        %v1579 = vcombine.high %v1545, %v1561
        %v1581 = vunpack.c.l.s4 1934713408
        %v1582 = vunpack.c.0.s8 %v1581
        %v1583 = vlaneseq
        %v1584 = vshrl.u32 %v1583, 7
        %v1585 = vsub.s32 %v1582, %v1584
        %v1586 = vrot.slane %v1578, %v1585
        %v1588 = vunpack.c.l.s4 1934713408
        %v1589 = vunpack.c.0.s8 %v1588
        %v1590 = vlaneseq
        %v1591 = vshrl.u32 %v1590, 7
        %v1592 = vsub.s32 %v1589, %v1591
        %v1593 = vrot.slane %v1579, %v1592
        %v1594 = vcombine.high %v1570, 0.0
        %v1595 = vcombine.high %v1577, 0.0
        %v1596 = vcombine.high %v1586, 0.0
        %v1597 = vcombine.high %v1593, 0.0
        %v1598 = vcombine.low %v915, %v1521
        %v1599 = vcombine.high %v915, %v1521
        %v1601 = vunpack.c.l.s4 1983009808
        %v1602 = vunpack.c.0.s8 %v1601
        %v1603 = vlaneseq
        %v1604 = vshrl.u32 %v1603, 7
        %v1605 = vsub.s32 %v1602, %v1604
        %v1606 = vrot.slane %v1598, %v1605
        %v1608 = vunpack.c.l.s4 1983009808
        %v1609 = vunpack.c.0.s8 %v1608
        %v1610 = vlaneseq
        %v1611 = vshrl.u32 %v1610, 7
        %v1612 = vsub.s32 %v1609, %v1611
        %v1613 = vrot.slane %v1599, %v1612
        %v1614 = vcombine.low %v1515, %v1527
        %v1615 = vcombine.high %v1515, %v1527
        %v1617 = vunpack.c.l.s4 1983009808
        %v1618 = vunpack.c.0.s8 %v1617
        %v1619 = vlaneseq
        %v1620 = vshrl.u32 %v1619, 7
        %v1621 = vsub.s32 %v1618, %v1620
        %v1622 = vrot.slane %v1614, %v1621
        %v1624 = vunpack.c.l.s4 1983009808
        %v1625 = vunpack.c.0.s8 %v1624
        %v1626 = vlaneseq
        %v1627 = vshrl.u32 %v1626, 7
        %v1628 = vsub.s32 %v1625, %v1627
        %v1629 = vrot.slane %v1615, %v1628
        %v1630 = vcombine.low %v1606, %v1622
        %v1631 = vcombine.high %v1606, %v1622
        %v1633 = vunpack.c.l.s4 1934713408
        %v1634 = vunpack.c.0.s8 %v1633
        %v1635 = vlaneseq
        %v1636 = vshrl.u32 %v1635, 7
        %v1637 = vsub.s32 %v1634, %v1636
        %v1638 = vrot.slane %v1630, %v1637
        %v1640 = vunpack.c.l.s4 1934713408
        %v1641 = vunpack.c.0.s8 %v1640
        %v1642 = vlaneseq
        %v1643 = vshrl.u32 %v1642, 7
        %v1644 = vsub.s32 %v1641, %v1643
        %v1645 = vrot.slane %v1631, %v1644
        %v1646 = vcombine.low %v1613, %v1629
        %v1647 = vcombine.high %v1613, %v1629
        %v1649 = vunpack.c.l.s4 1934713408
        %v1650 = vunpack.c.0.s8 %v1649
        %v1651 = vlaneseq
        %v1652 = vshrl.u32 %v1651, 7
        %v1653 = vsub.s32 %v1650, %v1652
        %v1654 = vrot.slane %v1646, %v1653
        %v1656 = vunpack.c.l.s4 1934713408
        %v1657 = vunpack.c.0.s8 %v1656
        %v1658 = vlaneseq
        %v1659 = vshrl.u32 %v1658, 7
        %v1660 = vsub.s32 %v1657, %v1659
        %v1661 = vrot.slane %v1647, %v1660
        %v1662 = vcombine.high %v1638, 0.0
        %v1663 = vcombine.high %v1645, 0.0
        %v1664 = vcombine.high %v1654, 0.0
        %v1665 = vcombine.high %v1661, 0.0
        %v1666 = vcombine.low %v1570, %v1577
        %v1668 = vunpack.c.l.s4 1983009808
        %v1669 = vunpack.c.0.s8 %v1668
        %v1670 = vlaneseq
        %v1671 = vshrl.u32 %v1670, 7
        %v1672 = vsub.s32 %v1669, %v1671
        %v1673 = vrot.slane %v1666, %v1672
        %v1674 = vcombine.low %v1594, %v1595
        %v1676 = vunpack.c.l.s4 1983009808
        %v1677 = vunpack.c.0.s8 %v1676
        %v1678 = vlaneseq
        %v1679 = vshrl.u32 %v1678, 7
        %v1680 = vsub.s32 %v1677, %v1679
        %v1681 = vrot.slane %v1674, %v1680
        %v1682 = vcombine.low %v1586, %v1593
        %v1684 = vunpack.c.l.s4 1983009808
        %v1685 = vunpack.c.0.s8 %v1684
        %v1686 = vlaneseq
        %v1687 = vshrl.u32 %v1686, 7
        %v1688 = vsub.s32 %v1685, %v1687
        %v1689 = vrot.slane %v1682, %v1688
        %v1690 = vcombine.low %v1596, %v1597
        %v1692 = vunpack.c.l.s4 1983009808
        %v1693 = vunpack.c.0.s8 %v1692
        %v1694 = vlaneseq
        %v1695 = vshrl.u32 %v1694, 7
        %v1696 = vsub.s32 %v1693, %v1695
        %v1697 = vrot.slane %v1690, %v1696
        %v1698 = vcombine.low %v1673, %v1681
        %v1699 = vcombine.high %v1673, %v1681
        %v1701 = vunpack.c.l.s4 1934713408
        %v1702 = vunpack.c.0.s8 %v1701
        %v1703 = vlaneseq
        %v1704 = vshrl.u32 %v1703, 7
        %v1705 = vsub.s32 %v1702, %v1704
        %v1706 = vrot.slane %v1698, %v1705
        %v1708 = vunpack.c.l.s4 1934713408
        %v1709 = vunpack.c.0.s8 %v1708
        %v1710 = vlaneseq
        %v1711 = vshrl.u32 %v1710, 7
        %v1712 = vsub.s32 %v1709, %v1711
        %v1713 = vrot.slane %v1699, %v1712
        %v1714 = vcombine.low %v1689, %v1697
        %v1715 = vcombine.high %v1689, %v1697
        %v1717 = vunpack.c.l.s4 1934713408
        %v1718 = vunpack.c.0.s8 %v1717
        %v1719 = vlaneseq
        %v1720 = vshrl.u32 %v1719, 7
        %v1721 = vsub.s32 %v1718, %v1720
        %v1722 = vrot.slane %v1714, %v1721
        %v1724 = vunpack.c.l.s4 1934713408
        %v1725 = vunpack.c.0.s8 %v1724
        %v1726 = vlaneseq
        %v1727 = vshrl.u32 %v1726, 7
        %v1728 = vsub.s32 %v1725, %v1727
        %v1729 = vrot.slane %v1715, %v1728
        %v1730 = vcombine.low %v1706, %v1722
        %v1731 = vcombine.high %v1706, %v1722
        %v1732 = vcombine.low %v1713, %v1729
        %v1733 = vcombine.high %v1713, %v1729
        %v1734 = vcombine.low %v1638, %v1645
        %v1736 = vunpack.c.l.s4 1983009808
        %v1737 = vunpack.c.0.s8 %v1736
        %v1738 = vlaneseq
        %v1739 = vshrl.u32 %v1738, 7
        %v1740 = vsub.s32 %v1737, %v1739
        %v1741 = vrot.slane %v1734, %v1740
        %v1742 = vcombine.low %v1662, %v1663
        %v1744 = vunpack.c.l.s4 1983009808
        %v1745 = vunpack.c.0.s8 %v1744
        %v1746 = vlaneseq
        %v1747 = vshrl.u32 %v1746, 7
        %v1748 = vsub.s32 %v1745, %v1747
        %v1749 = vrot.slane %v1742, %v1748
        %v1750 = vcombine.low %v1654, %v1661
        %v1752 = vunpack.c.l.s4 1983009808
        %v1753 = vunpack.c.0.s8 %v1752
        %v1754 = vlaneseq
        %v1755 = vshrl.u32 %v1754, 7
        %v1756 = vsub.s32 %v1753, %v1755
        %v1757 = vrot.slane %v1750, %v1756
        %v1758 = vcombine.low %v1664, %v1665
        %v1760 = vunpack.c.l.s4 1983009808
        %v1761 = vunpack.c.0.s8 %v1760
        %v1762 = vlaneseq
        %v1763 = vshrl.u32 %v1762, 7
        %v1764 = vsub.s32 %v1761, %v1763
        %v1765 = vrot.slane %v1758, %v1764
        %v1766 = vcombine.low %v1741, %v1749
        %v1767 = vcombine.high %v1741, %v1749
        %v1769 = vunpack.c.l.s4 1934713408
        %v1770 = vunpack.c.0.s8 %v1769
        %v1771 = vlaneseq
        %v1772 = vshrl.u32 %v1771, 7
        %v1773 = vsub.s32 %v1770, %v1772
        %v1774 = vrot.slane %v1766, %v1773
        %v1776 = vunpack.c.l.s4 1934713408
        %v1777 = vunpack.c.0.s8 %v1776
        %v1778 = vlaneseq
        %v1779 = vshrl.u32 %v1778, 7
        %v1780 = vsub.s32 %v1777, %v1779
        %v1781 = vrot.slane %v1767, %v1780
        %v1782 = vcombine.low %v1757, %v1765
        %v1783 = vcombine.high %v1757, %v1765
        %v1785 = vunpack.c.l.s4 1934713408
        %v1786 = vunpack.c.0.s8 %v1785
        %v1787 = vlaneseq
        %v1788 = vshrl.u32 %v1787, 7
        %v1789 = vsub.s32 %v1786, %v1788
        %v1790 = vrot.slane %v1782, %v1789
        %v1792 = vunpack.c.l.s4 1934713408
        %v1793 = vunpack.c.0.s8 %v1792
        %v1794 = vlaneseq
        %v1795 = vshrl.u32 %v1794, 7
        %v1796 = vsub.s32 %v1793, %v1795
        %v1797 = vrot.slane %v1783, %v1796
        %v1798 = vcombine.low %v1774, %v1790
        %v1799 = vcombine.high %v1774, %v1790
        %v1800 = vcombine.low %v1781, %v1797
        %v1801 = vcombine.high %v1781, %v1797
        %v1802 = vpack.c.bf16 %v1798, %v1730
        %v1803 = vpack.c.bf16 %v1799, %v1731
        %v1804 = vpack.c.bf16 %v1800, %v1732
        %v1805 = vpack.c.bf16 %v1801, %v1733
        %v1806 = vld [vmem:[%s627] sm:$0x3]
        %v1807 = vld [vmem:[%s614] sm:$0xff]
        %v1808 = vld [vmem:[%s614 + $0x8] sm:$0xff]
        %v1809 = vld [vmem:[%s614 + $0x10] sm:$0xff]
        %v1810 = vld [vmem:[%s614 + $0x18] sm:$0xff]
        %v1811 = vld [vmem:[%s614 + $0x20] sm:$0xff]
        %v1812 = vld [vmem:[%s614 + $0x28] sm:$0xff]
        %v1813 = vld [vmem:[%s614 + $0x30] sm:$0xff]
        %v1814 = vld [vmem:[%s614 + $0x38] sm:$0xff]
        %v1815 = vld [vmem:[%s614 + $0x40] sm:$0xff]
        %v1816 = vld [vmem:[%s614 + $0x48] sm:$0xff]
        %v1817 = vld [vmem:[%s614 + $0x50] sm:$0xff]
        %v1818 = vld [vmem:[%s614 + $0x58] sm:$0xff]
        %v1819 = vld [vmem:[%s614 + $0x60] sm:$0xff]
        %v1820 = vld [vmem:[%s614 + $0x68] sm:$0xff]
        %v1821 = vld [vmem:[%s614 + $0x70] sm:$0xff]
        %v1822 = vld [vmem:[%s614 + $0x78] sm:$0xff]
        %v1823 = vld [vmem:[%s614 + $0x80] sm:$0xff]
        %v1824 = vld [vmem:[%s614 + $0x88] sm:$0xff]
        %v1825 = vld [vmem:[%s614 + $0x90] sm:$0xff]
        %v1826 = vld [vmem:[%s614 + $0x98] sm:$0xff]
        %v1827 = vld [vmem:[%s614 + $0xa0] sm:$0xff]
        %v1828 = vld [vmem:[%s614 + $0xa8] sm:$0xff]
        %v1829 = vld [vmem:[%s614 + $0xb0] sm:$0xff]
        %v1830 = vld [vmem:[%s614 + $0xb8] sm:$0xff]
        %v1831 = vld [vmem:[%s614 + $0xc0] sm:$0xff]
        %v1832 = vld [vmem:[%s614 + $0xc8] sm:$0xff]
        %v1833 = vld [vmem:[%s614 + $0xd0] sm:$0xff]
        %v1834 = vld [vmem:[%s614 + $0xd8] sm:$0xff]
        %v1835 = vld [vmem:[%s614 + $0xe0] sm:$0xff]
        %v1836 = vld [vmem:[%s614 + $0xe8] sm:$0xff]
        %v1837 = vld [vmem:[%s614 + $0xf0] sm:$0xff]
        %v1838 = vld [vmem:[%s614 + $0xf8] sm:$0xff]
        %vm1839 = vcmask 130048
        %v1840 = vsel %vm1839, %v1807, 0.0
        %1841 = vadd.xlane.f32.xlu0 %v1840
        %v1842 = vpop.xlane.xlu0 %1841
        %v1843 = vsel %vm1839, %v1808, 0.0
        %1844 = vadd.xlane.f32.xlu0 %v1843
        %v1845 = vpop.xlane.xlu0 %1844
        %v1846 = vsel %vm1839, %v1809, 0.0
        %1847 = vadd.xlane.f32.xlu0 %v1846
        %v1848 = vpop.xlane.xlu0 %1847
        %v1849 = vsel %vm1839, %v1810, 0.0
        %1850 = vadd.xlane.f32.xlu0 %v1849
        %v1851 = vpop.xlane.xlu0 %1850
        %v1852 = vsel %vm1839, %v1811, 0.0
        %1853 = vadd.xlane.f32.xlu0 %v1852
        %v1854 = vpop.xlane.xlu0 %1853
        %v1855 = vsel %vm1839, %v1812, 0.0
        %1856 = vadd.xlane.f32.xlu0 %v1855
        %v1857 = vpop.xlane.xlu0 %1856
        %v1858 = vsel %vm1839, %v1813, 0.0
        %1859 = vadd.xlane.f32.xlu0 %v1858
        %v1860 = vpop.xlane.xlu0 %1859
        %v1861 = vsel %vm1839, %v1814, 0.0
        %1862 = vadd.xlane.f32.xlu0 %v1861
        %v1863 = vpop.xlane.xlu0 %1862
        %v1864 = vsel %vm1839, %v1815, 0.0
        %1865 = vadd.xlane.f32.xlu0 %v1864
        %v1866 = vpop.xlane.xlu0 %1865
        %v1867 = vsel %vm1839, %v1816, 0.0
        %1868 = vadd.xlane.f32.xlu0 %v1867
        %v1869 = vpop.xlane.xlu0 %1868
        %v1870 = vsel %vm1839, %v1817, 0.0
        %1871 = vadd.xlane.f32.xlu0 %v1870
        %v1872 = vpop.xlane.xlu0 %1871
        %v1873 = vsel %vm1839, %v1818, 0.0
        %1874 = vadd.xlane.f32.xlu0 %v1873
        %v1875 = vpop.xlane.xlu0 %1874
        %v1876 = vsel %vm1839, %v1819, 0.0
        %1877 = vadd.xlane.f32.xlu0 %v1876
        %v1878 = vpop.xlane.xlu0 %1877
        %v1879 = vsel %vm1839, %v1820, 0.0
        %1880 = vadd.xlane.f32.xlu0 %v1879
        %v1881 = vpop.xlane.xlu0 %1880
        %v1882 = vsel %vm1839, %v1821, 0.0
        %1883 = vadd.xlane.f32.xlu0 %v1882
        %v1884 = vpop.xlane.xlu0 %1883
        %v1885 = vsel %vm1839, %v1822, 0.0
        %1886 = vadd.xlane.f32.xlu0 %v1885
        %v1887 = vpop.xlane.xlu0 %1886
        %v1888 = vsel %vm1839, %v1823, 0.0
        %1889 = vadd.xlane.f32.xlu0 %v1888
        %v1890 = vpop.xlane.xlu0 %1889
        %v1891 = vsel %vm1839, %v1824, 0.0
        %1892 = vadd.xlane.f32.xlu0 %v1891
        %v1893 = vpop.xlane.xlu0 %1892
        %v1894 = vsel %vm1839, %v1825, 0.0
        %1895 = vadd.xlane.f32.xlu0 %v1894
        %v1896 = vpop.xlane.xlu0 %1895
        %v1897 = vsel %vm1839, %v1826, 0.0
        %1898 = vadd.xlane.f32.xlu0 %v1897
        %v1899 = vpop.xlane.xlu0 %1898
        %v1900 = vsel %vm1839, %v1827, 0.0
        %1901 = vadd.xlane.f32.xlu0 %v1900
        %v1902 = vpop.xlane.xlu0 %1901
        %v1903 = vsel %vm1839, %v1828, 0.0
        %1904 = vadd.xlane.f32.xlu0 %v1903
        %v1905 = vpop.xlane.xlu0 %1904
        %v1906 = vsel %vm1839, %v1829, 0.0
        %1907 = vadd.xlane.f32.xlu0 %v1906
        %v1908 = vpop.xlane.xlu0 %1907
        %v1909 = vsel %vm1839, %v1830, 0.0
        %1910 = vadd.xlane.f32.xlu0 %v1909
        %v1911 = vpop.xlane.xlu0 %1910
        %v1912 = vsel %vm1839, %v1831, 0.0
        %1913 = vadd.xlane.f32.xlu0 %v1912
        %v1914 = vpop.xlane.xlu0 %1913
        %v1915 = vsel %vm1839, %v1832, 0.0
        %1916 = vadd.xlane.f32.xlu0 %v1915
        %v1917 = vpop.xlane.xlu0 %1916
        %v1918 = vsel %vm1839, %v1833, 0.0
        %1919 = vadd.xlane.f32.xlu0 %v1918
        %v1920 = vpop.xlane.xlu0 %1919
        %v1921 = vsel %vm1839, %v1834, 0.0
        %1922 = vadd.xlane.f32.xlu0 %v1921
        %v1923 = vpop.xlane.xlu0 %1922
        %v1924 = vsel %vm1839, %v1835, 0.0
        %1925 = vadd.xlane.f32.xlu0 %v1924
        %v1926 = vpop.xlane.xlu0 %1925
        %v1927 = vsel %vm1839, %v1836, 0.0
        %1928 = vadd.xlane.f32.xlu0 %v1927
        %v1929 = vpop.xlane.xlu0 %1928
        %v1930 = vsel %vm1839, %v1837, 0.0
        %1931 = vadd.xlane.f32.xlu0 %v1930
        %v1932 = vpop.xlane.xlu0 %1931
        %v1933 = vsel %vm1839, %v1838, 0.0
        %1934 = vadd.xlane.f32.xlu0 %v1933
        %v1935 = vpop.xlane.xlu0 %1934
        %v1936 = vrcp.pop 16.0
        %v1937 = vmul.f32 %v1842, %v1936
        %v1938 = vmul.f32 %v1845, %v1936
        %v1939 = vmul.f32 %v1848, %v1936
        %v1940 = vmul.f32 %v1851, %v1936
        %v1941 = vmul.f32 %v1854, %v1936
        %v1942 = vmul.f32 %v1857, %v1936
        %v1943 = vmul.f32 %v1860, %v1936
        %v1944 = vmul.f32 %v1863, %v1936
        %v1945 = vmul.f32 %v1866, %v1936
        %v1946 = vmul.f32 %v1869, %v1936
        %v1947 = vmul.f32 %v1872, %v1936
        %v1948 = vmul.f32 %v1875, %v1936
        %v1949 = vmul.f32 %v1878, %v1936
        %v1950 = vmul.f32 %v1881, %v1936
        %v1951 = vmul.f32 %v1884, %v1936
        %v1952 = vmul.f32 %v1887, %v1936
        %v1953 = vmul.f32 %v1890, %v1936
        %v1954 = vmul.f32 %v1893, %v1936
        %v1955 = vmul.f32 %v1896, %v1936
        %v1956 = vmul.f32 %v1899, %v1936
        %v1957 = vmul.f32 %v1902, %v1936
        %v1958 = vmul.f32 %v1905, %v1936
        %v1959 = vmul.f32 %v1908, %v1936
        %v1960 = vmul.f32 %v1911, %v1936
        %v1961 = vmul.f32 %v1914, %v1936
        %v1962 = vmul.f32 %v1917, %v1936
        %v1963 = vmul.f32 %v1920, %v1936
        %v1964 = vmul.f32 %v1923, %v1936
        %v1965 = vmul.f32 %v1926, %v1936
        %v1966 = vmul.f32 %v1929, %v1936
        %v1967 = vmul.f32 %v1932, %v1936
        %v1968 = vmul.f32 %v1935, %v1936
        %v1969 = vsub.f32 %v1807, %v1937
        %v1970 = vsub.f32 %v1808, %v1938
        %v1971 = vsub.f32 %v1809, %v1939
        %v1972 = vsub.f32 %v1810, %v1940
        %v1973 = vsub.f32 %v1811, %v1941
        %v1974 = vsub.f32 %v1812, %v1942
        %v1975 = vsub.f32 %v1813, %v1943
        %v1976 = vsub.f32 %v1814, %v1944
        %v1977 = vsub.f32 %v1815, %v1945
        %v1978 = vsub.f32 %v1816, %v1946
        %v1979 = vsub.f32 %v1817, %v1947
        %v1980 = vsub.f32 %v1818, %v1948
        %v1981 = vsub.f32 %v1819, %v1949
        %v1982 = vsub.f32 %v1820, %v1950
        %v1983 = vsub.f32 %v1821, %v1951
        %v1984 = vsub.f32 %v1822, %v1952
        %v1985 = vsub.f32 %v1823, %v1953
        %v1986 = vsub.f32 %v1824, %v1954
        %v1987 = vsub.f32 %v1825, %v1955
        %v1988 = vsub.f32 %v1826, %v1956
        %v1989 = vsub.f32 %v1827, %v1957
        %v1990 = vsub.f32 %v1828, %v1958
        %v1991 = vsub.f32 %v1829, %v1959
        %v1992 = vsub.f32 %v1830, %v1960
        %v1993 = vsub.f32 %v1831, %v1961
        %v1994 = vsub.f32 %v1832, %v1962
        %v1995 = vsub.f32 %v1833, %v1963
        %v1996 = vsub.f32 %v1834, %v1964
        %v1997 = vsub.f32 %v1835, %v1965
        %v1998 = vsub.f32 %v1836, %v1966
        %v1999 = vsub.f32 %v1837, %v1967
        %v2000 = vsub.f32 %v1838, %v1968
        %v2001 = vmul.f32 %v1969, %v1969
        %v2002 = vmul.f32 %v1970, %v1970
        %v2003 = vmul.f32 %v1971, %v1971
        %v2004 = vmul.f32 %v1972, %v1972
        %v2005 = vmul.f32 %v1973, %v1973
        %v2006 = vmul.f32 %v1974, %v1974
        %v2007 = vmul.f32 %v1975, %v1975
        %v2008 = vmul.f32 %v1976, %v1976
        %v2009 = vmul.f32 %v1977, %v1977
        %v2010 = vmul.f32 %v1978, %v1978
        %v2011 = vmul.f32 %v1979, %v1979
        %v2012 = vmul.f32 %v1980, %v1980
        %v2013 = vmul.f32 %v1981, %v1981
        %v2014 = vmul.f32 %v1982, %v1982
        %v2015 = vmul.f32 %v1983, %v1983
        %v2016 = vmul.f32 %v1984, %v1984
        %v2017 = vmul.f32 %v1985, %v1985
        %v2018 = vmul.f32 %v1986, %v1986
        %v2019 = vmul.f32 %v1987, %v1987
        %v2020 = vmul.f32 %v1988, %v1988
        %v2021 = vmul.f32 %v1989, %v1989
        %v2022 = vmul.f32 %v1990, %v1990
        %v2023 = vmul.f32 %v1991, %v1991
        %v2024 = vmul.f32 %v1992, %v1992
        %v2025 = vmul.f32 %v1993, %v1993
        %v2026 = vmul.f32 %v1994, %v1994
        %v2027 = vmul.f32 %v1995, %v1995
        %v2028 = vmul.f32 %v1996, %v1996
        %v2029 = vmul.f32 %v1997, %v1997
        %v2030 = vmul.f32 %v1998, %v1998
        %v2031 = vmul.f32 %v1999, %v1999
        %v2032 = vmul.f32 %v2000, %v2000
        %v2033 = vsel %vm1839, %v2001, 0.0
        %2034 = vadd.xlane.f32.xlu0 %v2033
        %v2035 = vpop.xlane.xlu0 %2034
        %v2036 = vsel %vm1839, %v2002, 0.0
        %2037 = vadd.xlane.f32.xlu0 %v2036
        %v2038 = vpop.xlane.xlu0 %2037
        %v2039 = vsel %vm1839, %v2003, 0.0
        %2040 = vadd.xlane.f32.xlu0 %v2039
        %v2041 = vpop.xlane.xlu0 %2040
        %v2042 = vsel %vm1839, %v2004, 0.0
        %2043 = vadd.xlane.f32.xlu0 %v2042
        %v2044 = vpop.xlane.xlu0 %2043
        %v2045 = vsel %vm1839, %v2005, 0.0
        %2046 = vadd.xlane.f32.xlu0 %v2045
        %v2047 = vpop.xlane.xlu0 %2046
        %v2048 = vsel %vm1839, %v2006, 0.0
        %2049 = vadd.xlane.f32.xlu0 %v2048
        %v2050 = vpop.xlane.xlu0 %2049
        %v2051 = vsel %vm1839, %v2007, 0.0
        %2052 = vadd.xlane.f32.xlu0 %v2051
        %v2053 = vpop.xlane.xlu0 %2052
        %v2054 = vsel %vm1839, %v2008, 0.0
        %2055 = vadd.xlane.f32.xlu0 %v2054
        %v2056 = vpop.xlane.xlu0 %2055
        %v2057 = vsel %vm1839, %v2009, 0.0
        %2058 = vadd.xlane.f32.xlu0 %v2057
        %v2059 = vpop.xlane.xlu0 %2058
        %v2060 = vsel %vm1839, %v2010, 0.0
        %2061 = vadd.xlane.f32.xlu0 %v2060
        %v2062 = vpop.xlane.xlu0 %2061
        %v2063 = vsel %vm1839, %v2011, 0.0
        %2064 = vadd.xlane.f32.xlu0 %v2063
        %v2065 = vpop.xlane.xlu0 %2064
        %v2066 = vsel %vm1839, %v2012, 0.0
        %2067 = vadd.xlane.f32.xlu0 %v2066
        %v2068 = vpop.xlane.xlu0 %2067
        %v2069 = vsel %vm1839, %v2013, 0.0
        %2070 = vadd.xlane.f32.xlu0 %v2069
        %v2071 = vpop.xlane.xlu0 %2070
        %v2072 = vsel %vm1839, %v2014, 0.0
        %2073 = vadd.xlane.f32.xlu0 %v2072
        %v2074 = vpop.xlane.xlu0 %2073
        %v2075 = vsel %vm1839, %v2015, 0.0
        %2076 = vadd.xlane.f32.xlu0 %v2075
        %v2077 = vpop.xlane.xlu0 %2076
        %v2078 = vsel %vm1839, %v2016, 0.0
        %2079 = vadd.xlane.f32.xlu0 %v2078
        %v2080 = vpop.xlane.xlu0 %2079
        %v2081 = vsel %vm1839, %v2017, 0.0
        %2082 = vadd.xlane.f32.xlu0 %v2081
        %v2083 = vpop.xlane.xlu0 %2082
        %v2084 = vsel %vm1839, %v2018, 0.0
        %2085 = vadd.xlane.f32.xlu0 %v2084
        %v2086 = vpop.xlane.xlu0 %2085
        %v2087 = vsel %vm1839, %v2019, 0.0
        %2088 = vadd.xlane.f32.xlu0 %v2087
        %v2089 = vpop.xlane.xlu0 %2088
        %v2090 = vsel %vm1839, %v2020, 0.0
        %2091 = vadd.xlane.f32.xlu0 %v2090
        %v2092 = vpop.xlane.xlu0 %2091
        %v2093 = vsel %vm1839, %v2021, 0.0
        %2094 = vadd.xlane.f32.xlu0 %v2093
        %v2095 = vpop.xlane.xlu0 %2094
        %v2096 = vsel %vm1839, %v2022, 0.0
        %2097 = vadd.xlane.f32.xlu0 %v2096
        %v2098 = vpop.xlane.xlu0 %2097
        %v2099 = vsel %vm1839, %v2023, 0.0
        %2100 = vadd.xlane.f32.xlu0 %v2099
        %v2101 = vpop.xlane.xlu0 %2100
        %v2102 = vsel %vm1839, %v2024, 0.0
        %2103 = vadd.xlane.f32.xlu0 %v2102
        %v2104 = vpop.xlane.xlu0 %2103
        %v2105 = vsel %vm1839, %v2025, 0.0
        %2106 = vadd.xlane.f32.xlu0 %v2105
        %v2107 = vpop.xlane.xlu0 %2106
        %v2108 = vsel %vm1839, %v2026, 0.0
        %2109 = vadd.xlane.f32.xlu0 %v2108
        %v2110 = vpop.xlane.xlu0 %2109
        %v2111 = vsel %vm1839, %v2027, 0.0
        %2112 = vadd.xlane.f32.xlu0 %v2111
        %v2113 = vpop.xlane.xlu0 %2112
        %v2114 = vsel %vm1839, %v2028, 0.0
        %2115 = vadd.xlane.f32.xlu0 %v2114
        %v2116 = vpop.xlane.xlu0 %2115
        %v2117 = vsel %vm1839, %v2029, 0.0
        %2118 = vadd.xlane.f32.xlu0 %v2117
        %v2119 = vpop.xlane.xlu0 %2118
        %v2120 = vsel %vm1839, %v2030, 0.0
        %2121 = vadd.xlane.f32.xlu0 %v2120
        %v2122 = vpop.xlane.xlu0 %2121
        %v2123 = vsel %vm1839, %v2031, 0.0
        %2124 = vadd.xlane.f32.xlu0 %v2123
        %v2125 = vpop.xlane.xlu0 %2124
        %v2126 = vsel %vm1839, %v2032, 0.0
        %2127 = vadd.xlane.f32.xlu0 %v2126
        %v2128 = vpop.xlane.xlu0 %2127
        %v2129 = vmul.f32 %v2035, %v1936
        %v2130 = vmul.f32 %v2038, %v1936
        %v2131 = vmul.f32 %v2041, %v1936
        %v2132 = vmul.f32 %v2044, %v1936
        %v2133 = vmul.f32 %v2047, %v1936
        %v2134 = vmul.f32 %v2050, %v1936
        %v2135 = vmul.f32 %v2053, %v1936
        %v2136 = vmul.f32 %v2056, %v1936
        %v2137 = vmul.f32 %v2059, %v1936
        %v2138 = vmul.f32 %v2062, %v1936
        %v2139 = vmul.f32 %v2065, %v1936
        %v2140 = vmul.f32 %v2068, %v1936
        %v2141 = vmul.f32 %v2071, %v1936
        %v2142 = vmul.f32 %v2074, %v1936
        %v2143 = vmul.f32 %v2077, %v1936
        %v2144 = vmul.f32 %v2080, %v1936
        %v2145 = vmul.f32 %v2083, %v1936
        %v2146 = vmul.f32 %v2086, %v1936
        %v2147 = vmul.f32 %v2089, %v1936
        %v2148 = vmul.f32 %v2092, %v1936
        %v2149 = vmul.f32 %v2095, %v1936
        %v2150 = vmul.f32 %v2098, %v1936
        %v2151 = vmul.f32 %v2101, %v1936
        %v2152 = vmul.f32 %v2104, %v1936
        %v2153 = vmul.f32 %v2107, %v1936
        %v2154 = vmul.f32 %v2110, %v1936
        %v2155 = vmul.f32 %v2113, %v1936
        %v2156 = vmul.f32 %v2116, %v1936
        %v2157 = vmul.f32 %v2119, %v1936
        %v2158 = vmul.f32 %v2122, %v1936
        %v2159 = vmul.f32 %v2125, %v1936
        %v2160 = vmul.f32 %v2128, %v1936
        %v2161 = vadd.f32 %v2129, 1e-05
        %v2162 = vadd.f32 %v2130, 1e-05
        %v2163 = vadd.f32 %v2131, 1e-05
        %v2164 = vadd.f32 %v2132, 1e-05
        %v2165 = vadd.f32 %v2133, 1e-05
        %v2166 = vadd.f32 %v2134, 1e-05
        %v2167 = vadd.f32 %v2135, 1e-05
        %v2168 = vadd.f32 %v2136, 1e-05
        %v2169 = vadd.f32 %v2137, 1e-05
        %v2170 = vadd.f32 %v2138, 1e-05
        %v2171 = vadd.f32 %v2139, 1e-05
        %v2172 = vadd.f32 %v2140, 1e-05
        %v2173 = vadd.f32 %v2141, 1e-05
        %v2174 = vadd.f32 %v2142, 1e-05
        %v2175 = vadd.f32 %v2143, 1e-05
        %v2176 = vadd.f32 %v2144, 1e-05
        %v2177 = vadd.f32 %v2145, 1e-05
        %v2178 = vadd.f32 %v2146, 1e-05
        %v2179 = vadd.f32 %v2147, 1e-05
        %v2180 = vadd.f32 %v2148, 1e-05
        %v2181 = vadd.f32 %v2149, 1e-05
        %v2182 = vadd.f32 %v2150, 1e-05
        %v2183 = vadd.f32 %v2151, 1e-05
        %v2184 = vadd.f32 %v2152, 1e-05
        %v2185 = vadd.f32 %v2153, 1e-05
        %v2186 = vadd.f32 %v2154, 1e-05
        %v2187 = vadd.f32 %v2155, 1e-05
        %v2188 = vadd.f32 %v2156, 1e-05
        %v2189 = vadd.f32 %v2157, 1e-05
        %v2190 = vadd.f32 %v2158, 1e-05
        %v2191 = vadd.f32 %v2159, 1e-05
        %v2192 = vadd.f32 %v2160, 1e-05
        %v2193 = vrsqrt.pop %v2161
        %v2194 = vrsqrt.pop %v2162
        %v2195 = vrsqrt.pop %v2163
        %v2196 = vrsqrt.pop %v2164
        %v2197 = vrsqrt.pop %v2165
        %v2198 = vrsqrt.pop %v2166
        %v2199 = vrsqrt.pop %v2167
        %v2200 = vrsqrt.pop %v2168
        %v2201 = vrsqrt.pop %v2169
        %v2202 = vrsqrt.pop %v2170
        %v2203 = vrsqrt.pop %v2171
        %v2204 = vrsqrt.pop %v2172
        %v2205 = vrsqrt.pop %v2173
        %v2206 = vrsqrt.pop %v2174
        %v2207 = vrsqrt.pop %v2175
        %v2208 = vrsqrt.pop %v2176
        %v2209 = vrsqrt.pop %v2177
        %v2210 = vrsqrt.pop %v2178
        %v2211 = vrsqrt.pop %v2179
        %v2212 = vrsqrt.pop %v2180
        %v2213 = vrsqrt.pop %v2181
        %v2214 = vrsqrt.pop %v2182
        %v2215 = vrsqrt.pop %v2183
        %v2216 = vrsqrt.pop %v2184
        %v2217 = vrsqrt.pop %v2185
        %v2218 = vrsqrt.pop %v2186
        %v2219 = vrsqrt.pop %v2187
        %v2220 = vrsqrt.pop %v2188
        %v2221 = vrsqrt.pop %v2189
        %v2222 = vrsqrt.pop %v2190
        %v2223 = vrsqrt.pop %v2191
        %v2224 = vrsqrt.pop %v2192
        %v2225 = vmul.f32 %v1969, %v2193
        %v2226 = vmul.f32 %v1970, %v2194
        %v2227 = vmul.f32 %v1971, %v2195
        %v2228 = vmul.f32 %v1972, %v2196
        %v2229 = vmul.f32 %v1973, %v2197
        %v2230 = vmul.f32 %v1974, %v2198
        %v2231 = vmul.f32 %v1975, %v2199
        %v2232 = vmul.f32 %v1976, %v2200
        %v2233 = vmul.f32 %v1977, %v2201
        %v2234 = vmul.f32 %v1978, %v2202
        %v2235 = vmul.f32 %v1979, %v2203
        %v2236 = vmul.f32 %v1980, %v2204
        %v2237 = vmul.f32 %v1981, %v2205
        %v2238 = vmul.f32 %v1982, %v2206
        %v2239 = vmul.f32 %v1983, %v2207
        %v2240 = vmul.f32 %v1984, %v2208
        %v2241 = vmul.f32 %v1985, %v2209
        %v2242 = vmul.f32 %v1986, %v2210
        %v2243 = vmul.f32 %v1987, %v2211
        %v2244 = vmul.f32 %v1988, %v2212
        %v2245 = vmul.f32 %v1989, %v2213
        %v2246 = vmul.f32 %v1990, %v2214
        %v2247 = vmul.f32 %v1991, %v2215
        %v2248 = vmul.f32 %v1992, %v2216
        %v2249 = vmul.f32 %v1993, %v2217
        %v2250 = vmul.f32 %v1994, %v2218
        %v2251 = vmul.f32 %v1995, %v2219
        %v2252 = vmul.f32 %v1996, %v2220
        %v2253 = vmul.f32 %v1997, %v2221
        %v2254 = vmul.f32 %v1998, %v2222
        %v2255 = vmul.f32 %v1999, %v2223
        %v2256 = vmul.f32 %v2000, %v2224
        %2257 = vrot.lane.b32.xlu0 %v734, 64
        %v2258 = vpop.permute.xlu0 %2257
        %v2260 = vmul.f32 %v2225, %v2258
        %v2261 = vmul.f32 %v2226, %v2258
        %v2262 = vmul.f32 %v2227, %v2258
        %v2263 = vmul.f32 %v2228, %v2258
        %v2264 = vmul.f32 %v2229, %v2258
        %v2265 = vmul.f32 %v2230, %v2258
        %v2266 = vmul.f32 %v2231, %v2258
        %v2267 = vmul.f32 %v2232, %v2258
        %v2268 = vmul.f32 %v2233, %v2258
        %v2269 = vmul.f32 %v2234, %v2258
        %v2270 = vmul.f32 %v2235, %v2258
        %v2271 = vmul.f32 %v2236, %v2258
        %v2272 = vmul.f32 %v2237, %v2258
        %v2273 = vmul.f32 %v2238, %v2258
        %v2274 = vmul.f32 %v2239, %v2258
        %v2275 = vmul.f32 %v2240, %v2258
        %v2276 = vmul.f32 %v2241, %v2258
        %v2277 = vmul.f32 %v2242, %v2258
        %v2278 = vmul.f32 %v2243, %v2258
        %v2279 = vmul.f32 %v2244, %v2258
        %v2280 = vmul.f32 %v2245, %v2258
        %v2281 = vmul.f32 %v2246, %v2258
        %v2282 = vmul.f32 %v2247, %v2258
        %v2283 = vmul.f32 %v2248, %v2258
        %v2284 = vmul.f32 %v2249, %v2258
        %v2285 = vmul.f32 %v2250, %v2258
        %v2286 = vmul.f32 %v2251, %v2258
        %v2287 = vmul.f32 %v2252, %v2258
        %v2288 = vmul.f32 %v2253, %v2258
        %v2289 = vmul.f32 %v2254, %v2258
        %v2290 = vmul.f32 %v2255, %v2258
        %v2291 = vmul.f32 %v2256, %v2258
        %2292 = vrot.lane.b32.xlu0 %v734, 48
        %v2293 = vpop.permute.xlu0 %2292
        %v2295 = vadd.f32 %v2260, %v2293
        %v2296 = vadd.f32 %v2261, %v2293
        %v2297 = vadd.f32 %v2262, %v2293
        %v2298 = vadd.f32 %v2263, %v2293
        %v2299 = vadd.f32 %v2264, %v2293
        %v2300 = vadd.f32 %v2265, %v2293
        %v2301 = vadd.f32 %v2266, %v2293
        %v2302 = vadd.f32 %v2267, %v2293
        %v2303 = vadd.f32 %v2268, %v2293
        %v2304 = vadd.f32 %v2269, %v2293
        %v2305 = vadd.f32 %v2270, %v2293
        %v2306 = vadd.f32 %v2271, %v2293
        %v2307 = vadd.f32 %v2272, %v2293
        %v2308 = vadd.f32 %v2273, %v2293
        %v2309 = vadd.f32 %v2274, %v2293
        %v2310 = vadd.f32 %v2275, %v2293
        %v2311 = vadd.f32 %v2276, %v2293
        %v2312 = vadd.f32 %v2277, %v2293
        %v2313 = vadd.f32 %v2278, %v2293
        %v2314 = vadd.f32 %v2279, %v2293
        %v2315 = vadd.f32 %v2280, %v2293
        %v2316 = vadd.f32 %v2281, %v2293
        %v2317 = vadd.f32 %v2282, %v2293
        %v2318 = vadd.f32 %v2283, %v2293
        %v2319 = vadd.f32 %v2284, %v2293
        %v2320 = vadd.f32 %v2285, %v2293
        %v2321 = vadd.f32 %v2286, %v2293
        %v2322 = vadd.f32 %v2287, %v2293
        %v2323 = vadd.f32 %v2288, %v2293
        %v2324 = vadd.f32 %v2289, %v2293
        %v2325 = vadd.f32 %v2290, %v2293
        %v2326 = vadd.f32 %v2291, %v2293
        %v2327 = vpack.c.bf16 %v2296, %v2295
        %v2328 = vpack.c.bf16 %v2298, %v2297
        %v2329 = vpack.c.bf16 %v2300, %v2299
        %v2330 = vpack.c.bf16 %v2302, %v2301
        %v2331 = vpack.c.bf16 %v2304, %v2303
        %v2332 = vpack.c.bf16 %v2306, %v2305
        %v2333 = vpack.c.bf16 %v2308, %v2307
        %v2334 = vpack.c.bf16 %v2310, %v2309
        %v2335 = vpack.c.bf16 %v2312, %v2311
        %v2336 = vpack.c.bf16 %v2314, %v2313
        %v2337 = vpack.c.bf16 %v2316, %v2315
        %v2338 = vpack.c.bf16 %v2318, %v2317
        %v2339 = vpack.c.bf16 %v2320, %v2319
        %v2340 = vpack.c.bf16 %v2322, %v2321
        %v2341 = vpack.c.bf16 %v2324, %v2323
        %v2342 = vpack.c.bf16 %v2326, %v2325
        %v2344 = vsel %vm1839, %v1806, 0
        %v2347 = vsel %vm1839, %v2327, 0
        %v2350 = vsel %vm1839, %v2328, 0
        %v2353 = vsel %vm1839, %v2329, 0
        %v2356 = vsel %vm1839, %v2330, 0
        %v2359 = vsel %vm1839, %v2331, 0
        %v2362 = vsel %vm1839, %v2332, 0
        %v2365 = vsel %vm1839, %v2333, 0
        %v2368 = vsel %vm1839, %v2334, 0
        %v2371 = vsel %vm1839, %v2335, 0
        %v2374 = vsel %vm1839, %v2336, 0
        %v2377 = vsel %vm1839, %v2337, 0
        %v2380 = vsel %vm1839, %v2338, 0
        %v2383 = vsel %vm1839, %v2339, 0
        %v2386 = vsel %vm1839, %v2340, 0
        %v2389 = vsel %vm1839, %v2341, 0
        %v2392 = vsel %vm1839, %v2342, 0
        %2394 = vmatprep.subr.bf16.mxu0 0
        %2395 = vmatpush1.bf16.xpose.msra.mxu0 %v2368
        %2396 = vmatprep.subr.bf16.mxu0 0
        %2397 = vmatpush1.bf16.xpose.msra.mxu0 %v2365
        %2398 = vmatprep.subr.bf16.mxu0 0
        %2399 = vmatpush1.bf16.xpose.msra.mxu0 %v2362
        %2400 = vmatprep.subr.bf16.mxu0 0
        %2401 = vmatpush1.bf16.xpose.msra.mxu0 %v2359
        %2402 = vmatprep.subr.bf16.mxu0 0
        %2403 = vmatpush1.bf16.xpose.msra.mxu0 %v2356
        %2404 = vmatprep.subr.bf16.mxu0 0
        %2405 = vmatpush1.bf16.xpose.msra.mxu0 %v2353
        %2406 = vmatprep.subr.bf16.mxu0 0
        %2407 = vmatpush1.bf16.xpose.msra.mxu0 %v2350
        %2408 = vmatprep.subr.bf16.mxu0 0
        %2409 = vmatpush1.bf16.xpose.msra.mxu0 %v2347
        %2410 = vmatprep.subr.bf16.mxu0 0
        %2411 = vmatpush2.bf16.xpose.msra.mxu0 %v2392
        %2412 = vmatprep.subr.bf16.mxu0 0
        %2413 = vmatpush2.bf16.xpose.msra.mxu0 %v2389
        %2414 = vmatprep.subr.bf16.mxu0 0
        %2415 = vmatpush2.bf16.xpose.msra.mxu0 %v2386
        %2416 = vmatprep.subr.bf16.mxu0 0
        %2417 = vmatpush2.bf16.xpose.msra.mxu0 %v2383
        %2418 = vmatprep.subr.bf16.mxu0 0
        %2419 = vmatpush2.bf16.xpose.msra.mxu0 %v2380
        %2420 = vmatprep.subr.bf16.mxu0 0
        %2421 = vmatpush2.bf16.xpose.msra.mxu0 %v2377
        %2422 = vmatprep.subr.bf16.mxu0 0
        %2423 = vmatpush2.bf16.xpose.msra.mxu0 %v2374
        %2424 = vmatprep.subr.bf16.mxu0 0
        %2425 = vmatpush2.bf16.xpose.msra.mxu0 %v2371
        %2426 = vmatprep.mubr.bf16.mxu0 0
        %2427 = vmatmul.mubr.bf16.gmra.mxu0 %v2344
        %v2428 = vpop.f32.mrf.mxu0
        %v2429 = vadd.f32 0.0, %v2428
        %v2430 = vpop.f32.mrf.mxu0
        %v2431 = vadd.f32 0.0, %v2430
        %v2432 = vpop.f32.mrf.mxu0
        %v2433 = vpop.f32.mrf.mxu0
        %2434 = vdwg.mxu0
        %2436 = vrot.lane.b32.xlu0 %v2429, 112
        %v2437 = vpop.permute.xlu0 %2436
        %2439 = vrot.lane.b32.xlu0 %v2429, 96
        %v2440 = vpop.permute.xlu0 %2439
        %2442 = vrot.lane.b32.xlu0 %v2429, 80
        %v2443 = vpop.permute.xlu0 %2442
        %2445 = vrot.lane.b32.xlu0 %v2429, 64
        %v2446 = vpop.permute.xlu0 %2445
        %2448 = vrot.lane.b32.xlu0 %v2429, 48
        %v2449 = vpop.permute.xlu0 %2448
        %2451 = vrot.lane.b32.xlu0 %v2429, 32
        %v2452 = vpop.permute.xlu0 %2451
        %2454 = vrot.lane.b32.xlu0 %v2429, 16
        %v2455 = vpop.permute.xlu0 %2454
        %2458 = vrot.lane.b32.xlu0 %v2431, 112
        %v2459 = vpop.permute.xlu0 %2458
        %2461 = vrot.lane.b32.xlu0 %v2431, 96
        %v2462 = vpop.permute.xlu0 %2461
        %2464 = vrot.lane.b32.xlu0 %v2431, 80
        %v2465 = vpop.permute.xlu0 %2464
        %2467 = vrot.lane.b32.xlu0 %v2431, 64
        %v2468 = vpop.permute.xlu0 %2467
        %2470 = vrot.lane.b32.xlu0 %v2431, 48
        %v2471 = vpop.permute.xlu0 %2470
        %2473 = vrot.lane.b32.xlu0 %v2431, 32
        %v2474 = vpop.permute.xlu0 %2473
        %2476 = vrot.lane.b32.xlu0 %v2431, 16
        %v2477 = vpop.permute.xlu0 %2476
        %v2479 = vcombine.low %v2429, %v2440
        %v2481 = vunpack.c.l.s4 1983009808
        %v2482 = vunpack.c.0.s8 %v2481
        %v2483 = vlaneseq
        %v2484 = vshrl.u32 %v2483, 7
        %v2485 = vsub.s32 %v2482, %v2484
        %v2486 = vrot.slane %v2479, %v2485
        %v2487 = vcombine.low %v2437, %v2443
        %v2489 = vunpack.c.l.s4 1983009808
        %v2490 = vunpack.c.0.s8 %v2489
        %v2491 = vlaneseq
        %v2492 = vshrl.u32 %v2491, 7
        %v2493 = vsub.s32 %v2490, %v2492
        %v2494 = vrot.slane %v2487, %v2493
        %v2495 = vcombine.low %v2446, %v2452
        %v2497 = vunpack.c.l.s4 1983009808
        %v2498 = vunpack.c.0.s8 %v2497
        %v2499 = vlaneseq
        %v2500 = vshrl.u32 %v2499, 7
        %v2501 = vsub.s32 %v2498, %v2500
        %v2502 = vrot.slane %v2495, %v2501
        %v2503 = vcombine.low %v2449, %v2455
        %v2505 = vunpack.c.l.s4 1983009808
        %v2506 = vunpack.c.0.s8 %v2505
        %v2507 = vlaneseq
        %v2508 = vshrl.u32 %v2507, 7
        %v2509 = vsub.s32 %v2506, %v2508
        %v2510 = vrot.slane %v2503, %v2509
        %v2511 = vcombine.low %v2486, %v2494
        %v2512 = vcombine.high %v2486, %v2494
        %v2514 = vunpack.c.l.s4 1934713408
        %v2515 = vunpack.c.0.s8 %v2514
        %v2516 = vlaneseq
        %v2517 = vshrl.u32 %v2516, 7
        %v2518 = vsub.s32 %v2515, %v2517
        %v2519 = vrot.slane %v2511, %v2518
        %v2521 = vunpack.c.l.s4 1934713408
        %v2522 = vunpack.c.0.s8 %v2521
        %v2523 = vlaneseq
        %v2524 = vshrl.u32 %v2523, 7
        %v2525 = vsub.s32 %v2522, %v2524
        %v2526 = vrot.slane %v2512, %v2525
        %v2527 = vcombine.low %v2502, %v2510
        %v2528 = vcombine.high %v2502, %v2510
        %v2530 = vunpack.c.l.s4 1934713408
        %v2531 = vunpack.c.0.s8 %v2530
        %v2532 = vlaneseq
        %v2533 = vshrl.u32 %v2532, 7
        %v2534 = vsub.s32 %v2531, %v2533
        %v2535 = vrot.slane %v2527, %v2534
        %v2537 = vunpack.c.l.s4 1934713408
        %v2538 = vunpack.c.0.s8 %v2537
        %v2539 = vlaneseq
        %v2540 = vshrl.u32 %v2539, 7
        %v2541 = vsub.s32 %v2538, %v2540
        %v2542 = vrot.slane %v2528, %v2541
        %v2543 = vcombine.low %v2519, %v2535
        %v2544 = vcombine.high %v2519, %v2535
        %v2545 = vcombine.low %v2526, %v2542
        %v2546 = vcombine.high %v2526, %v2542
        %v2547 = vcombine.low %v2431, %v2462
        %v2549 = vunpack.c.l.s4 1983009808
        %v2550 = vunpack.c.0.s8 %v2549
        %v2551 = vlaneseq
        %v2552 = vshrl.u32 %v2551, 7
        %v2553 = vsub.s32 %v2550, %v2552
        %v2554 = vrot.slane %v2547, %v2553
        %v2555 = vcombine.low %v2459, %v2465
        %v2557 = vunpack.c.l.s4 1983009808
        %v2558 = vunpack.c.0.s8 %v2557
        %v2559 = vlaneseq
        %v2560 = vshrl.u32 %v2559, 7
        %v2561 = vsub.s32 %v2558, %v2560
        %v2562 = vrot.slane %v2555, %v2561
        %v2563 = vcombine.low %v2468, %v2474
        %v2565 = vunpack.c.l.s4 1983009808
        %v2566 = vunpack.c.0.s8 %v2565
        %v2567 = vlaneseq
        %v2568 = vshrl.u32 %v2567, 7
        %v2569 = vsub.s32 %v2566, %v2568
        %v2570 = vrot.slane %v2563, %v2569
        %v2571 = vcombine.low %v2471, %v2477
        %v2573 = vunpack.c.l.s4 1983009808
        %v2574 = vunpack.c.0.s8 %v2573
        %v2575 = vlaneseq
        %v2576 = vshrl.u32 %v2575, 7
        %v2577 = vsub.s32 %v2574, %v2576
        %v2578 = vrot.slane %v2571, %v2577
        %v2579 = vcombine.low %v2554, %v2562
        %v2580 = vcombine.high %v2554, %v2562
        %v2582 = vunpack.c.l.s4 1934713408
        %v2583 = vunpack.c.0.s8 %v2582
        %v2584 = vlaneseq
        %v2585 = vshrl.u32 %v2584, 7
        %v2586 = vsub.s32 %v2583, %v2585
        %v2587 = vrot.slane %v2579, %v2586
        %v2589 = vunpack.c.l.s4 1934713408
        %v2590 = vunpack.c.0.s8 %v2589
        %v2591 = vlaneseq
        %v2592 = vshrl.u32 %v2591, 7
        %v2593 = vsub.s32 %v2590, %v2592
        %v2594 = vrot.slane %v2580, %v2593
        %v2595 = vcombine.low %v2570, %v2578
        %v2596 = vcombine.high %v2570, %v2578
        %v2598 = vunpack.c.l.s4 1934713408
        %v2599 = vunpack.c.0.s8 %v2598
        %v2600 = vlaneseq
        %v2601 = vshrl.u32 %v2600, 7
        %v2602 = vsub.s32 %v2599, %v2601
        %v2603 = vrot.slane %v2595, %v2602
        %v2605 = vunpack.c.l.s4 1934713408
        %v2606 = vunpack.c.0.s8 %v2605
        %v2607 = vlaneseq
        %v2608 = vshrl.u32 %v2607, 7
        %v2609 = vsub.s32 %v2606, %v2608
        %v2610 = vrot.slane %v2596, %v2609
        %v2611 = vcombine.low %v2587, %v2603
        %v2612 = vcombine.high %v2587, %v2603
        %v2613 = vcombine.low %v2594, %v2610
        %v2614 = vcombine.high %v2594, %v2610
        %vm2615 = vcmask 15360
        %v2617 = vsel %vm2615, %v1210, 0
        %v2620 = vsel %vm2615, %v1506, 0
        %2622 = vmatprep.subr.bf16.mxu0 0
        %2623 = vmatpush1.bf16.xpose.msra.mxu0 0
        %2624 = vmatprep.subr.bf16.mxu0 0
        %2625 = vmatpush1.bf16.xpose.msra.mxu0 0
        %2626 = vmatprep.subr.bf16.mxu0 0
        %2627 = vmatpush1.bf16.xpose.msra.mxu0 0
        %2628 = vmatprep.subr.bf16.mxu0 0
        %2629 = vmatpush1.bf16.xpose.msra.mxu0 0
        %2630 = vmatprep.subr.bf16.mxu0 0
        %2631 = vmatpush1.bf16.xpose.msra.mxu0 0
        %2632 = vmatprep.subr.bf16.mxu0 0
        %2633 = vmatpush1.bf16.xpose.msra.mxu0 0
        %2634 = vmatprep.subr.bf16.mxu0 0
        %2635 = vmatpush1.bf16.xpose.msra.mxu0 0
        %2636 = vmatprep.subr.bf16.mxu0 0
        %2637 = vmatpush1.bf16.xpose.msra.mxu0 %v2620
        %2638 = vmatprep.subr.bf16.mxu0 0
        %2639 = vmatpush2.bf16.xpose.msra.mxu0 0
        %2640 = vmatprep.subr.bf16.mxu0 0
        %2641 = vmatpush2.bf16.xpose.msra.mxu0 0
        %2642 = vmatprep.subr.bf16.mxu0 0
        %2643 = vmatpush2.bf16.xpose.msra.mxu0 0
        %2644 = vmatprep.subr.bf16.mxu0 0
        %2645 = vmatpush2.bf16.xpose.msra.mxu0 0
        %2646 = vmatprep.subr.bf16.mxu0 0
        %2647 = vmatpush2.bf16.xpose.msra.mxu0 0
        %2648 = vmatprep.subr.bf16.mxu0 0
        %2649 = vmatpush2.bf16.xpose.msra.mxu0 0
        %2650 = vmatprep.subr.bf16.mxu0 0
        %2651 = vmatpush2.bf16.xpose.msra.mxu0 0
        %2652 = vmatprep.subr.bf16.mxu0 0
        %2653 = vmatpush2.bf16.xpose.msra.mxu0 0
        %2654 = vmatprep.mubr.bf16.mxu0 0
        %2655 = vmatmul.mubr.bf16.gmra.mxu0 %v2617
        %v2656 = vpop.f32.mrf.mxu0
        %v2657 = vadd.f32 %v2543, %v2656
        %v2658 = vpop.f32.mrf.mxu0
        %v2659 = vpop.f32.mrf.mxu0
        %v2660 = vadd.f32 %v2611, %v2659
        %v2661 = vpop.f32.mrf.mxu0
        %2662 = vdwg.mxu0
        %v2664 = vsel %vm2615, %v1211, 0
        %v2667 = vsel %vm2615, %v1507, 0
        %2669 = vmatprep.subr.bf16.mxu0 0
        %2670 = vmatpush1.bf16.xpose.msra.mxu0 0
        %2671 = vmatprep.subr.bf16.mxu0 0
        %2672 = vmatpush1.bf16.xpose.msra.mxu0 0
        %2673 = vmatprep.subr.bf16.mxu0 0
        %2674 = vmatpush1.bf16.xpose.msra.mxu0 0
        %2675 = vmatprep.subr.bf16.mxu0 0
        %2676 = vmatpush1.bf16.xpose.msra.mxu0 0
        %2677 = vmatprep.subr.bf16.mxu0 0
        %2678 = vmatpush1.bf16.xpose.msra.mxu0 0
        %2679 = vmatprep.subr.bf16.mxu0 0
        %2680 = vmatpush1.bf16.xpose.msra.mxu0 0
        %2681 = vmatprep.subr.bf16.mxu0 0
        %2682 = vmatpush1.bf16.xpose.msra.mxu0 0
        %2683 = vmatprep.subr.bf16.mxu0 0
        %2684 = vmatpush1.bf16.xpose.msra.mxu0 %v2667
        %2685 = vmatprep.subr.bf16.mxu0 0
        %2686 = vmatpush2.bf16.xpose.msra.mxu0 0
        %2687 = vmatprep.subr.bf16.mxu0 0
        %2688 = vmatpush2.bf16.xpose.msra.mxu0 0
        %2689 = vmatprep.subr.bf16.mxu0 0
        %2690 = vmatpush2.bf16.xpose.msra.mxu0 0
        %2691 = vmatprep.subr.bf16.mxu0 0
        %2692 = vmatpush2.bf16.xpose.msra.mxu0 0
        %2693 = vmatprep.subr.bf16.mxu0 0
        %2694 = vmatpush2.bf16.xpose.msra.mxu0 0
        %2695 = vmatprep.subr.bf16.mxu0 0
        %2696 = vmatpush2.bf16.xpose.msra.mxu0 0
        %2697 = vmatprep.subr.bf16.mxu0 0
        %2698 = vmatpush2.bf16.xpose.msra.mxu0 0
        %2699 = vmatprep.subr.bf16.mxu0 0
        %2700 = vmatpush2.bf16.xpose.msra.mxu0 0
        %2701 = vmatprep.mubr.bf16.mxu0 0
        %2702 = vmatmul.mubr.bf16.gmra.mxu0 %v2664
        %v2703 = vpop.f32.mrf.mxu0
        %v2704 = vadd.f32 %v2544, %v2703
        %v2705 = vpop.f32.mrf.mxu0
        %v2706 = vpop.f32.mrf.mxu0
        %v2707 = vadd.f32 %v2612, %v2706
        %v2708 = vpop.f32.mrf.mxu0
        %2709 = vdwg.mxu0
        %v2711 = vsel %vm2615, %v1212, 0
        %v2714 = vsel %vm2615, %v1508, 0
        %2716 = vmatprep.subr.bf16.mxu0 0
        %2717 = vmatpush1.bf16.xpose.msra.mxu0 0
        %2718 = vmatprep.subr.bf16.mxu0 0
        %2719 = vmatpush1.bf16.xpose.msra.mxu0 0
        %2720 = vmatprep.subr.bf16.mxu0 0
        %2721 = vmatpush1.bf16.xpose.msra.mxu0 0
        %2722 = vmatprep.subr.bf16.mxu0 0
        %2723 = vmatpush1.bf16.xpose.msra.mxu0 0
        %2724 = vmatprep.subr.bf16.mxu0 0
        %2725 = vmatpush1.bf16.xpose.msra.mxu0 0
        %2726 = vmatprep.subr.bf16.mxu0 0
        %2727 = vmatpush1.bf16.xpose.msra.mxu0 0
        %2728 = vmatprep.subr.bf16.mxu0 0
        %2729 = vmatpush1.bf16.xpose.msra.mxu0 0
        %2730 = vmatprep.subr.bf16.mxu0 0
        %2731 = vmatpush1.bf16.xpose.msra.mxu0 %v2714
        %2732 = vmatprep.subr.bf16.mxu0 0
        %2733 = vmatpush2.bf16.xpose.msra.mxu0 0
        %2734 = vmatprep.subr.bf16.mxu0 0
        %2735 = vmatpush2.bf16.xpose.msra.mxu0 0
        %2736 = vmatprep.subr.bf16.mxu0 0
        %2737 = vmatpush2.bf16.xpose.msra.mxu0 0
        %2738 = vmatprep.subr.bf16.mxu0 0
        %2739 = vmatpush2.bf16.xpose.msra.mxu0 0
        %2740 = vmatprep.subr.bf16.mxu0 0
        %2741 = vmatpush2.bf16.xpose.msra.mxu0 0
        %2742 = vmatprep.subr.bf16.mxu0 0
        %2743 = vmatpush2.bf16.xpose.msra.mxu0 0
        %2744 = vmatprep.subr.bf16.mxu0 0
        %2745 = vmatpush2.bf16.xpose.msra.mxu0 0
        %2746 = vmatprep.subr.bf16.mxu0 0
        %2747 = vmatpush2.bf16.xpose.msra.mxu0 0
        %2748 = vmatprep.mubr.bf16.mxu0 0
        %2749 = vmatmul.mubr.bf16.gmra.mxu0 %v2711
        %v2750 = vpop.f32.mrf.mxu0
        %v2751 = vadd.f32 %v2545, %v2750
        %v2752 = vpop.f32.mrf.mxu0
        %v2753 = vpop.f32.mrf.mxu0
        %v2754 = vadd.f32 %v2613, %v2753
        %v2755 = vpop.f32.mrf.mxu0
        %2756 = vdwg.mxu0
        %v2758 = vsel %vm2615, %v1213, 0
        %v2761 = vsel %vm2615, %v1509, 0
        %2763 = vmatprep.subr.bf16.mxu0 0
        %2764 = vmatpush1.bf16.xpose.msra.mxu0 0
        %2765 = vmatprep.subr.bf16.mxu0 0
        %2766 = vmatpush1.bf16.xpose.msra.mxu0 0
        %2767 = vmatprep.subr.bf16.mxu0 0
        %2768 = vmatpush1.bf16.xpose.msra.mxu0 0
        %2769 = vmatprep.subr.bf16.mxu0 0
        %2770 = vmatpush1.bf16.xpose.msra.mxu0 0
        %2771 = vmatprep.subr.bf16.mxu0 0
        %2772 = vmatpush1.bf16.xpose.msra.mxu0 0
        %2773 = vmatprep.subr.bf16.mxu0 0
        %2774 = vmatpush1.bf16.xpose.msra.mxu0 0
        %2775 = vmatprep.subr.bf16.mxu0 0
        %2776 = vmatpush1.bf16.xpose.msra.mxu0 0
        %2777 = vmatprep.subr.bf16.mxu0 0
        %2778 = vmatpush1.bf16.xpose.msra.mxu0 %v2761
        %2779 = vmatprep.subr.bf16.mxu0 0
        %2780 = vmatpush2.bf16.xpose.msra.mxu0 0
        %2781 = vmatprep.subr.bf16.mxu0 0
        %2782 = vmatpush2.bf16.xpose.msra.mxu0 0
        %2783 = vmatprep.subr.bf16.mxu0 0
        %2784 = vmatpush2.bf16.xpose.msra.mxu0 0
        %2785 = vmatprep.subr.bf16.mxu0 0
        %2786 = vmatpush2.bf16.xpose.msra.mxu0 0
        %2787 = vmatprep.subr.bf16.mxu0 0
        %2788 = vmatpush2.bf16.xpose.msra.mxu0 0
        %2789 = vmatprep.subr.bf16.mxu0 0
        %2790 = vmatpush2.bf16.xpose.msra.mxu0 0
        %2791 = vmatprep.subr.bf16.mxu0 0
        %2792 = vmatpush2.bf16.xpose.msra.mxu0 0
        %2793 = vmatprep.subr.bf16.mxu0 0
        %2794 = vmatpush2.bf16.xpose.msra.mxu0 0
        %2795 = vmatprep.mubr.bf16.mxu0 0
        %2796 = vmatmul.mubr.bf16.gmra.mxu0 %v2758
        %v2797 = vpop.f32.mrf.mxu0
        %v2798 = vadd.f32 %v2546, %v2797
        %v2799 = vpop.f32.mrf.mxu0
        %v2800 = vpop.f32.mrf.mxu0
        %v2801 = vadd.f32 %v2614, %v2800
        %v2802 = vpop.f32.mrf.mxu0
        %2803 = vdwg.mxu0
        %v2804 = vsel %vm1839, %v2657, -inf
        %2805 = vmax.xlane.f32.xlu0 %v2804
        %v2806 = vpop.xlane.xlu0 %2805
        %v2807 = vsel %vm1839, %v2660, -inf
        %2808 = vmax.xlane.f32.xlu0 %v2807
        %v2809 = vpop.xlane.xlu0 %2808
        %v2810 = vsel %vm1839, %v2704, -inf
        %2811 = vmax.xlane.f32.xlu0 %v2810
        %v2812 = vpop.xlane.xlu0 %2811
        %v2813 = vsel %vm1839, %v2707, -inf
        %2814 = vmax.xlane.f32.xlu0 %v2813
        %v2815 = vpop.xlane.xlu0 %2814
        %v2816 = vsel %vm1839, %v2751, -inf
        %2817 = vmax.xlane.f32.xlu0 %v2816
        %v2818 = vpop.xlane.xlu0 %2817
        %v2819 = vsel %vm1839, %v2754, -inf
        %2820 = vmax.xlane.f32.xlu0 %v2819
        %v2821 = vpop.xlane.xlu0 %2820
        %v2822 = vsel %vm1839, %v2798, -inf
        %2823 = vmax.xlane.f32.xlu0 %v2822
        %v2824 = vpop.xlane.xlu0 %2823
        %v2825 = vsel %vm1839, %v2801, -inf
        %2826 = vmax.xlane.f32.xlu0 %v2825
        %v2827 = vpop.xlane.xlu0 %2826
        %v2828 = vsub.f32 %v2657, %v2806
        %v2829 = vsub.f32 %v2660, %v2809
        %v2830 = vsub.f32 %v2704, %v2812
        %v2831 = vsub.f32 %v2707, %v2815
        %v2832 = vsub.f32 %v2751, %v2818
        %v2833 = vsub.f32 %v2754, %v2821
        %v2834 = vsub.f32 %v2798, %v2824
        %v2835 = vsub.f32 %v2801, %v2827
        %v2836 = vmul.f32 %v2828, 1.442695
        %v2837 = vpow.pop %v2836
        %v2838 = vmul.f32 %v2829, 1.442695
        %v2839 = vpow.pop %v2838
        %v2840 = vmul.f32 %v2830, 1.442695
        %v2841 = vpow.pop %v2840
        %v2842 = vmul.f32 %v2831, 1.442695
        %v2843 = vpow.pop %v2842
        %v2844 = vmul.f32 %v2832, 1.442695
        %v2845 = vpow.pop %v2844
        %v2846 = vmul.f32 %v2833, 1.442695
        %v2847 = vpow.pop %v2846
        %v2848 = vmul.f32 %v2834, 1.442695
        %v2849 = vpow.pop %v2848
        %v2850 = vmul.f32 %v2835, 1.442695
        %v2851 = vpow.pop %v2850
        %v2852 = vsel %vm1839, %v2837, 0.0
        %2853 = vadd.xlane.f32.xlu0 %v2852
        %v2854 = vpop.xlane.xlu0 %2853
        %v2855 = vsel %vm1839, %v2839, 0.0
        %2856 = vadd.xlane.f32.xlu0 %v2855
        %v2857 = vpop.xlane.xlu0 %2856
        %v2858 = vsel %vm1839, %v2841, 0.0
        %2859 = vadd.xlane.f32.xlu0 %v2858
        %v2860 = vpop.xlane.xlu0 %2859
        %v2861 = vsel %vm1839, %v2843, 0.0
        %2862 = vadd.xlane.f32.xlu0 %v2861
        %v2863 = vpop.xlane.xlu0 %2862
        %v2864 = vsel %vm1839, %v2845, 0.0
        %2865 = vadd.xlane.f32.xlu0 %v2864
        %v2866 = vpop.xlane.xlu0 %2865
        %v2867 = vsel %vm1839, %v2847, 0.0
        %2868 = vadd.xlane.f32.xlu0 %v2867
        %v2869 = vpop.xlane.xlu0 %2868
        %v2870 = vsel %vm1839, %v2849, 0.0
        %2871 = vadd.xlane.f32.xlu0 %v2870
        %v2872 = vpop.xlane.xlu0 %2871
        %v2873 = vsel %vm1839, %v2851, 0.0
        %2874 = vadd.xlane.f32.xlu0 %v2873
        %v2875 = vpop.xlane.xlu0 %2874
        %v2876 = vrcp.pop %v2854
        %v2877 = vrcp.pop %v2857
        %v2878 = vrcp.pop %v2860
        %v2879 = vrcp.pop %v2863
        %v2880 = vrcp.pop %v2866
        %v2881 = vrcp.pop %v2869
        %v2882 = vrcp.pop %v2872
        %v2883 = vrcp.pop %v2875
        %v2884 = vmul.f32 %v2837, %v2876
        %v2885 = vmul.f32 %v2839, %v2877
        %v2886 = vmul.f32 %v2841, %v2878
        %v2887 = vmul.f32 %v2843, %v2879
        %v2888 = vmul.f32 %v2845, %v2880
        %v2889 = vmul.f32 %v2847, %v2881
        %v2890 = vmul.f32 %v2849, %v2882
        %v2891 = vmul.f32 %v2851, %v2883
        %v2892 = vpack.c.bf16 %v2885, %v2884
        %v2893 = vpack.c.bf16 %v2887, %v2886
        %v2894 = vpack.c.bf16 %v2889, %v2888
        %v2895 = vpack.c.bf16 %v2891, %v2890
        %v2897 = vsel %vm1839, %v2892, 0
        %2899 = vmatprep.subr.bf16.mxu0 0
        %2900 = vmatpush1.bf16.msra.mxu0 0
        %2901 = vmatprep.subr.bf16.mxu0 0
        %2902 = vmatpush1.bf16.msra.mxu0 0
        %2903 = vmatprep.subr.bf16.mxu0 0
        %2904 = vmatpush1.bf16.msra.mxu0 0
        %2905 = vmatprep.subr.bf16.mxu0 0
        %2906 = vmatpush1.bf16.msra.mxu0 0
        %2907 = vmatprep.subr.bf16.mxu0 0
        %2908 = vmatpush1.bf16.msra.mxu0 0
        %2909 = vmatprep.subr.bf16.mxu0 0
        %2910 = vmatpush1.bf16.msra.mxu0 0
        %2911 = vmatprep.subr.bf16.mxu0 0
        %2912 = vmatpush1.bf16.msra.mxu0 0
        %2913 = vmatprep.subr.bf16.mxu0 0
        %2914 = vmatpush1.bf16.msra.mxu0 %v1802
        %2915 = vmatprep.subr.bf16.mxu0 0
        %2916 = vmatpush2.bf16.msra.mxu0 0
        %2917 = vmatprep.subr.bf16.mxu0 0
        %2918 = vmatpush2.bf16.msra.mxu0 0
        %2919 = vmatprep.subr.bf16.mxu0 0
        %2920 = vmatpush2.bf16.msra.mxu0 0
        %2921 = vmatprep.subr.bf16.mxu0 0
        %2922 = vmatpush2.bf16.msra.mxu0 0
        %2923 = vmatprep.subr.bf16.mxu0 0
        %2924 = vmatpush2.bf16.msra.mxu0 0
        %2925 = vmatprep.subr.bf16.mxu0 0
        %2926 = vmatpush2.bf16.msra.mxu0 0
        %2927 = vmatprep.subr.bf16.mxu0 0
        %2928 = vmatpush2.bf16.msra.mxu0 0
        %2929 = vmatprep.subr.bf16.mxu0 0
        %2930 = vmatpush2.bf16.msra.mxu0 0
        %2931 = vmatprep.mubr.bf16.mxu0 0
        %2932 = vmatmul.mubr.bf16.gmra.mxu0 %v2897
        %v2933 = vpop.f32.mrf.mxu0
        %v2934 = vadd.f32 0.0, %v2933
        %v2935 = vpop.f32.mrf.mxu0
        %v2936 = vpop.f32.mrf.mxu0
        %v2937 = vadd.f32 0.0, %v2936
        %v2938 = vpop.f32.mrf.mxu0
        %2939 = vdwg.mxu0
        %v2941 = vsel %vm1839, %v2893, 0
        %2943 = vmatprep.subr.bf16.mxu0 0
        %2944 = vmatpush1.bf16.msra.mxu0 0
        %2945 = vmatprep.subr.bf16.mxu0 0
        %2946 = vmatpush1.bf16.msra.mxu0 0
        %2947 = vmatprep.subr.bf16.mxu0 0
        %2948 = vmatpush1.bf16.msra.mxu0 0
        %2949 = vmatprep.subr.bf16.mxu0 0
        %2950 = vmatpush1.bf16.msra.mxu0 0
        %2951 = vmatprep.subr.bf16.mxu0 0
        %2952 = vmatpush1.bf16.msra.mxu0 0
        %2953 = vmatprep.subr.bf16.mxu0 0
        %2954 = vmatpush1.bf16.msra.mxu0 0
        %2955 = vmatprep.subr.bf16.mxu0 0
        %2956 = vmatpush1.bf16.msra.mxu0 0
        %2957 = vmatprep.subr.bf16.mxu0 0
        %2958 = vmatpush1.bf16.msra.mxu0 %v1803
        %2959 = vmatprep.subr.bf16.mxu0 0
        %2960 = vmatpush2.bf16.msra.mxu0 0
        %2961 = vmatprep.subr.bf16.mxu0 0
        %2962 = vmatpush2.bf16.msra.mxu0 0
        %2963 = vmatprep.subr.bf16.mxu0 0
        %2964 = vmatpush2.bf16.msra.mxu0 0
        %2965 = vmatprep.subr.bf16.mxu0 0
        %2966 = vmatpush2.bf16.msra.mxu0 0
        %2967 = vmatprep.subr.bf16.mxu0 0
        %2968 = vmatpush2.bf16.msra.mxu0 0
        %2969 = vmatprep.subr.bf16.mxu0 0
        %2970 = vmatpush2.bf16.msra.mxu0 0
        %2971 = vmatprep.subr.bf16.mxu0 0
        %2972 = vmatpush2.bf16.msra.mxu0 0
        %2973 = vmatprep.subr.bf16.mxu0 0
        %2974 = vmatpush2.bf16.msra.mxu0 0
        %2975 = vmatprep.mubr.bf16.mxu0 0
        %2976 = vmatmul.mubr.bf16.gmra.mxu0 %v2941
        %v2977 = vpop.f32.mrf.mxu0
        %v2978 = vadd.f32 0.0, %v2977
        %v2979 = vpop.f32.mrf.mxu0
        %v2980 = vpop.f32.mrf.mxu0
        %v2981 = vadd.f32 0.0, %v2980
        %v2982 = vpop.f32.mrf.mxu0
        %2983 = vdwg.mxu0
        %v2985 = vsel %vm1839, %v2894, 0
        %2987 = vmatprep.subr.bf16.mxu0 0
        %2988 = vmatpush1.bf16.msra.mxu0 0
        %2989 = vmatprep.subr.bf16.mxu0 0
        %2990 = vmatpush1.bf16.msra.mxu0 0
        %2991 = vmatprep.subr.bf16.mxu0 0
        %2992 = vmatpush1.bf16.msra.mxu0 0
        %2993 = vmatprep.subr.bf16.mxu0 0
        %2994 = vmatpush1.bf16.msra.mxu0 0
        %2995 = vmatprep.subr.bf16.mxu0 0
        %2996 = vmatpush1.bf16.msra.mxu0 0
        %2997 = vmatprep.subr.bf16.mxu0 0
        %2998 = vmatpush1.bf16.msra.mxu0 0
        %2999 = vmatprep.subr.bf16.mxu0 0
        %3000 = vmatpush1.bf16.msra.mxu0 0
        %3001 = vmatprep.subr.bf16.mxu0 0
        %3002 = vmatpush1.bf16.msra.mxu0 %v1804
        %3003 = vmatprep.subr.bf16.mxu0 0
        %3004 = vmatpush2.bf16.msra.mxu0 0
        %3005 = vmatprep.subr.bf16.mxu0 0
        %3006 = vmatpush2.bf16.msra.mxu0 0
        %3007 = vmatprep.subr.bf16.mxu0 0
        %3008 = vmatpush2.bf16.msra.mxu0 0
        %3009 = vmatprep.subr.bf16.mxu0 0
        %3010 = vmatpush2.bf16.msra.mxu0 0
        %3011 = vmatprep.subr.bf16.mxu0 0
        %3012 = vmatpush2.bf16.msra.mxu0 0
        %3013 = vmatprep.subr.bf16.mxu0 0
        %3014 = vmatpush2.bf16.msra.mxu0 0
        %3015 = vmatprep.subr.bf16.mxu0 0
        %3016 = vmatpush2.bf16.msra.mxu0 0
        %3017 = vmatprep.subr.bf16.mxu0 0
        %3018 = vmatpush2.bf16.msra.mxu0 0
        %3019 = vmatprep.mubr.bf16.mxu0 0
        %3020 = vmatmul.mubr.bf16.gmra.mxu0 %v2985
        %v3021 = vpop.f32.mrf.mxu0
        %v3022 = vadd.f32 0.0, %v3021
        %v3023 = vpop.f32.mrf.mxu0
        %v3024 = vpop.f32.mrf.mxu0
        %v3025 = vadd.f32 0.0, %v3024
        %v3026 = vpop.f32.mrf.mxu0
        %3027 = vdwg.mxu0
        %v3029 = vsel %vm1839, %v2895, 0
        %3031 = vmatprep.subr.bf16.mxu0 0
        %3032 = vmatpush1.bf16.msra.mxu0 0
        %3033 = vmatprep.subr.bf16.mxu0 0
        %3034 = vmatpush1.bf16.msra.mxu0 0
        %3035 = vmatprep.subr.bf16.mxu0 0
        %3036 = vmatpush1.bf16.msra.mxu0 0
        %3037 = vmatprep.subr.bf16.mxu0 0
        %3038 = vmatpush1.bf16.msra.mxu0 0
        %3039 = vmatprep.subr.bf16.mxu0 0
        %3040 = vmatpush1.bf16.msra.mxu0 0
        %3041 = vmatprep.subr.bf16.mxu0 0
        %3042 = vmatpush1.bf16.msra.mxu0 0
        %3043 = vmatprep.subr.bf16.mxu0 0
        %3044 = vmatpush1.bf16.msra.mxu0 0
        %3045 = vmatprep.subr.bf16.mxu0 0
        %3046 = vmatpush1.bf16.msra.mxu0 %v1805
        %3047 = vmatprep.subr.bf16.mxu0 0
        %3048 = vmatpush2.bf16.msra.mxu0 0
        %3049 = vmatprep.subr.bf16.mxu0 0
        %3050 = vmatpush2.bf16.msra.mxu0 0
        %3051 = vmatprep.subr.bf16.mxu0 0
        %3052 = vmatpush2.bf16.msra.mxu0 0
        %3053 = vmatprep.subr.bf16.mxu0 0
        %3054 = vmatpush2.bf16.msra.mxu0 0
        %3055 = vmatprep.subr.bf16.mxu0 0
        %3056 = vmatpush2.bf16.msra.mxu0 0
        %3057 = vmatprep.subr.bf16.mxu0 0
        %3058 = vmatpush2.bf16.msra.mxu0 0
        %3059 = vmatprep.subr.bf16.mxu0 0
        %3060 = vmatpush2.bf16.msra.mxu0 0
        %3061 = vmatprep.subr.bf16.mxu0 0
        %3062 = vmatpush2.bf16.msra.mxu0 0
        %3063 = vmatprep.mubr.bf16.mxu0 0
        %3064 = vmatmul.mubr.bf16.gmra.mxu0 %v3029
        %v3065 = vpop.f32.mrf.mxu0
        %v3066 = vadd.f32 0.0, %v3065
        %v3067 = vpop.f32.mrf.mxu0
        %v3068 = vpop.f32.mrf.mxu0
        %v3069 = vadd.f32 0.0, %v3068
        %v3070 = vpop.f32.mrf.mxu0
        %3071 = vdwg.mxu0
        %v3072 = vcombine.low %v2934, %v3022
        %v3073 = vcombine.high %v2934, %v3022
        %v3075 = vunpack.c.l.s4 1983009808
        %v3076 = vunpack.c.0.s8 %v3075
        %v3077 = vlaneseq
        %v3078 = vshrl.u32 %v3077, 7
        %v3079 = vsub.s32 %v3076, %v3078
        %v3080 = vrot.slane %v3072, %v3079
        %v3082 = vunpack.c.l.s4 1983009808
        %v3083 = vunpack.c.0.s8 %v3082
        %v3084 = vlaneseq
        %v3085 = vshrl.u32 %v3084, 7
        %v3086 = vsub.s32 %v3083, %v3085
        %v3087 = vrot.slane %v3073, %v3086
        %v3088 = vcombine.low %v2978, %v3066
        %v3089 = vcombine.high %v2978, %v3066
        %v3091 = vunpack.c.l.s4 1983009808
        %v3092 = vunpack.c.0.s8 %v3091
        %v3093 = vlaneseq
        %v3094 = vshrl.u32 %v3093, 7
        %v3095 = vsub.s32 %v3092, %v3094
        %v3096 = vrot.slane %v3088, %v3095
        %v3098 = vunpack.c.l.s4 1983009808
        %v3099 = vunpack.c.0.s8 %v3098
        %v3100 = vlaneseq
        %v3101 = vshrl.u32 %v3100, 7
        %v3102 = vsub.s32 %v3099, %v3101
        %v3103 = vrot.slane %v3089, %v3102
        %v3104 = vcombine.low %v3080, %v3096
        %v3105 = vcombine.high %v3080, %v3096
        %v3107 = vunpack.c.l.s4 1934713408
        %v3108 = vunpack.c.0.s8 %v3107
        %v3109 = vlaneseq
        %v3110 = vshrl.u32 %v3109, 7
        %v3111 = vsub.s32 %v3108, %v3110
        %v3112 = vrot.slane %v3104, %v3111
        %v3114 = vunpack.c.l.s4 1934713408
        %v3115 = vunpack.c.0.s8 %v3114
        %v3116 = vlaneseq
        %v3117 = vshrl.u32 %v3116, 7
        %v3118 = vsub.s32 %v3115, %v3117
        %v3119 = vrot.slane %v3105, %v3118
        %v3120 = vcombine.low %v3087, %v3103
        %v3121 = vcombine.high %v3087, %v3103
        %v3123 = vunpack.c.l.s4 1934713408
        %v3124 = vunpack.c.0.s8 %v3123
        %v3125 = vlaneseq
        %v3126 = vshrl.u32 %v3125, 7
        %v3127 = vsub.s32 %v3124, %v3126
        %v3128 = vrot.slane %v3120, %v3127
        %v3130 = vunpack.c.l.s4 1934713408
        %v3131 = vunpack.c.0.s8 %v3130
        %v3132 = vlaneseq
        %v3133 = vshrl.u32 %v3132, 7
        %v3134 = vsub.s32 %v3131, %v3133
        %v3135 = vrot.slane %v3121, %v3134
        %v3136 = vcombine.high %v3112, 0.0
        %v3137 = vcombine.high %v3119, 0.0
        %v3138 = vcombine.high %v3128, 0.0
        %v3139 = vcombine.high %v3135, 0.0
        %v3140 = vcombine.low %v2937, %v3025
        %v3141 = vcombine.high %v2937, %v3025
        %v3143 = vunpack.c.l.s4 1983009808
        %v3144 = vunpack.c.0.s8 %v3143
        %v3145 = vlaneseq
        %v3146 = vshrl.u32 %v3145, 7
        %v3147 = vsub.s32 %v3144, %v3146
        %v3148 = vrot.slane %v3140, %v3147
        %v3150 = vunpack.c.l.s4 1983009808
        %v3151 = vunpack.c.0.s8 %v3150
        %v3152 = vlaneseq
        %v3153 = vshrl.u32 %v3152, 7
        %v3154 = vsub.s32 %v3151, %v3153
        %v3155 = vrot.slane %v3141, %v3154
        %v3156 = vcombine.low %v2981, %v3069
        %v3157 = vcombine.high %v2981, %v3069
        %v3159 = vunpack.c.l.s4 1983009808
        %v3160 = vunpack.c.0.s8 %v3159
        %v3161 = vlaneseq
        %v3162 = vshrl.u32 %v3161, 7
        %v3163 = vsub.s32 %v3160, %v3162
        %v3164 = vrot.slane %v3156, %v3163
        %v3166 = vunpack.c.l.s4 1983009808
        %v3167 = vunpack.c.0.s8 %v3166
        %v3168 = vlaneseq
        %v3169 = vshrl.u32 %v3168, 7
        %v3170 = vsub.s32 %v3167, %v3169
        %v3171 = vrot.slane %v3157, %v3170
        %v3172 = vcombine.low %v3148, %v3164
        %v3173 = vcombine.high %v3148, %v3164
        %v3175 = vunpack.c.l.s4 1934713408
        %v3176 = vunpack.c.0.s8 %v3175
        %v3177 = vlaneseq
        %v3178 = vshrl.u32 %v3177, 7
        %v3179 = vsub.s32 %v3176, %v3178
        %v3180 = vrot.slane %v3172, %v3179
        %v3182 = vunpack.c.l.s4 1934713408
        %v3183 = vunpack.c.0.s8 %v3182
        %v3184 = vlaneseq
        %v3185 = vshrl.u32 %v3184, 7
        %v3186 = vsub.s32 %v3183, %v3185
        %v3187 = vrot.slane %v3173, %v3186
        %v3188 = vcombine.low %v3155, %v3171
        %v3189 = vcombine.high %v3155, %v3171
        %v3191 = vunpack.c.l.s4 1934713408
        %v3192 = vunpack.c.0.s8 %v3191
        %v3193 = vlaneseq
        %v3194 = vshrl.u32 %v3193, 7
        %v3195 = vsub.s32 %v3192, %v3194
        %v3196 = vrot.slane %v3188, %v3195
        %v3198 = vunpack.c.l.s4 1934713408
        %v3199 = vunpack.c.0.s8 %v3198
        %v3200 = vlaneseq
        %v3201 = vshrl.u32 %v3200, 7
        %v3202 = vsub.s32 %v3199, %v3201
        %v3203 = vrot.slane %v3189, %v3202
        %v3204 = vcombine.high %v3180, 0.0
        %v3205 = vcombine.high %v3187, 0.0
        %v3206 = vcombine.high %v3196, 0.0
        %v3207 = vcombine.high %v3203, 0.0
        %v3208 = vcombine.low %v3112, %v3119
        %v3210 = vunpack.c.l.s4 1983009808
        %v3211 = vunpack.c.0.s8 %v3210
        %v3212 = vlaneseq
        %v3213 = vshrl.u32 %v3212, 7
        %v3214 = vsub.s32 %v3211, %v3213
        %v3215 = vrot.slane %v3208, %v3214
        %v3216 = vcombine.low %v3136, %v3137
        %v3218 = vunpack.c.l.s4 1983009808
        %v3219 = vunpack.c.0.s8 %v3218
        %v3220 = vlaneseq
        %v3221 = vshrl.u32 %v3220, 7
        %v3222 = vsub.s32 %v3219, %v3221
        %v3223 = vrot.slane %v3216, %v3222
        %v3224 = vcombine.low %v3128, %v3135
        %v3226 = vunpack.c.l.s4 1983009808
        %v3227 = vunpack.c.0.s8 %v3226
        %v3228 = vlaneseq
        %v3229 = vshrl.u32 %v3228, 7
        %v3230 = vsub.s32 %v3227, %v3229
        %v3231 = vrot.slane %v3224, %v3230
        %v3232 = vcombine.low %v3138, %v3139
        %v3234 = vunpack.c.l.s4 1983009808
        %v3235 = vunpack.c.0.s8 %v3234
        %v3236 = vlaneseq
        %v3237 = vshrl.u32 %v3236, 7
        %v3238 = vsub.s32 %v3235, %v3237
        %v3239 = vrot.slane %v3232, %v3238
        %v3240 = vcombine.low %v3215, %v3223
        %v3241 = vcombine.high %v3215, %v3223
        %v3243 = vunpack.c.l.s4 1934713408
        %v3244 = vunpack.c.0.s8 %v3243
        %v3245 = vlaneseq
        %v3246 = vshrl.u32 %v3245, 7
        %v3247 = vsub.s32 %v3244, %v3246
        %v3248 = vrot.slane %v3240, %v3247
        %v3250 = vunpack.c.l.s4 1934713408
        %v3251 = vunpack.c.0.s8 %v3250
        %v3252 = vlaneseq
        %v3253 = vshrl.u32 %v3252, 7
        %v3254 = vsub.s32 %v3251, %v3253
        %v3255 = vrot.slane %v3241, %v3254
        %v3256 = vcombine.low %v3231, %v3239
        %v3257 = vcombine.high %v3231, %v3239
        %v3259 = vunpack.c.l.s4 1934713408
        %v3260 = vunpack.c.0.s8 %v3259
        %v3261 = vlaneseq
        %v3262 = vshrl.u32 %v3261, 7
        %v3263 = vsub.s32 %v3260, %v3262
        %v3264 = vrot.slane %v3256, %v3263
        %v3266 = vunpack.c.l.s4 1934713408
        %v3267 = vunpack.c.0.s8 %v3266
        %v3268 = vlaneseq
        %v3269 = vshrl.u32 %v3268, 7
        %v3270 = vsub.s32 %v3267, %v3269
        %v3271 = vrot.slane %v3257, %v3270
        %v3272 = vcombine.low %v3248, %v3264
        %v3273 = vcombine.high %v3248, %v3264
        %v3274 = vcombine.low %v3255, %v3271
        %v3275 = vcombine.high %v3255, %v3271
        %v3276 = vcombine.low %v3180, %v3187
        %v3278 = vunpack.c.l.s4 1983009808
        %v3279 = vunpack.c.0.s8 %v3278
        %v3280 = vlaneseq
        %v3281 = vshrl.u32 %v3280, 7
        %v3282 = vsub.s32 %v3279, %v3281
        %v3283 = vrot.slane %v3276, %v3282
        %v3284 = vcombine.low %v3204, %v3205
        %v3286 = vunpack.c.l.s4 1983009808
        %v3287 = vunpack.c.0.s8 %v3286
        %v3288 = vlaneseq
        %v3289 = vshrl.u32 %v3288, 7
        %v3290 = vsub.s32 %v3287, %v3289
        %v3291 = vrot.slane %v3284, %v3290
        %v3292 = vcombine.low %v3196, %v3203
        %v3294 = vunpack.c.l.s4 1983009808
        %v3295 = vunpack.c.0.s8 %v3294
        %v3296 = vlaneseq
        %v3297 = vshrl.u32 %v3296, 7
        %v3298 = vsub.s32 %v3295, %v3297
        %v3299 = vrot.slane %v3292, %v3298
        %v3300 = vcombine.low %v3206, %v3207
        %v3302 = vunpack.c.l.s4 1983009808
        %v3303 = vunpack.c.0.s8 %v3302
        %v3304 = vlaneseq
        %v3305 = vshrl.u32 %v3304, 7
        %v3306 = vsub.s32 %v3303, %v3305
        %v3307 = vrot.slane %v3300, %v3306
        %v3308 = vcombine.low %v3283, %v3291
        %v3309 = vcombine.high %v3283, %v3291
        %v3311 = vunpack.c.l.s4 1934713408
        %v3312 = vunpack.c.0.s8 %v3311
        %v3313 = vlaneseq
        %v3314 = vshrl.u32 %v3313, 7
        %v3315 = vsub.s32 %v3312, %v3314
        %v3316 = vrot.slane %v3308, %v3315
        %v3318 = vunpack.c.l.s4 1934713408
        %v3319 = vunpack.c.0.s8 %v3318
        %v3320 = vlaneseq
        %v3321 = vshrl.u32 %v3320, 7
        %v3322 = vsub.s32 %v3319, %v3321
        %v3323 = vrot.slane %v3309, %v3322
        %v3324 = vcombine.low %v3299, %v3307
        %v3325 = vcombine.high %v3299, %v3307
        %v3327 = vunpack.c.l.s4 1934713408
        %v3328 = vunpack.c.0.s8 %v3327
        %v3329 = vlaneseq
        %v3330 = vshrl.u32 %v3329, 7
        %v3331 = vsub.s32 %v3328, %v3330
        %v3332 = vrot.slane %v3324, %v3331
        %v3334 = vunpack.c.l.s4 1934713408
        %v3335 = vunpack.c.0.s8 %v3334
        %v3336 = vlaneseq
        %v3337 = vshrl.u32 %v3336, 7
        %v3338 = vsub.s32 %v3335, %v3337
        %v3339 = vrot.slane %v3325, %v3338
        %v3340 = vcombine.low %v3316, %v3332
        %v3341 = vcombine.high %v3316, %v3332
        %v3342 = vcombine.low %v3323, %v3339
        %v3343 = vcombine.high %v3323, %v3339
        %3346 = vrot.lane.b32.xlu0 %v3273, 2
        %v3347 = vpop.permute.xlu0 %3346
        %3348 = vrot.lane.b32.xlu0 %v3341, 2
        %v3349 = vpop.permute.xlu0 %3348
        %3354 = vrot.lane.b32.xlu0 %v3274, 4
        %v3355 = vpop.permute.xlu0 %3354
        %3356 = vrot.lane.b32.xlu0 %v3342, 4
        %v3357 = vpop.permute.xlu0 %3356
        %3362 = vrot.lane.b32.xlu0 %v3275, 6
        %v3363 = vpop.permute.xlu0 %3362
        %3364 = vrot.lane.b32.xlu0 %v3343, 6
        %v3365 = vpop.permute.xlu0 %3364
        %v3368 = vsel %vm2615, %v3272, %v3347
        %v3369 = vsel %vm2615, %v3340, %v3349
        %vm3370 = vcmask 31744
        %v3371 = vsel %vm3370, %v3368, %v3355
        %v3372 = vsel %vm3370, %v3369, %v3357
        %vm3373 = vcmask 48128
        %v3374 = vsel %vm3373, %v3371, %v3363
        %v3375 = vsel %vm3373, %v3372, %v3365
        %v3376 = vpack.c.bf16 %v3375, %v3374
        %v3377 = vld [vmem:[%s646] sm:$0xf]
        %vm3378 = vcmask 64512
        %v3380 = vsel %vm3378, %v3376, 0
        %vm3382 = vcmask 1043456
        %v3384 = vsel %vm3382, %v3377, 0
        %3386 = vmatprep.subr.bf16.mxu0 0
        %3387 = vmatpush1.bf16.msra.mxu0 0
        %3388 = vmatprep.subr.bf16.mxu0 0
        %3389 = vmatpush1.bf16.msra.mxu0 0
        %3390 = vmatprep.subr.bf16.mxu0 0
        %3391 = vmatpush1.bf16.msra.mxu0 0
        %3392 = vmatprep.subr.bf16.mxu0 0
        %3393 = vmatpush1.bf16.msra.mxu0 0
        %3394 = vmatprep.subr.bf16.mxu0 0
        %3395 = vmatpush1.bf16.msra.mxu0 0
        %3396 = vmatprep.subr.bf16.mxu0 0
        %3397 = vmatpush1.bf16.msra.mxu0 0
        %3398 = vmatprep.subr.bf16.mxu0 0
        %3399 = vmatpush1.bf16.msra.mxu0 0
        %3400 = vmatprep.subr.bf16.mxu0 0
        %3401 = vmatpush1.bf16.msra.mxu0 %v3384
        %3402 = vmatprep.subr.bf16.mxu0 0
        %3403 = vmatpush2.bf16.msra.mxu0 0
        %3404 = vmatprep.subr.bf16.mxu0 0
        %3405 = vmatpush2.bf16.msra.mxu0 0
        %3406 = vmatprep.subr.bf16.mxu0 0
        %3407 = vmatpush2.bf16.msra.mxu0 0
        %3408 = vmatprep.subr.bf16.mxu0 0
        %3409 = vmatpush2.bf16.msra.mxu0 0
        %3410 = vmatprep.subr.bf16.mxu0 0
        %3411 = vmatpush2.bf16.msra.mxu0 0
        %3412 = vmatprep.subr.bf16.mxu0 0
        %3413 = vmatpush2.bf16.msra.mxu0 0
        %3414 = vmatprep.subr.bf16.mxu0 0
        %3415 = vmatpush2.bf16.msra.mxu0 0
        %3416 = vmatprep.subr.bf16.mxu0 0
        %3417 = vmatpush2.bf16.msra.mxu0 0
        %3418 = vmatprep.mubr.bf16.mxu0 0
        %3419 = vmatmul.mubr.bf16.gmra.mxu0 %v3380
        %v3420 = vpop.f32.mrf.mxu0
        %v3421 = vadd.f32 0.0, %v3420
        %v3422 = vpop.f32.mrf.mxu0
        %v3423 = vpop.f32.mrf.mxu0
        %v3424 = vadd.f32 0.0, %v3423
        %v3425 = vpop.f32.mrf.mxu0
        %3426 = vdwg.mxu0
        %v3427 = vadd.f32 %v700, %v3421
        %v3428 = vadd.f32 %v701, %v3424
        %3429 = vrot.lane.b32.xlu0 %v734, 32
        %v3430 = vpop.permute.xlu0 %3429
        %v3432 = vadd.f32 %v3427, %v3430
        %v3433 = vadd.f32 %v3428, %v3430
        %v3434 = vsel %vm702, %v3432, 0.0
        %3435 = vadd.xlane.f32.xlu0 %v3434
        %v3436 = vpop.xlane.xlu0 %3435
        %v3437 = vsel %vm702, %v3433, 0.0
        %3438 = vadd.xlane.f32.xlu0 %v3437
        %v3439 = vpop.xlane.xlu0 %3438
        %v3440 = vmul.f32 %v3436, %v709
        %v3441 = vmul.f32 %v3439, %v709
        %v3442 = vsub.f32 %v3432, %v3440
        %v3443 = vsub.f32 %v3433, %v3441
        %v3444 = vmul.f32 %v3442, %v3442
        %v3445 = vmul.f32 %v3443, %v3443
        %v3446 = vsel %vm702, %v3444, 0.0
        %3447 = vadd.xlane.f32.xlu0 %v3446
        %v3448 = vpop.xlane.xlu0 %3447
        %v3449 = vsel %vm702, %v3445, 0.0
        %3450 = vadd.xlane.f32.xlu0 %v3449
        %v3451 = vpop.xlane.xlu0 %3450
        %v3452 = vmul.f32 %v3448, %v709
        %v3453 = vmul.f32 %v3451, %v709
        %v3454 = vadd.f32 %v3452, 1e-05
        %v3455 = vadd.f32 %v3453, 1e-05
        %v3456 = vrsqrt.pop %v3454
        %v3457 = vrsqrt.pop %v3455
        %v3458 = vmul.f32 %v3442, %v3456
        %v3459 = vmul.f32 %v3443, %v3457
        %v3460 = vrot.slane %v699, 1
        %v3461 = vlaneseq
        %v3462 = vshrl.u32 %v3461, 7
        %v3463 = vsub.s32 0, %v3462
        %v3464 = vrot.slane %v3460, %v3463
        %v3466 = vmul.f32 %v3458, %v3464
        %v3467 = vmul.f32 %v3459, %v3464
        %3468 = vrot.lane.b32.xlu0 %v699, 96
        %v3469 = vpop.permute.xlu0 %3468
        %v3470 = vrot.slane %v3469, 1
        %v3471 = vlaneseq
        %v3472 = vshrl.u32 %v3471, 7
        %v3473 = vsub.s32 0, %v3472
        %v3474 = vrot.slane %v3470, %v3473
        %v3476 = vadd.f32 %v3466, %v3474
        %v3477 = vadd.f32 %v3467, %v3474
        %v3478 = vpack.c.bf16 %v3477, %v3476
        %v3479 = vld [vmem:[%s651] sm:$0xf]
        %v3480 = vld [vmem:[%s651 + $0x4] sm:$0xf]
        %v3481 = vld [vmem:[%s651 + $0x8] sm:$0xf]
        %v3482 = vld [vmem:[%s651 + $0xc] sm:$0xf]
        %3483 = vrot.lane.b32.xlu0 %v699, 64
        %v3484 = vpop.permute.xlu0 %3483
        %v3485 = vrot.slane %v3484, 1
        %v3486 = vrot.slane %v3484, 2
        %vm3487 = vcmask 523264
        %v3488 = vsel %vm3487, %v3485, %v3486
        %v3489 = vlaneseq
        %v3490 = vshrl.u32 %v3489, 7
        %v3491 = vsub.s32 0, %v3490
        %v3492 = vrot.slane %v3488, %v3491
        %v3498 = vunpack.c.l.b16 %v3479
        %v3499 = vunpack.c.l.b16 %v3480
        %v3500 = vunpack.c.l.b16 %v3481
        %v3501 = vunpack.c.l.b16 %v3482
        %v3502 = vpack.c.b16 %v3499, %v3498
        %v3503 = vpack.c.b16 %v3501, %v3500
        %v3507 = vsel %vm702, %v3478, 0
        %3509 = vmatprep.subr.bf16.mxu0 0
        %3510 = vmatpush1.bf16.msra.mxu0 0
        %3511 = vmatprep.subr.bf16.mxu0 0
        %3512 = vmatpush1.bf16.msra.mxu0 0
        %3513 = vmatprep.subr.bf16.mxu0 0
        %3514 = vmatpush1.bf16.msra.mxu0 0
        %3515 = vmatprep.subr.bf16.mxu0 0
        %3516 = vmatpush1.bf16.msra.mxu0 0
        %3517 = vmatprep.subr.bf16.mxu0 0
        %3518 = vmatpush1.bf16.msra.mxu0 0
        %3519 = vmatprep.subr.bf16.mxu0 0
        %3520 = vmatpush1.bf16.msra.mxu0 0
        %3521 = vmatprep.subr.bf16.mxu0 0
        %3522 = vmatpush1.bf16.msra.mxu0 %v3503
        %3523 = vmatprep.subr.bf16.mxu0 0
        %3524 = vmatpush1.bf16.msra.mxu0 %v3502
        %3525 = vmatprep.subr.bf16.mxu0 0
        %3526 = vmatpush2.bf16.msra.mxu0 0
        %3527 = vmatprep.subr.bf16.mxu0 0
        %3528 = vmatpush2.bf16.msra.mxu0 0
        %3529 = vmatprep.subr.bf16.mxu0 0
        %3530 = vmatpush2.bf16.msra.mxu0 0
        %3531 = vmatprep.subr.bf16.mxu0 0
        %3532 = vmatpush2.bf16.msra.mxu0 0
        %3533 = vmatprep.subr.bf16.mxu0 0
        %3534 = vmatpush2.bf16.msra.mxu0 0
        %3535 = vmatprep.subr.bf16.mxu0 0
        %3536 = vmatpush2.bf16.msra.mxu0 0
        %3537 = vmatprep.subr.bf16.mxu0 0
        %3538 = vmatpush2.bf16.msra.mxu0 0
        %3539 = vmatprep.subr.bf16.mxu0 0
        %3540 = vmatpush2.bf16.msra.mxu0 0
        %3541 = vmatprep.mubr.bf16.mxu0 0
        %3542 = vmatmul.mubr.bf16.gmra.mxu0 %v3507
        %v3543 = vpop.f32.mrf.mxu0
        %v3544 = vadd.f32 %v3492, %v3543
        %v3545 = vpop.f32.mrf.mxu0
        %v3546 = vpop.f32.mrf.mxu0
        %v3547 = vadd.f32 %v3492, %v3546
        %v3548 = vpop.f32.mrf.mxu0
        %3549 = vdwg.mxu0
        %v3550 = vmax.f32 %v3544, 0.0
        %v3551 = vmax.f32 %v3547, 0.0
        %v3552 = vpack.c.bf16 %v3551, %v3550
        %v3553 = vld [vmem:[%s656] sm:$0xf]
        %v3554 = vld [vmem:[%s656 + $0x4] sm:$0xf]
        %v3555 = vld [vmem:[%s656 + $0x8] sm:$0xf]
        %v3556 = vld [vmem:[%s656 + $0xc] sm:$0xf]
        %v3557 = vld [vmem:[%s656 + $0x10] sm:$0xf]
        %v3558 = vld [vmem:[%s656 + $0x14] sm:$0xf]
        %v3559 = vld [vmem:[%s656 + $0x18] sm:$0xf]
        %v3560 = vld [vmem:[%s656 + $0x1c] sm:$0xf]
        %v3561 = vld [vmem:[%s656 + $0x20] sm:$0xf]
        %v3562 = vld [vmem:[%s656 + $0x24] sm:$0xf]
        %v3563 = vld [vmem:[%s656 + $0x28] sm:$0xf]
        %v3564 = vld [vmem:[%s656 + $0x2c] sm:$0xf]
        %v3565 = vld [vmem:[%s656 + $0x30] sm:$0xf]
        %v3566 = vld [vmem:[%s656 + $0x34] sm:$0xf]
        %v3567 = vld [vmem:[%s656 + $0x38] sm:$0xf]
        %v3568 = vld [vmem:[%s656 + $0x3c] sm:$0xf]
        %v3585 = vunpack.c.l.b16 %v3553
        %v3586 = vunpack.c.l.b16 %v3554
        %v3587 = vunpack.c.l.b16 %v3555
        %v3588 = vunpack.c.l.b16 %v3556
        %v3589 = vunpack.c.l.b16 %v3557
        %v3590 = vunpack.c.l.b16 %v3558
        %v3591 = vunpack.c.l.b16 %v3559
        %v3592 = vunpack.c.l.b16 %v3560
        %v3593 = vunpack.c.l.b16 %v3561
        %v3594 = vunpack.c.l.b16 %v3562
        %v3595 = vunpack.c.l.b16 %v3563
        %v3596 = vunpack.c.l.b16 %v3564
        %v3597 = vunpack.c.l.b16 %v3565
        %v3598 = vunpack.c.l.b16 %v3566
        %v3599 = vunpack.c.l.b16 %v3567
        %v3600 = vunpack.c.l.b16 %v3568
        %v3601 = vpack.c.b16 %v3586, %v3585
        %v3602 = vpack.c.b16 %v3588, %v3587
        %v3603 = vpack.c.b16 %v3590, %v3589
        %v3604 = vpack.c.b16 %v3592, %v3591
        %v3605 = vpack.c.b16 %v3594, %v3593
        %v3606 = vpack.c.b16 %v3596, %v3595
        %v3607 = vpack.c.b16 %v3598, %v3597
        %v3608 = vpack.c.b16 %v3600, %v3599
        %3617 = vmatprep.subr.bf16.mxu0 0
        %3618 = vmatpush1.bf16.msra.mxu0 %v3608
        %3619 = vmatprep.subr.bf16.mxu0 0
        %3620 = vmatpush1.bf16.msra.mxu0 %v3607
        %3621 = vmatprep.subr.bf16.mxu0 0
        %3622 = vmatpush1.bf16.msra.mxu0 %v3606
        %3623 = vmatprep.subr.bf16.mxu0 0
        %3624 = vmatpush1.bf16.msra.mxu0 %v3605
        %3625 = vmatprep.subr.bf16.mxu0 0
        %3626 = vmatpush1.bf16.msra.mxu0 %v3604
        %3627 = vmatprep.subr.bf16.mxu0 0
        %3628 = vmatpush1.bf16.msra.mxu0 %v3603
        %3629 = vmatprep.subr.bf16.mxu0 0
        %3630 = vmatpush1.bf16.msra.mxu0 %v3602
        %3631 = vmatprep.subr.bf16.mxu0 0
        %3632 = vmatpush1.bf16.msra.mxu0 %v3601
        %3633 = vmatprep.subr.bf16.mxu0 0
        %3634 = vmatpush2.bf16.msra.mxu0 0
        %3635 = vmatprep.subr.bf16.mxu0 0
        %3636 = vmatpush2.bf16.msra.mxu0 0
        %3637 = vmatprep.subr.bf16.mxu0 0
        %3638 = vmatpush2.bf16.msra.mxu0 0
        %3639 = vmatprep.subr.bf16.mxu0 0
        %3640 = vmatpush2.bf16.msra.mxu0 0
        %3641 = vmatprep.subr.bf16.mxu0 0
        %3642 = vmatpush2.bf16.msra.mxu0 0
        %3643 = vmatprep.subr.bf16.mxu0 0
        %3644 = vmatpush2.bf16.msra.mxu0 0
        %3645 = vmatprep.subr.bf16.mxu0 0
        %3646 = vmatpush2.bf16.msra.mxu0 0
        %3647 = vmatprep.subr.bf16.mxu0 0
        %3648 = vmatpush2.bf16.msra.mxu0 0
        %3649 = vmatprep.mubr.bf16.mxu0 0
        %3650 = vmatmul.mubr.bf16.gmra.mxu0 %v3552
        %v3651 = vpop.f32.mrf.mxu0
        %v3652 = vadd.f32 0.0, %v3651
        %v3653 = vpop.f32.mrf.mxu0
        %v3654 = vpop.f32.mrf.mxu0
        %v3655 = vadd.f32 0.0, %v3654
        %v3656 = vpop.f32.mrf.mxu0
        %3657 = vdwg.mxu0
        %v3658 = vadd.f32 %v3432, %v3652
        %v3659 = vadd.f32 %v3433, %v3655
        %v3660 = vlaneseq
        %v3661 = vshrl.u32 %v3660, 7
        %v3662 = vsub.s32 0, %v3661
        %v3663 = vrot.slane %v3486, %v3662
        %v3665 = vadd.f32 %v3658, %v3663
        %v3666 = vadd.f32 %v3659, %v3663
        %3667 = vst.msk [vmem:[%s607] sm:$0xff] %vm702, %v3665
        %3668 = vst.msk [vmem:[%s607 + $0x8] sm:$0xff] %vm702, %v3666
        %v3669 = vsel %vm702, %v3665, 0.0
        %3670 = vadd.xlane.f32.xlu0 %v3669
        %v3671 = vpop.xlane.xlu0 %3670
        %v3672 = vsel %vm702, %v3666, 0.0
        %3673 = vadd.xlane.f32.xlu0 %v3672
        %v3674 = vpop.xlane.xlu0 %3673
        %v3675 = vmul.f32 %v3671, %v709
        %v3676 = vmul.f32 %v3674, %v709
        %v3677 = vsub.f32 %v3665, %v3675
        %v3678 = vsub.f32 %v3666, %v3676
        %v3679 = vmul.f32 %v3677, %v3677
        %v3680 = vmul.f32 %v3678, %v3678
        %v3681 = vsel %vm702, %v3679, 0.0
        %3682 = vadd.xlane.f32.xlu0 %v3681
        %v3683 = vpop.xlane.xlu0 %3682
        %v3684 = vsel %vm702, %v3680, 0.0
        %3685 = vadd.xlane.f32.xlu0 %v3684
        %v3686 = vpop.xlane.xlu0 %3685
        %v3687 = vmul.f32 %v3683, %v709
        %v3688 = vmul.f32 %v3686, %v709
        %v3689 = vadd.f32 %v3687, 1e-05
        %v3690 = vadd.f32 %v3688, 1e-05
        %v3691 = vrsqrt.pop %v3689
        %v3692 = vrsqrt.pop %v3690
        %v3693 = vmul.f32 %v3677, %v3691
        %v3694 = vmul.f32 %v3678, %v3692
        %3695 = vrot.lane.b32.xlu0 %v699, 32
        %v3696 = vpop.permute.xlu0 %3695
        %v3697 = vrot.slane %v3696, 2
        %v3698 = vlaneseq
        %v3699 = vshrl.u32 %v3698, 7
        %v3700 = vsub.s32 0, %v3699
        %v3701 = vrot.slane %v3697, %v3700
        %v3703 = vmul.f32 %v3693, %v3701
        %v3704 = vmul.f32 %v3694, %v3701
        %v3705 = vrot.slane %v699, 3
        %v3706 = vlaneseq
        %v3707 = vshrl.u32 %v3706, 7
        %v3708 = vsub.s32 0, %v3707
        %v3709 = vrot.slane %v3705, %v3708
        %v3711 = vadd.f32 %v3703, %v3709
        %v3712 = vadd.f32 %v3704, %v3709
        %v3713 = vpack.c.bf16 %v3712, %v3711
        %v3714 = vld [vmem:[%s661] sm:$0xf]
        %v3715 = vld [vmem:[%s661 + $0x4] sm:$0xf]
        %v3716 = vld [vmem:[%s661 + $0x8] sm:$0xf]
        %v3717 = vld [vmem:[%s661 + $0xc] sm:$0xf]
        %v3718 = vrot.slane %v3469, 3
        %v3719 = vlaneseq
        %v3720 = vshrl.u32 %v3719, 7
        %v3721 = vsub.s32 0, %v3720
        %v3722 = vrot.slane %v3718, %v3721
        %v3728 = vunpack.c.l.b16 %v3714
        %v3729 = vunpack.c.l.b16 %v3715
        %v3730 = vunpack.c.l.b16 %v3716
        %v3731 = vunpack.c.l.b16 %v3717
        %v3732 = vpack.c.b16 %v3729, %v3728
        %v3733 = vpack.c.b16 %v3731, %v3730
        %v3737 = vsel %vm702, %v3713, 0
        %3739 = vmatprep.subr.bf16.mxu0 0
        %3740 = vmatpush1.bf16.msra.mxu0 0
        %3741 = vmatprep.subr.bf16.mxu0 0
        %3742 = vmatpush1.bf16.msra.mxu0 0
        %3743 = vmatprep.subr.bf16.mxu0 0
        %3744 = vmatpush1.bf16.msra.mxu0 0
        %3745 = vmatprep.subr.bf16.mxu0 0
        %3746 = vmatpush1.bf16.msra.mxu0 0
        %3747 = vmatprep.subr.bf16.mxu0 0
        %3748 = vmatpush1.bf16.msra.mxu0 0
        %3749 = vmatprep.subr.bf16.mxu0 0
        %3750 = vmatpush1.bf16.msra.mxu0 0
        %3751 = vmatprep.subr.bf16.mxu0 0
        %3752 = vmatpush1.bf16.msra.mxu0 %v3733
        %3753 = vmatprep.subr.bf16.mxu0 0
        %3754 = vmatpush1.bf16.msra.mxu0 %v3732
        %3755 = vmatprep.subr.bf16.mxu0 0
        %3756 = vmatpush2.bf16.msra.mxu0 0
        %3757 = vmatprep.subr.bf16.mxu0 0
        %3758 = vmatpush2.bf16.msra.mxu0 0
        %3759 = vmatprep.subr.bf16.mxu0 0
        %3760 = vmatpush2.bf16.msra.mxu0 0
        %3761 = vmatprep.subr.bf16.mxu0 0
        %3762 = vmatpush2.bf16.msra.mxu0 0
        %3763 = vmatprep.subr.bf16.mxu0 0
        %3764 = vmatpush2.bf16.msra.mxu0 0
        %3765 = vmatprep.subr.bf16.mxu0 0
        %3766 = vmatpush2.bf16.msra.mxu0 0
        %3767 = vmatprep.subr.bf16.mxu0 0
        %3768 = vmatpush2.bf16.msra.mxu0 0
        %3769 = vmatprep.subr.bf16.mxu0 0
        %3770 = vmatpush2.bf16.msra.mxu0 0
        %3771 = vmatprep.mubr.bf16.mxu0 0
        %3772 = vmatmul.mubr.bf16.gmra.mxu0 %v3737
        %v3773 = vpop.f32.mrf.mxu0
        %v3774 = vadd.f32 %v3722, %v3773
        %v3775 = vpop.f32.mrf.mxu0
        %v3776 = vpop.f32.mrf.mxu0
        %v3777 = vadd.f32 %v3722, %v3776
        %v3778 = vpop.f32.mrf.mxu0
        %3779 = vdwg.mxu0
        %v3780 = vld [vmem:[%s666] sm:$0xf]
        %v3781 = vld [vmem:[%s666 + $0x4] sm:$0xf]
        %v3782 = vld [vmem:[%s666 + $0x8] sm:$0xf]
        %v3783 = vld [vmem:[%s666 + $0xc] sm:$0xf]
        %3784 = vrot.lane.b32.xlu0 %v699, 88
        %v3785 = vpop.permute.xlu0 %3784
        %v3786 = vrot.slane %v3785, 3
        %v3787 = vlaneseq
        %v3788 = vshrl.u32 %v3787, 7
        %v3789 = vsub.s32 0, %v3788
        %v3790 = vrot.slane %v3786, %v3789
        %v3796 = vunpack.c.l.b16 %v3780
        %v3797 = vunpack.c.l.b16 %v3781
        %v3798 = vunpack.c.l.b16 %v3782
        %v3799 = vunpack.c.l.b16 %v3783
        %v3800 = vpack.c.b16 %v3797, %v3796
        %v3801 = vpack.c.b16 %v3799, %v3798
        %3804 = vmatprep.subr.bf16.mxu0 0
        %3805 = vmatpush1.bf16.msra.mxu0 0
        %3806 = vmatprep.subr.bf16.mxu0 0
        %3807 = vmatpush1.bf16.msra.mxu0 0
        %3808 = vmatprep.subr.bf16.mxu0 0
        %3809 = vmatpush1.bf16.msra.mxu0 0
        %3810 = vmatprep.subr.bf16.mxu0 0
        %3811 = vmatpush1.bf16.msra.mxu0 0
        %3812 = vmatprep.subr.bf16.mxu0 0
        %3813 = vmatpush1.bf16.msra.mxu0 0
        %3814 = vmatprep.subr.bf16.mxu0 0
        %3815 = vmatpush1.bf16.msra.mxu0 0
        %3816 = vmatprep.subr.bf16.mxu0 0
        %3817 = vmatpush1.bf16.msra.mxu0 %v3801
        %3818 = vmatprep.subr.bf16.mxu0 0
        %3819 = vmatpush1.bf16.msra.mxu0 %v3800
        %3820 = vmatprep.subr.bf16.mxu0 0
        %3821 = vmatpush2.bf16.msra.mxu0 0
        %3822 = vmatprep.subr.bf16.mxu0 0
        %3823 = vmatpush2.bf16.msra.mxu0 0
        %3824 = vmatprep.subr.bf16.mxu0 0
        %3825 = vmatpush2.bf16.msra.mxu0 0
        %3826 = vmatprep.subr.bf16.mxu0 0
        %3827 = vmatpush2.bf16.msra.mxu0 0
        %3828 = vmatprep.subr.bf16.mxu0 0
        %3829 = vmatpush2.bf16.msra.mxu0 0
        %3830 = vmatprep.subr.bf16.mxu0 0
        %3831 = vmatpush2.bf16.msra.mxu0 0
        %3832 = vmatprep.subr.bf16.mxu0 0
        %3833 = vmatpush2.bf16.msra.mxu0 0
        %3834 = vmatprep.subr.bf16.mxu0 0
        %3835 = vmatpush2.bf16.msra.mxu0 0
        %3836 = vmatprep.mubr.bf16.mxu0 0
        %3837 = vmatmul.mubr.bf16.gmra.mxu0 %v3737
        %v3838 = vpop.f32.mrf.mxu0
        %v3839 = vadd.f32 %v3790, %v3838
        %v3840 = vpop.f32.mrf.mxu0
        %v3841 = vpop.f32.mrf.mxu0
        %v3842 = vadd.f32 %v3790, %v3841
        %v3843 = vpop.f32.mrf.mxu0
        %3844 = vdwg.mxu0
        %v3845 = vpack.c.bf16 %v3842, %v3839
        %v3846 = vld [vmem:[%s670] sm:$0xf]
        %v3848 = vsel %vm3378, %v3845, 0
        %v3851 = vsel %vm3382, %v3846, 0
        %3853 = vmatprep.subr.bf16.mxu0 0
        %3854 = vmatpush1.bf16.msra.mxu0 0
        %3855 = vmatprep.subr.bf16.mxu0 0
        %3856 = vmatpush1.bf16.msra.mxu0 0
        %3857 = vmatprep.subr.bf16.mxu0 0
        %3858 = vmatpush1.bf16.msra.mxu0 0
        %3859 = vmatprep.subr.bf16.mxu0 0
        %3860 = vmatpush1.bf16.msra.mxu0 0
        %3861 = vmatprep.subr.bf16.mxu0 0
        %3862 = vmatpush1.bf16.msra.mxu0 0
        %3863 = vmatprep.subr.bf16.mxu0 0
        %3864 = vmatpush1.bf16.msra.mxu0 0
        %3865 = vmatprep.subr.bf16.mxu0 0
        %3866 = vmatpush1.bf16.msra.mxu0 0
        %3867 = vmatprep.subr.bf16.mxu0 0
        %3868 = vmatpush1.bf16.msra.mxu0 %v3851
        %3869 = vmatprep.subr.bf16.mxu0 0
        %3870 = vmatpush2.bf16.msra.mxu0 0
        %3871 = vmatprep.subr.bf16.mxu0 0
        %3872 = vmatpush2.bf16.msra.mxu0 0
        %3873 = vmatprep.subr.bf16.mxu0 0
        %3874 = vmatpush2.bf16.msra.mxu0 0
        %3875 = vmatprep.subr.bf16.mxu0 0
        %3876 = vmatpush2.bf16.msra.mxu0 0
        %3877 = vmatprep.subr.bf16.mxu0 0
        %3878 = vmatpush2.bf16.msra.mxu0 0
        %3879 = vmatprep.subr.bf16.mxu0 0
        %3880 = vmatpush2.bf16.msra.mxu0 0
        %3881 = vmatprep.subr.bf16.mxu0 0
        %3882 = vmatpush2.bf16.msra.mxu0 0
        %3883 = vmatprep.subr.bf16.mxu0 0
        %3884 = vmatpush2.bf16.msra.mxu0 0
        %3885 = vmatprep.mubr.bf16.mxu0 0
        %3886 = vmatmul.mubr.bf16.gmra.mxu0 %v3848
        %v3887 = vpop.f32.mrf.mxu0
        %v3888 = vadd.f32 0.0, %v3887
        %v3889 = vpop.f32.mrf.mxu0
        %v3890 = vpop.f32.mrf.mxu0
        %v3891 = vadd.f32 0.0, %v3890
        %v3892 = vpop.f32.mrf.mxu0
        %3893 = vdwg.mxu0
        %3896 = vrot.lane.b32.xlu0 %v3888, 112
        %v3897 = vpop.permute.xlu0 %3896
        %3898 = vrot.lane.b32.xlu0 %v3891, 112
        %v3899 = vpop.permute.xlu0 %3898
        %3902 = vrot.lane.b32.xlu0 %v3888, 96
        %v3903 = vpop.permute.xlu0 %3902
        %3904 = vrot.lane.b32.xlu0 %v3891, 96
        %v3905 = vpop.permute.xlu0 %3904
        %3908 = vrot.lane.b32.xlu0 %v3888, 80
        %v3909 = vpop.permute.xlu0 %3908
        %3910 = vrot.lane.b32.xlu0 %v3891, 80
        %v3911 = vpop.permute.xlu0 %3910
        %3914 = vrot.lane.b32.xlu0 %v3888, 64
        %v3915 = vpop.permute.xlu0 %3914
        %3916 = vrot.lane.b32.xlu0 %v3891, 64
        %v3917 = vpop.permute.xlu0 %3916
        %3920 = vrot.lane.b32.xlu0 %v3888, 48
        %v3921 = vpop.permute.xlu0 %3920
        %3922 = vrot.lane.b32.xlu0 %v3891, 48
        %v3923 = vpop.permute.xlu0 %3922
        %3926 = vrot.lane.b32.xlu0 %v3888, 32
        %v3927 = vpop.permute.xlu0 %3926
        %3928 = vrot.lane.b32.xlu0 %v3891, 32
        %v3929 = vpop.permute.xlu0 %3928
        %3932 = vrot.lane.b32.xlu0 %v3888, 16
        %v3933 = vpop.permute.xlu0 %3932
        %3934 = vrot.lane.b32.xlu0 %v3891, 16
        %v3935 = vpop.permute.xlu0 %3934
        %v3938 = vcombine.low %v3888, %v3903
        %v3939 = vcombine.high %v3888, %v3903
        %v3941 = vunpack.c.l.s4 1983009808
        %v3942 = vunpack.c.0.s8 %v3941
        %v3943 = vlaneseq
        %v3944 = vshrl.u32 %v3943, 7
        %v3945 = vsub.s32 %v3942, %v3944
        %v3946 = vrot.slane %v3938, %v3945
        %v3948 = vunpack.c.l.s4 1983009808
        %v3949 = vunpack.c.0.s8 %v3948
        %v3950 = vlaneseq
        %v3951 = vshrl.u32 %v3950, 7
        %v3952 = vsub.s32 %v3949, %v3951
        %v3953 = vrot.slane %v3939, %v3952
        %v3954 = vcombine.low %v3897, %v3909
        %v3955 = vcombine.high %v3897, %v3909
        %v3957 = vunpack.c.l.s4 1983009808
        %v3958 = vunpack.c.0.s8 %v3957
        %v3959 = vlaneseq
        %v3960 = vshrl.u32 %v3959, 7
        %v3961 = vsub.s32 %v3958, %v3960
        %v3962 = vrot.slane %v3954, %v3961
        %v3964 = vunpack.c.l.s4 1983009808
        %v3965 = vunpack.c.0.s8 %v3964
        %v3966 = vlaneseq
        %v3967 = vshrl.u32 %v3966, 7
        %v3968 = vsub.s32 %v3965, %v3967
        %v3969 = vrot.slane %v3955, %v3968
        %v3970 = vcombine.low %v3915, %v3927
        %v3971 = vcombine.high %v3915, %v3927
        %v3973 = vunpack.c.l.s4 1983009808
        %v3974 = vunpack.c.0.s8 %v3973
        %v3975 = vlaneseq
        %v3976 = vshrl.u32 %v3975, 7
        %v3977 = vsub.s32 %v3974, %v3976
        %v3978 = vrot.slane %v3970, %v3977
        %v3980 = vunpack.c.l.s4 1983009808
        %v3981 = vunpack.c.0.s8 %v3980
        %v3982 = vlaneseq
        %v3983 = vshrl.u32 %v3982, 7
        %v3984 = vsub.s32 %v3981, %v3983
        %v3985 = vrot.slane %v3971, %v3984
        %v3986 = vcombine.low %v3921, %v3933
        %v3987 = vcombine.high %v3921, %v3933
        %v3989 = vunpack.c.l.s4 1983009808
        %v3990 = vunpack.c.0.s8 %v3989
        %v3991 = vlaneseq
        %v3992 = vshrl.u32 %v3991, 7
        %v3993 = vsub.s32 %v3990, %v3992
        %v3994 = vrot.slane %v3986, %v3993
        %v3996 = vunpack.c.l.s4 1983009808
        %v3997 = vunpack.c.0.s8 %v3996
        %v3998 = vlaneseq
        %v3999 = vshrl.u32 %v3998, 7
        %v4000 = vsub.s32 %v3997, %v3999
        %v4001 = vrot.slane %v3987, %v4000
        %v4002 = vcombine.low %v3946, %v3962
        %v4003 = vcombine.high %v3946, %v3962
        %v4005 = vunpack.c.l.s4 1934713408
        %v4006 = vunpack.c.0.s8 %v4005
        %v4007 = vlaneseq
        %v4008 = vshrl.u32 %v4007, 7
        %v4009 = vsub.s32 %v4006, %v4008
        %v4010 = vrot.slane %v4002, %v4009
        %v4012 = vunpack.c.l.s4 1934713408
        %v4013 = vunpack.c.0.s8 %v4012
        %v4014 = vlaneseq
        %v4015 = vshrl.u32 %v4014, 7
        %v4016 = vsub.s32 %v4013, %v4015
        %v4017 = vrot.slane %v4003, %v4016
        %v4018 = vcombine.low %v3953, %v3969
        %v4019 = vcombine.high %v3953, %v3969
        %v4021 = vunpack.c.l.s4 1934713408
        %v4022 = vunpack.c.0.s8 %v4021
        %v4023 = vlaneseq
        %v4024 = vshrl.u32 %v4023, 7
        %v4025 = vsub.s32 %v4022, %v4024
        %v4026 = vrot.slane %v4018, %v4025
        %v4028 = vunpack.c.l.s4 1934713408
        %v4029 = vunpack.c.0.s8 %v4028
        %v4030 = vlaneseq
        %v4031 = vshrl.u32 %v4030, 7
        %v4032 = vsub.s32 %v4029, %v4031
        %v4033 = vrot.slane %v4019, %v4032
        %v4034 = vcombine.low %v3978, %v3994
        %v4035 = vcombine.high %v3978, %v3994
        %v4037 = vunpack.c.l.s4 1934713408
        %v4038 = vunpack.c.0.s8 %v4037
        %v4039 = vlaneseq
        %v4040 = vshrl.u32 %v4039, 7
        %v4041 = vsub.s32 %v4038, %v4040
        %v4042 = vrot.slane %v4034, %v4041
        %v4044 = vunpack.c.l.s4 1934713408
        %v4045 = vunpack.c.0.s8 %v4044
        %v4046 = vlaneseq
        %v4047 = vshrl.u32 %v4046, 7
        %v4048 = vsub.s32 %v4045, %v4047
        %v4049 = vrot.slane %v4035, %v4048
        %v4050 = vcombine.low %v3985, %v4001
        %v4051 = vcombine.high %v3985, %v4001
        %v4053 = vunpack.c.l.s4 1934713408
        %v4054 = vunpack.c.0.s8 %v4053
        %v4055 = vlaneseq
        %v4056 = vshrl.u32 %v4055, 7
        %v4057 = vsub.s32 %v4054, %v4056
        %v4058 = vrot.slane %v4050, %v4057
        %v4060 = vunpack.c.l.s4 1934713408
        %v4061 = vunpack.c.0.s8 %v4060
        %v4062 = vlaneseq
        %v4063 = vshrl.u32 %v4062, 7
        %v4064 = vsub.s32 %v4061, %v4063
        %v4065 = vrot.slane %v4051, %v4064
        %v4066 = vcombine.low %v4010, %v4042
        %v4067 = vcombine.high %v4010, %v4042
        %v4068 = vcombine.low %v4017, %v4049
        %v4069 = vcombine.high %v4017, %v4049
        %v4070 = vcombine.low %v4026, %v4058
        %v4071 = vcombine.high %v4026, %v4058
        %v4072 = vcombine.low %v4033, %v4065
        %v4073 = vcombine.high %v4033, %v4065
        %v4074 = vcombine.low %v3891, %v3905
        %v4075 = vcombine.high %v3891, %v3905
        %v4077 = vunpack.c.l.s4 1983009808
        %v4078 = vunpack.c.0.s8 %v4077
        %v4079 = vlaneseq
        %v4080 = vshrl.u32 %v4079, 7
        %v4081 = vsub.s32 %v4078, %v4080
        %v4082 = vrot.slane %v4074, %v4081
        %v4084 = vunpack.c.l.s4 1983009808
        %v4085 = vunpack.c.0.s8 %v4084
        %v4086 = vlaneseq
        %v4087 = vshrl.u32 %v4086, 7
        %v4088 = vsub.s32 %v4085, %v4087
        %v4089 = vrot.slane %v4075, %v4088
        %v4090 = vcombine.low %v3899, %v3911
        %v4091 = vcombine.high %v3899, %v3911
        %v4093 = vunpack.c.l.s4 1983009808
        %v4094 = vunpack.c.0.s8 %v4093
        %v4095 = vlaneseq
        %v4096 = vshrl.u32 %v4095, 7
        %v4097 = vsub.s32 %v4094, %v4096
        %v4098 = vrot.slane %v4090, %v4097
        %v4100 = vunpack.c.l.s4 1983009808
        %v4101 = vunpack.c.0.s8 %v4100
        %v4102 = vlaneseq
        %v4103 = vshrl.u32 %v4102, 7
        %v4104 = vsub.s32 %v4101, %v4103
        %v4105 = vrot.slane %v4091, %v4104
        %v4106 = vcombine.low %v3917, %v3929
        %v4107 = vcombine.high %v3917, %v3929
        %v4109 = vunpack.c.l.s4 1983009808
        %v4110 = vunpack.c.0.s8 %v4109
        %v4111 = vlaneseq
        %v4112 = vshrl.u32 %v4111, 7
        %v4113 = vsub.s32 %v4110, %v4112
        %v4114 = vrot.slane %v4106, %v4113
        %v4116 = vunpack.c.l.s4 1983009808
        %v4117 = vunpack.c.0.s8 %v4116
        %v4118 = vlaneseq
        %v4119 = vshrl.u32 %v4118, 7
        %v4120 = vsub.s32 %v4117, %v4119
        %v4121 = vrot.slane %v4107, %v4120
        %v4122 = vcombine.low %v3923, %v3935
        %v4123 = vcombine.high %v3923, %v3935
        %v4125 = vunpack.c.l.s4 1983009808
        %v4126 = vunpack.c.0.s8 %v4125
        %v4127 = vlaneseq
        %v4128 = vshrl.u32 %v4127, 7
        %v4129 = vsub.s32 %v4126, %v4128
        %v4130 = vrot.slane %v4122, %v4129
        %v4132 = vunpack.c.l.s4 1983009808
        %v4133 = vunpack.c.0.s8 %v4132
        %v4134 = vlaneseq
        %v4135 = vshrl.u32 %v4134, 7
        %v4136 = vsub.s32 %v4133, %v4135
        %v4137 = vrot.slane %v4123, %v4136
        %v4138 = vcombine.low %v4082, %v4098
        %v4139 = vcombine.high %v4082, %v4098
        %v4141 = vunpack.c.l.s4 1934713408
        %v4142 = vunpack.c.0.s8 %v4141
        %v4143 = vlaneseq
        %v4144 = vshrl.u32 %v4143, 7
        %v4145 = vsub.s32 %v4142, %v4144
        %v4146 = vrot.slane %v4138, %v4145
        %v4148 = vunpack.c.l.s4 1934713408
        %v4149 = vunpack.c.0.s8 %v4148
        %v4150 = vlaneseq
        %v4151 = vshrl.u32 %v4150, 7
        %v4152 = vsub.s32 %v4149, %v4151
        %v4153 = vrot.slane %v4139, %v4152
        %v4154 = vcombine.low %v4089, %v4105
        %v4155 = vcombine.high %v4089, %v4105
        %v4157 = vunpack.c.l.s4 1934713408
        %v4158 = vunpack.c.0.s8 %v4157
        %v4159 = vlaneseq
        %v4160 = vshrl.u32 %v4159, 7
        %v4161 = vsub.s32 %v4158, %v4160
        %v4162 = vrot.slane %v4154, %v4161
        %v4164 = vunpack.c.l.s4 1934713408
        %v4165 = vunpack.c.0.s8 %v4164
        %v4166 = vlaneseq
        %v4167 = vshrl.u32 %v4166, 7
        %v4168 = vsub.s32 %v4165, %v4167
        %v4169 = vrot.slane %v4155, %v4168
        %v4170 = vcombine.low %v4114, %v4130
        %v4171 = vcombine.high %v4114, %v4130
        %v4173 = vunpack.c.l.s4 1934713408
        %v4174 = vunpack.c.0.s8 %v4173
        %v4175 = vlaneseq
        %v4176 = vshrl.u32 %v4175, 7
        %v4177 = vsub.s32 %v4174, %v4176
        %v4178 = vrot.slane %v4170, %v4177
        %v4180 = vunpack.c.l.s4 1934713408
        %v4181 = vunpack.c.0.s8 %v4180
        %v4182 = vlaneseq
        %v4183 = vshrl.u32 %v4182, 7
        %v4184 = vsub.s32 %v4181, %v4183
        %v4185 = vrot.slane %v4171, %v4184
        %v4186 = vcombine.low %v4121, %v4137
        %v4187 = vcombine.high %v4121, %v4137
        %v4189 = vunpack.c.l.s4 1934713408
        %v4190 = vunpack.c.0.s8 %v4189
        %v4191 = vlaneseq
        %v4192 = vshrl.u32 %v4191, 7
        %v4193 = vsub.s32 %v4190, %v4192
        %v4194 = vrot.slane %v4186, %v4193
        %v4196 = vunpack.c.l.s4 1934713408
        %v4197 = vunpack.c.0.s8 %v4196
        %v4198 = vlaneseq
        %v4199 = vshrl.u32 %v4198, 7
        %v4200 = vsub.s32 %v4197, %v4199
        %v4201 = vrot.slane %v4187, %v4200
        %v4202 = vcombine.low %v4146, %v4178
        %v4203 = vcombine.high %v4146, %v4178
        %v4204 = vcombine.low %v4153, %v4185
        %v4205 = vcombine.high %v4153, %v4185
        %v4206 = vcombine.low %v4162, %v4194
        %v4207 = vcombine.high %v4162, %v4194
        %v4208 = vcombine.low %v4169, %v4201
        %v4209 = vcombine.high %v4169, %v4201
        %v4210 = vcombine.low %v4066, %v4068
        %v4211 = vcombine.high %v4066, %v4068
        %v4213 = vunpack.c.l.s4 1983009808
        %v4214 = vunpack.c.0.s8 %v4213
        %v4215 = vlaneseq
        %v4216 = vshrl.u32 %v4215, 7
        %v4217 = vsub.s32 %v4214, %v4216
        %v4218 = vrot.slane %v4210, %v4217
        %v4220 = vunpack.c.l.s4 1983009808
        %v4221 = vunpack.c.0.s8 %v4220
        %v4222 = vlaneseq
        %v4223 = vshrl.u32 %v4222, 7
        %v4224 = vsub.s32 %v4221, %v4223
        %v4225 = vrot.slane %v4211, %v4224
        %v4226 = vcombine.low %v4067, %v4069
        %v4227 = vcombine.high %v4067, %v4069
        %v4229 = vunpack.c.l.s4 1983009808
        %v4230 = vunpack.c.0.s8 %v4229
        %v4231 = vlaneseq
        %v4232 = vshrl.u32 %v4231, 7
        %v4233 = vsub.s32 %v4230, %v4232
        %v4234 = vrot.slane %v4226, %v4233
        %v4236 = vunpack.c.l.s4 1983009808
        %v4237 = vunpack.c.0.s8 %v4236
        %v4238 = vlaneseq
        %v4239 = vshrl.u32 %v4238, 7
        %v4240 = vsub.s32 %v4237, %v4239
        %v4241 = vrot.slane %v4227, %v4240
        %v4242 = vcombine.low %v4070, %v4072
        %v4243 = vcombine.high %v4070, %v4072
        %v4245 = vunpack.c.l.s4 1983009808
        %v4246 = vunpack.c.0.s8 %v4245
        %v4247 = vlaneseq
        %v4248 = vshrl.u32 %v4247, 7
        %v4249 = vsub.s32 %v4246, %v4248
        %v4250 = vrot.slane %v4242, %v4249
        %v4252 = vunpack.c.l.s4 1983009808
        %v4253 = vunpack.c.0.s8 %v4252
        %v4254 = vlaneseq
        %v4255 = vshrl.u32 %v4254, 7
        %v4256 = vsub.s32 %v4253, %v4255
        %v4257 = vrot.slane %v4243, %v4256
        %v4258 = vcombine.low %v4071, %v4073
        %v4259 = vcombine.high %v4071, %v4073
        %v4261 = vunpack.c.l.s4 1983009808
        %v4262 = vunpack.c.0.s8 %v4261
        %v4263 = vlaneseq
        %v4264 = vshrl.u32 %v4263, 7
        %v4265 = vsub.s32 %v4262, %v4264
        %v4266 = vrot.slane %v4258, %v4265
        %v4268 = vunpack.c.l.s4 1983009808
        %v4269 = vunpack.c.0.s8 %v4268
        %v4270 = vlaneseq
        %v4271 = vshrl.u32 %v4270, 7
        %v4272 = vsub.s32 %v4269, %v4271
        %v4273 = vrot.slane %v4259, %v4272
        %v4274 = vcombine.low %v4218, %v4234
        %v4275 = vcombine.high %v4218, %v4234
        %v4277 = vunpack.c.l.s4 1934713408
        %v4278 = vunpack.c.0.s8 %v4277
        %v4279 = vlaneseq
        %v4280 = vshrl.u32 %v4279, 7
        %v4281 = vsub.s32 %v4278, %v4280
        %v4282 = vrot.slane %v4274, %v4281
        %v4284 = vunpack.c.l.s4 1934713408
        %v4285 = vunpack.c.0.s8 %v4284
        %v4286 = vlaneseq
        %v4287 = vshrl.u32 %v4286, 7
        %v4288 = vsub.s32 %v4285, %v4287
        %v4289 = vrot.slane %v4275, %v4288
        %v4290 = vcombine.low %v4225, %v4241
        %v4291 = vcombine.high %v4225, %v4241
        %v4293 = vunpack.c.l.s4 1934713408
        %v4294 = vunpack.c.0.s8 %v4293
        %v4295 = vlaneseq
        %v4296 = vshrl.u32 %v4295, 7
        %v4297 = vsub.s32 %v4294, %v4296
        %v4298 = vrot.slane %v4290, %v4297
        %v4300 = vunpack.c.l.s4 1934713408
        %v4301 = vunpack.c.0.s8 %v4300
        %v4302 = vlaneseq
        %v4303 = vshrl.u32 %v4302, 7
        %v4304 = vsub.s32 %v4301, %v4303
        %v4305 = vrot.slane %v4291, %v4304
        %v4306 = vcombine.low %v4250, %v4266
        %v4307 = vcombine.high %v4250, %v4266
        %v4309 = vunpack.c.l.s4 1934713408
        %v4310 = vunpack.c.0.s8 %v4309
        %v4311 = vlaneseq
        %v4312 = vshrl.u32 %v4311, 7
        %v4313 = vsub.s32 %v4310, %v4312
        %v4314 = vrot.slane %v4306, %v4313
        %v4316 = vunpack.c.l.s4 1934713408
        %v4317 = vunpack.c.0.s8 %v4316
        %v4318 = vlaneseq
        %v4319 = vshrl.u32 %v4318, 7
        %v4320 = vsub.s32 %v4317, %v4319
        %v4321 = vrot.slane %v4307, %v4320
        %v4322 = vcombine.low %v4257, %v4273
        %v4323 = vcombine.high %v4257, %v4273
        %v4325 = vunpack.c.l.s4 1934713408
        %v4326 = vunpack.c.0.s8 %v4325
        %v4327 = vlaneseq
        %v4328 = vshrl.u32 %v4327, 7
        %v4329 = vsub.s32 %v4326, %v4328
        %v4330 = vrot.slane %v4322, %v4329
        %v4332 = vunpack.c.l.s4 1934713408
        %v4333 = vunpack.c.0.s8 %v4332
        %v4334 = vlaneseq
        %v4335 = vshrl.u32 %v4334, 7
        %v4336 = vsub.s32 %v4333, %v4335
        %v4337 = vrot.slane %v4323, %v4336
        %v4338 = vcombine.low %v4282, %v4314
        %v4339 = vcombine.high %v4282, %v4314
        %v4340 = vcombine.low %v4289, %v4321
        %v4341 = vcombine.high %v4289, %v4321
        %v4342 = vcombine.low %v4298, %v4330
        %v4343 = vcombine.high %v4298, %v4330
        %v4344 = vcombine.low %v4305, %v4337
        %v4345 = vcombine.high %v4305, %v4337
        %v4346 = vcombine.low %v4202, %v4204
        %v4347 = vcombine.high %v4202, %v4204
        %v4349 = vunpack.c.l.s4 1983009808
        %v4350 = vunpack.c.0.s8 %v4349
        %v4351 = vlaneseq
        %v4352 = vshrl.u32 %v4351, 7
        %v4353 = vsub.s32 %v4350, %v4352
        %v4354 = vrot.slane %v4346, %v4353
        %v4356 = vunpack.c.l.s4 1983009808
        %v4357 = vunpack.c.0.s8 %v4356
        %v4358 = vlaneseq
        %v4359 = vshrl.u32 %v4358, 7
        %v4360 = vsub.s32 %v4357, %v4359
        %v4361 = vrot.slane %v4347, %v4360
        %v4362 = vcombine.low %v4203, %v4205
        %v4363 = vcombine.high %v4203, %v4205
        %v4365 = vunpack.c.l.s4 1983009808
        %v4366 = vunpack.c.0.s8 %v4365
        %v4367 = vlaneseq
        %v4368 = vshrl.u32 %v4367, 7
        %v4369 = vsub.s32 %v4366, %v4368
        %v4370 = vrot.slane %v4362, %v4369
        %v4372 = vunpack.c.l.s4 1983009808
        %v4373 = vunpack.c.0.s8 %v4372
        %v4374 = vlaneseq
        %v4375 = vshrl.u32 %v4374, 7
        %v4376 = vsub.s32 %v4373, %v4375
        %v4377 = vrot.slane %v4363, %v4376
        %v4378 = vcombine.low %v4206, %v4208
        %v4379 = vcombine.high %v4206, %v4208
        %v4381 = vunpack.c.l.s4 1983009808
        %v4382 = vunpack.c.0.s8 %v4381
        %v4383 = vlaneseq
        %v4384 = vshrl.u32 %v4383, 7
        %v4385 = vsub.s32 %v4382, %v4384
        %v4386 = vrot.slane %v4378, %v4385
        %v4388 = vunpack.c.l.s4 1983009808
        %v4389 = vunpack.c.0.s8 %v4388
        %v4390 = vlaneseq
        %v4391 = vshrl.u32 %v4390, 7
        %v4392 = vsub.s32 %v4389, %v4391
        %v4393 = vrot.slane %v4379, %v4392
        %v4394 = vcombine.low %v4207, %v4209
        %v4395 = vcombine.high %v4207, %v4209
        %v4397 = vunpack.c.l.s4 1983009808
        %v4398 = vunpack.c.0.s8 %v4397
        %v4399 = vlaneseq
        %v4400 = vshrl.u32 %v4399, 7
        %v4401 = vsub.s32 %v4398, %v4400
        %v4402 = vrot.slane %v4394, %v4401
        %v4404 = vunpack.c.l.s4 1983009808
        %v4405 = vunpack.c.0.s8 %v4404
        %v4406 = vlaneseq
        %v4407 = vshrl.u32 %v4406, 7
        %v4408 = vsub.s32 %v4405, %v4407
        %v4409 = vrot.slane %v4395, %v4408
        %v4410 = vcombine.low %v4354, %v4370
        %v4411 = vcombine.high %v4354, %v4370
        %v4413 = vunpack.c.l.s4 1934713408
        %v4414 = vunpack.c.0.s8 %v4413
        %v4415 = vlaneseq
        %v4416 = vshrl.u32 %v4415, 7
        %v4417 = vsub.s32 %v4414, %v4416
        %v4418 = vrot.slane %v4410, %v4417
        %v4420 = vunpack.c.l.s4 1934713408
        %v4421 = vunpack.c.0.s8 %v4420
        %v4422 = vlaneseq
        %v4423 = vshrl.u32 %v4422, 7
        %v4424 = vsub.s32 %v4421, %v4423
        %v4425 = vrot.slane %v4411, %v4424
        %v4426 = vcombine.low %v4361, %v4377
        %v4427 = vcombine.high %v4361, %v4377
        %v4429 = vunpack.c.l.s4 1934713408
        %v4430 = vunpack.c.0.s8 %v4429
        %v4431 = vlaneseq
        %v4432 = vshrl.u32 %v4431, 7
        %v4433 = vsub.s32 %v4430, %v4432
        %v4434 = vrot.slane %v4426, %v4433
        %v4436 = vunpack.c.l.s4 1934713408
        %v4437 = vunpack.c.0.s8 %v4436
        %v4438 = vlaneseq
        %v4439 = vshrl.u32 %v4438, 7
        %v4440 = vsub.s32 %v4437, %v4439
        %v4441 = vrot.slane %v4427, %v4440
        %v4442 = vcombine.low %v4386, %v4402
        %v4443 = vcombine.high %v4386, %v4402
        %v4445 = vunpack.c.l.s4 1934713408
        %v4446 = vunpack.c.0.s8 %v4445
        %v4447 = vlaneseq
        %v4448 = vshrl.u32 %v4447, 7
        %v4449 = vsub.s32 %v4446, %v4448
        %v4450 = vrot.slane %v4442, %v4449
        %v4452 = vunpack.c.l.s4 1934713408
        %v4453 = vunpack.c.0.s8 %v4452
        %v4454 = vlaneseq
        %v4455 = vshrl.u32 %v4454, 7
        %v4456 = vsub.s32 %v4453, %v4455
        %v4457 = vrot.slane %v4443, %v4456
        %v4458 = vcombine.low %v4393, %v4409
        %v4459 = vcombine.high %v4393, %v4409
        %v4461 = vunpack.c.l.s4 1934713408
        %v4462 = vunpack.c.0.s8 %v4461
        %v4463 = vlaneseq
        %v4464 = vshrl.u32 %v4463, 7
        %v4465 = vsub.s32 %v4462, %v4464
        %v4466 = vrot.slane %v4458, %v4465
        %v4468 = vunpack.c.l.s4 1934713408
        %v4469 = vunpack.c.0.s8 %v4468
        %v4470 = vlaneseq
        %v4471 = vshrl.u32 %v4470, 7
        %v4472 = vsub.s32 %v4469, %v4471
        %v4473 = vrot.slane %v4459, %v4472
        %v4474 = vcombine.low %v4418, %v4450
        %v4475 = vcombine.high %v4418, %v4450
        %v4476 = vcombine.low %v4425, %v4457
        %v4477 = vcombine.high %v4425, %v4457
        %v4478 = vcombine.low %v4434, %v4466
        %v4479 = vcombine.high %v4434, %v4466
        %v4480 = vcombine.low %v4441, %v4473
        %v4481 = vcombine.high %v4441, %v4473
        %v4482 = vcombine.low %v4338, %v4340
        %v4483 = vcombine.high %v4338, %v4340
        %v4485 = vunpack.c.l.s4 1983009808
        %v4486 = vunpack.c.0.s8 %v4485
        %v4487 = vlaneseq
        %v4488 = vshrl.u32 %v4487, 7
        %v4489 = vsub.s32 %v4486, %v4488
        %v4490 = vrot.slane %v4482, %v4489
        %v4492 = vunpack.c.l.s4 1983009808
        %v4493 = vunpack.c.0.s8 %v4492
        %v4494 = vlaneseq
        %v4495 = vshrl.u32 %v4494, 7
        %v4496 = vsub.s32 %v4493, %v4495
        %v4497 = vrot.slane %v4483, %v4496
        %v4498 = vcombine.low %v4339, %v4341
        %v4499 = vcombine.high %v4339, %v4341
        %v4501 = vunpack.c.l.s4 1983009808
        %v4502 = vunpack.c.0.s8 %v4501
        %v4503 = vlaneseq
        %v4504 = vshrl.u32 %v4503, 7
        %v4505 = vsub.s32 %v4502, %v4504
        %v4506 = vrot.slane %v4498, %v4505
        %v4508 = vunpack.c.l.s4 1983009808
        %v4509 = vunpack.c.0.s8 %v4508
        %v4510 = vlaneseq
        %v4511 = vshrl.u32 %v4510, 7
        %v4512 = vsub.s32 %v4509, %v4511
        %v4513 = vrot.slane %v4499, %v4512
        %v4514 = vcombine.low %v4342, %v4344
        %v4515 = vcombine.high %v4342, %v4344
        %v4517 = vunpack.c.l.s4 1983009808
        %v4518 = vunpack.c.0.s8 %v4517
        %v4519 = vlaneseq
        %v4520 = vshrl.u32 %v4519, 7
        %v4521 = vsub.s32 %v4518, %v4520
        %v4522 = vrot.slane %v4514, %v4521
        %v4524 = vunpack.c.l.s4 1983009808
        %v4525 = vunpack.c.0.s8 %v4524
        %v4526 = vlaneseq
        %v4527 = vshrl.u32 %v4526, 7
        %v4528 = vsub.s32 %v4525, %v4527
        %v4529 = vrot.slane %v4515, %v4528
        %v4530 = vcombine.low %v4343, %v4345
        %v4531 = vcombine.high %v4343, %v4345
        %v4533 = vunpack.c.l.s4 1983009808
        %v4534 = vunpack.c.0.s8 %v4533
        %v4535 = vlaneseq
        %v4536 = vshrl.u32 %v4535, 7
        %v4537 = vsub.s32 %v4534, %v4536
        %v4538 = vrot.slane %v4530, %v4537
        %v4540 = vunpack.c.l.s4 1983009808
        %v4541 = vunpack.c.0.s8 %v4540
        %v4542 = vlaneseq
        %v4543 = vshrl.u32 %v4542, 7
        %v4544 = vsub.s32 %v4541, %v4543
        %v4545 = vrot.slane %v4531, %v4544
        %v4546 = vcombine.low %v4490, %v4506
        %v4547 = vcombine.high %v4490, %v4506
        %v4549 = vunpack.c.l.s4 1934713408
        %v4550 = vunpack.c.0.s8 %v4549
        %v4551 = vlaneseq
        %v4552 = vshrl.u32 %v4551, 7
        %v4553 = vsub.s32 %v4550, %v4552
        %v4554 = vrot.slane %v4546, %v4553
        %v4556 = vunpack.c.l.s4 1934713408
        %v4557 = vunpack.c.0.s8 %v4556
        %v4558 = vlaneseq
        %v4559 = vshrl.u32 %v4558, 7
        %v4560 = vsub.s32 %v4557, %v4559
        %v4561 = vrot.slane %v4547, %v4560
        %v4562 = vcombine.low %v4497, %v4513
        %v4563 = vcombine.high %v4497, %v4513
        %v4565 = vunpack.c.l.s4 1934713408
        %v4566 = vunpack.c.0.s8 %v4565
        %v4567 = vlaneseq
        %v4568 = vshrl.u32 %v4567, 7
        %v4569 = vsub.s32 %v4566, %v4568
        %v4570 = vrot.slane %v4562, %v4569
        %v4572 = vunpack.c.l.s4 1934713408
        %v4573 = vunpack.c.0.s8 %v4572
        %v4574 = vlaneseq
        %v4575 = vshrl.u32 %v4574, 7
        %v4576 = vsub.s32 %v4573, %v4575
        %v4577 = vrot.slane %v4563, %v4576
        %v4578 = vcombine.low %v4522, %v4538
        %v4579 = vcombine.high %v4522, %v4538
        %v4581 = vunpack.c.l.s4 1934713408
        %v4582 = vunpack.c.0.s8 %v4581
        %v4583 = vlaneseq
        %v4584 = vshrl.u32 %v4583, 7
        %v4585 = vsub.s32 %v4582, %v4584
        %v4586 = vrot.slane %v4578, %v4585
        %v4588 = vunpack.c.l.s4 1934713408
        %v4589 = vunpack.c.0.s8 %v4588
        %v4590 = vlaneseq
        %v4591 = vshrl.u32 %v4590, 7
        %v4592 = vsub.s32 %v4589, %v4591
        %v4593 = vrot.slane %v4579, %v4592
        %v4594 = vcombine.low %v4529, %v4545
        %v4595 = vcombine.high %v4529, %v4545
        %v4597 = vunpack.c.l.s4 1934713408
        %v4598 = vunpack.c.0.s8 %v4597
        %v4599 = vlaneseq
        %v4600 = vshrl.u32 %v4599, 7
        %v4601 = vsub.s32 %v4598, %v4600
        %v4602 = vrot.slane %v4594, %v4601
        %v4604 = vunpack.c.l.s4 1934713408
        %v4605 = vunpack.c.0.s8 %v4604
        %v4606 = vlaneseq
        %v4607 = vshrl.u32 %v4606, 7
        %v4608 = vsub.s32 %v4605, %v4607
        %v4609 = vrot.slane %v4595, %v4608
        %v4610 = vcombine.low %v4554, %v4586
        %v4611 = vcombine.high %v4554, %v4586
        %v4612 = vcombine.low %v4561, %v4593
        %v4613 = vcombine.high %v4561, %v4593
        %v4614 = vcombine.low %v4570, %v4602
        %v4615 = vcombine.high %v4570, %v4602
        %v4616 = vcombine.low %v4577, %v4609
        %v4617 = vcombine.high %v4577, %v4609
        %v4618 = vcombine.low %v4474, %v4476
        %v4619 = vcombine.high %v4474, %v4476
        %v4621 = vunpack.c.l.s4 1983009808
        %v4622 = vunpack.c.0.s8 %v4621
        %v4623 = vlaneseq
        %v4624 = vshrl.u32 %v4623, 7
        %v4625 = vsub.s32 %v4622, %v4624
        %v4626 = vrot.slane %v4618, %v4625
        %v4628 = vunpack.c.l.s4 1983009808
        %v4629 = vunpack.c.0.s8 %v4628
        %v4630 = vlaneseq
        %v4631 = vshrl.u32 %v4630, 7
        %v4632 = vsub.s32 %v4629, %v4631
        %v4633 = vrot.slane %v4619, %v4632
        %v4634 = vcombine.low %v4475, %v4477
        %v4635 = vcombine.high %v4475, %v4477
        %v4637 = vunpack.c.l.s4 1983009808
        %v4638 = vunpack.c.0.s8 %v4637
        %v4639 = vlaneseq
        %v4640 = vshrl.u32 %v4639, 7
        %v4641 = vsub.s32 %v4638, %v4640
        %v4642 = vrot.slane %v4634, %v4641
        %v4644 = vunpack.c.l.s4 1983009808
        %v4645 = vunpack.c.0.s8 %v4644
        %v4646 = vlaneseq
        %v4647 = vshrl.u32 %v4646, 7
        %v4648 = vsub.s32 %v4645, %v4647
        %v4649 = vrot.slane %v4635, %v4648
        %v4650 = vcombine.low %v4478, %v4480
        %v4651 = vcombine.high %v4478, %v4480
        %v4653 = vunpack.c.l.s4 1983009808
        %v4654 = vunpack.c.0.s8 %v4653
        %v4655 = vlaneseq
        %v4656 = vshrl.u32 %v4655, 7
        %v4657 = vsub.s32 %v4654, %v4656
        %v4658 = vrot.slane %v4650, %v4657
        %v4660 = vunpack.c.l.s4 1983009808
        %v4661 = vunpack.c.0.s8 %v4660
        %v4662 = vlaneseq
        %v4663 = vshrl.u32 %v4662, 7
        %v4664 = vsub.s32 %v4661, %v4663
        %v4665 = vrot.slane %v4651, %v4664
        %v4666 = vcombine.low %v4479, %v4481
        %v4667 = vcombine.high %v4479, %v4481
        %v4669 = vunpack.c.l.s4 1983009808
        %v4670 = vunpack.c.0.s8 %v4669
        %v4671 = vlaneseq
        %v4672 = vshrl.u32 %v4671, 7
        %v4673 = vsub.s32 %v4670, %v4672
        %v4674 = vrot.slane %v4666, %v4673
        %v4676 = vunpack.c.l.s4 1983009808
        %v4677 = vunpack.c.0.s8 %v4676
        %v4678 = vlaneseq
        %v4679 = vshrl.u32 %v4678, 7
        %v4680 = vsub.s32 %v4677, %v4679
        %v4681 = vrot.slane %v4667, %v4680
        %v4682 = vcombine.low %v4626, %v4642
        %v4683 = vcombine.high %v4626, %v4642
        %v4685 = vunpack.c.l.s4 1934713408
        %v4686 = vunpack.c.0.s8 %v4685
        %v4687 = vlaneseq
        %v4688 = vshrl.u32 %v4687, 7
        %v4689 = vsub.s32 %v4686, %v4688
        %v4690 = vrot.slane %v4682, %v4689
        %v4692 = vunpack.c.l.s4 1934713408
        %v4693 = vunpack.c.0.s8 %v4692
        %v4694 = vlaneseq
        %v4695 = vshrl.u32 %v4694, 7
        %v4696 = vsub.s32 %v4693, %v4695
        %v4697 = vrot.slane %v4683, %v4696
        %v4698 = vcombine.low %v4633, %v4649
        %v4699 = vcombine.high %v4633, %v4649
        %v4701 = vunpack.c.l.s4 1934713408
        %v4702 = vunpack.c.0.s8 %v4701
        %v4703 = vlaneseq
        %v4704 = vshrl.u32 %v4703, 7
        %v4705 = vsub.s32 %v4702, %v4704
        %v4706 = vrot.slane %v4698, %v4705
        %v4708 = vunpack.c.l.s4 1934713408
        %v4709 = vunpack.c.0.s8 %v4708
        %v4710 = vlaneseq
        %v4711 = vshrl.u32 %v4710, 7
        %v4712 = vsub.s32 %v4709, %v4711
        %v4713 = vrot.slane %v4699, %v4712
        %v4714 = vcombine.low %v4658, %v4674
        %v4715 = vcombine.high %v4658, %v4674
        %v4717 = vunpack.c.l.s4 1934713408
        %v4718 = vunpack.c.0.s8 %v4717
        %v4719 = vlaneseq
        %v4720 = vshrl.u32 %v4719, 7
        %v4721 = vsub.s32 %v4718, %v4720
        %v4722 = vrot.slane %v4714, %v4721
        %v4724 = vunpack.c.l.s4 1934713408
        %v4725 = vunpack.c.0.s8 %v4724
        %v4726 = vlaneseq
        %v4727 = vshrl.u32 %v4726, 7
        %v4728 = vsub.s32 %v4725, %v4727
        %v4729 = vrot.slane %v4715, %v4728
        %v4730 = vcombine.low %v4665, %v4681
        %v4731 = vcombine.high %v4665, %v4681
        %v4733 = vunpack.c.l.s4 1934713408
        %v4734 = vunpack.c.0.s8 %v4733
        %v4735 = vlaneseq
        %v4736 = vshrl.u32 %v4735, 7
        %v4737 = vsub.s32 %v4734, %v4736
        %v4738 = vrot.slane %v4730, %v4737
        %v4740 = vunpack.c.l.s4 1934713408
        %v4741 = vunpack.c.0.s8 %v4740
        %v4742 = vlaneseq
        %v4743 = vshrl.u32 %v4742, 7
        %v4744 = vsub.s32 %v4741, %v4743
        %v4745 = vrot.slane %v4731, %v4744
        %v4746 = vcombine.low %v4690, %v4722
        %v4747 = vcombine.high %v4690, %v4722
        %v4748 = vcombine.low %v4697, %v4729
        %v4749 = vcombine.high %v4697, %v4729
        %v4750 = vcombine.low %v4706, %v4738
        %v4751 = vcombine.high %v4706, %v4738
        %v4752 = vcombine.low %v4713, %v4745
        %v4753 = vcombine.high %v4713, %v4745
        %4755 = vrot.lane.b32.xlu0 %v4611, 16
        %v4756 = vpop.permute.xlu0 %4755
        %4759 = vrot.lane.b32.xlu0 %v4612, 32
        %v4760 = vpop.permute.xlu0 %4759
        %4763 = vrot.lane.b32.xlu0 %v4613, 48
        %v4764 = vpop.permute.xlu0 %4763
        %4767 = vrot.lane.b32.xlu0 %v4614, 64
        %v4768 = vpop.permute.xlu0 %4767
        %4771 = vrot.lane.b32.xlu0 %v4615, 80
        %v4772 = vpop.permute.xlu0 %4771
        %4775 = vrot.lane.b32.xlu0 %v4616, 96
        %v4776 = vpop.permute.xlu0 %4775
        %4779 = vrot.lane.b32.xlu0 %v4617, 112
        %v4780 = vpop.permute.xlu0 %4779
        %4783 = vrot.lane.b32.xlu0 %v4747, 16
        %v4784 = vpop.permute.xlu0 %4783
        %4787 = vrot.lane.b32.xlu0 %v4748, 32
        %v4788 = vpop.permute.xlu0 %4787
        %4791 = vrot.lane.b32.xlu0 %v4749, 48
        %v4792 = vpop.permute.xlu0 %4791
        %4795 = vrot.lane.b32.xlu0 %v4750, 64
        %v4796 = vpop.permute.xlu0 %4795
        %4799 = vrot.lane.b32.xlu0 %v4751, 80
        %v4800 = vpop.permute.xlu0 %4799
        %4803 = vrot.lane.b32.xlu0 %v4752, 96
        %v4804 = vpop.permute.xlu0 %4803
        %4807 = vrot.lane.b32.xlu0 %v4753, 112
        %v4808 = vpop.permute.xlu0 %4807
        %v4810 = vsel %vm1839, %v4610, %v4756
        %v4811 = vsel %vm702, %v4810, %v4760
        %vm4812 = vcmask 392192
        %v4813 = vsel %vm4812, %v4811, %v4764
        %v4814 = vsel %vm3487, %v4813, %v4768
        %vm4815 = vcmask 654336
        %v4816 = vsel %vm4815, %v4814, %v4772
        %vm4817 = vcmask 785408
        %v4818 = vsel %vm4817, %v4816, %v4776
        %vm4819 = vcmask 916480
        %v4820 = vsel %vm4819, %v4818, %v4780
        %v4821 = vsel %vm1839, %v4746, %v4784
        %v4822 = vsel %vm702, %v4821, %v4788
        %v4823 = vsel %vm4812, %v4822, %v4792
        %v4824 = vsel %vm3487, %v4823, %v4796
        %v4825 = vsel %vm4815, %v4824, %v4800
        %v4826 = vsel %vm4817, %v4825, %v4804
        %v4827 = vsel %vm4819, %v4826, %v4808
        %v4828 = vpack.c.bf16 %v4820, %v4820
        %v4829 = vpack.c.bf16 %v4827, %v4827
        %v4830 = vpack.c.bf16 %v3777, %v3774
        %v4832 = vsel %vm3378, %v4830, 0
        %v4835 = vsel %vm3382, %v4828, 0
        %v4838 = vsel %vm3382, %v4829, 0
        %4840 = vmatprep.subr.bf16.mxu0 0
        %4841 = vmatpush1.bf16.msra.mxu0 0
        %4842 = vmatprep.subr.bf16.mxu0 0
        %4843 = vmatpush1.bf16.msra.mxu0 0
        %4844 = vmatprep.subr.bf16.mxu0 0
        %4845 = vmatpush1.bf16.msra.mxu0 0
        %4846 = vmatprep.subr.bf16.mxu0 0
        %4847 = vmatpush1.bf16.msra.mxu0 0
        %4848 = vmatprep.subr.bf16.mxu0 0
        %4849 = vmatpush1.bf16.msra.mxu0 0
        %4850 = vmatprep.subr.bf16.mxu0 0
        %4851 = vmatpush1.bf16.msra.mxu0 0
        %4852 = vmatprep.subr.bf16.mxu0 0
        %4853 = vmatpush1.bf16.msra.mxu0 0
        %4854 = vmatprep.subr.bf16.mxu0 %v4838
        %4855 = vmatpush1.bf16.msra.mxu0 %v4835
        %4856 = vmatprep.subr.bf16.mxu0 0
        %4857 = vmatpush2.bf16.msra.mxu0 0
        %4858 = vmatprep.subr.bf16.mxu0 0
        %4859 = vmatpush2.bf16.msra.mxu0 0
        %4860 = vmatprep.subr.bf16.mxu0 0
        %4861 = vmatpush2.bf16.msra.mxu0 0
        %4862 = vmatprep.subr.bf16.mxu0 0
        %4863 = vmatpush2.bf16.msra.mxu0 0
        %4864 = vmatprep.subr.bf16.mxu0 0
        %4865 = vmatpush2.bf16.msra.mxu0 0
        %4866 = vmatprep.subr.bf16.mxu0 0
        %4867 = vmatpush2.bf16.msra.mxu0 0
        %4868 = vmatprep.subr.bf16.mxu0 0
        %4869 = vmatpush2.bf16.msra.mxu0 0
        %4870 = vmatprep.subr.bf16.mxu0 0
        %4871 = vmatpush2.bf16.msra.mxu0 0
        %4872 = vmatprep.mubr.bf16.mxu0 0
        %4873 = vmatmul.mubr.bf16.gmra.mxu0 %v4832
        %v4874 = vpop.f32.mrf.mxu0
        %v4875 = vadd.f32 0.0, %v4874
        %v4876 = vpop.f32.mrf.mxu0
        %v4877 = vadd.f32 0.0, %v4876
        %v4878 = vpop.f32.mrf.mxu0
        %v4879 = vadd.f32 0.0, %v4878
        %v4880 = vpop.f32.mrf.mxu0
        %v4881 = vadd.f32 0.0, %v4880
        %4882 = vdwg.mxu0
        %v4883 = vld [vmem:[%s614] sm:$0xff]
        %v4884 = vld [vmem:[%s614 + $0x8] sm:$0xff]
        %v4885 = vld [vmem:[%s614 + $0x10] sm:$0xff]
        %v4886 = vld [vmem:[%s614 + $0x18] sm:$0xff]
        %v4887 = vld [vmem:[%s614 + $0x20] sm:$0xff]
        %v4888 = vld [vmem:[%s614 + $0x28] sm:$0xff]
        %v4889 = vld [vmem:[%s614 + $0x30] sm:$0xff]
        %v4890 = vld [vmem:[%s614 + $0x38] sm:$0xff]
        %v4891 = vld [vmem:[%s614 + $0x40] sm:$0xff]
        %v4892 = vld [vmem:[%s614 + $0x48] sm:$0xff]
        %v4893 = vld [vmem:[%s614 + $0x50] sm:$0xff]
        %v4894 = vld [vmem:[%s614 + $0x58] sm:$0xff]
        %v4895 = vld [vmem:[%s614 + $0x60] sm:$0xff]
        %v4896 = vld [vmem:[%s614 + $0x68] sm:$0xff]
        %v4897 = vld [vmem:[%s614 + $0x70] sm:$0xff]
        %v4898 = vld [vmem:[%s614 + $0x78] sm:$0xff]
        %v4899 = vld [vmem:[%s614 + $0x80] sm:$0xff]
        %v4900 = vld [vmem:[%s614 + $0x88] sm:$0xff]
        %v4901 = vld [vmem:[%s614 + $0x90] sm:$0xff]
        %v4902 = vld [vmem:[%s614 + $0x98] sm:$0xff]
        %v4903 = vld [vmem:[%s614 + $0xa0] sm:$0xff]
        %v4904 = vld [vmem:[%s614 + $0xa8] sm:$0xff]
        %v4905 = vld [vmem:[%s614 + $0xb0] sm:$0xff]
        %v4906 = vld [vmem:[%s614 + $0xb8] sm:$0xff]
        %v4907 = vld [vmem:[%s614 + $0xc0] sm:$0xff]
        %v4908 = vld [vmem:[%s614 + $0xc8] sm:$0xff]
        %v4909 = vld [vmem:[%s614 + $0xd0] sm:$0xff]
        %v4910 = vld [vmem:[%s614 + $0xd8] sm:$0xff]
        %v4911 = vld [vmem:[%s614 + $0xe0] sm:$0xff]
        %v4912 = vld [vmem:[%s614 + $0xe8] sm:$0xff]
        %v4913 = vld [vmem:[%s614 + $0xf0] sm:$0xff]
        %v4914 = vld [vmem:[%s614 + $0xf8] sm:$0xff]
        %4917 = vrot.lane.b32.xlu0 %v4875, 112
        %v4918 = vpop.permute.xlu0 %4917
        %4919 = vrot.lane.b32.xlu0 %v4879, 112
        %v4920 = vpop.permute.xlu0 %4919
        %4923 = vrot.lane.b32.xlu0 %v4875, 96
        %v4924 = vpop.permute.xlu0 %4923
        %4925 = vrot.lane.b32.xlu0 %v4879, 96
        %v4926 = vpop.permute.xlu0 %4925
        %4929 = vrot.lane.b32.xlu0 %v4875, 80
        %v4930 = vpop.permute.xlu0 %4929
        %4931 = vrot.lane.b32.xlu0 %v4879, 80
        %v4932 = vpop.permute.xlu0 %4931
        %4935 = vrot.lane.b32.xlu0 %v4875, 64
        %v4936 = vpop.permute.xlu0 %4935
        %4937 = vrot.lane.b32.xlu0 %v4879, 64
        %v4938 = vpop.permute.xlu0 %4937
        %4941 = vrot.lane.b32.xlu0 %v4875, 48
        %v4942 = vpop.permute.xlu0 %4941
        %4943 = vrot.lane.b32.xlu0 %v4879, 48
        %v4944 = vpop.permute.xlu0 %4943
        %4947 = vrot.lane.b32.xlu0 %v4875, 32
        %v4948 = vpop.permute.xlu0 %4947
        %4949 = vrot.lane.b32.xlu0 %v4879, 32
        %v4950 = vpop.permute.xlu0 %4949
        %4953 = vrot.lane.b32.xlu0 %v4875, 16
        %v4954 = vpop.permute.xlu0 %4953
        %4955 = vrot.lane.b32.xlu0 %v4879, 16
        %v4956 = vpop.permute.xlu0 %4955
        %4961 = vrot.lane.b32.xlu0 %v4877, 112
        %v4962 = vpop.permute.xlu0 %4961
        %4963 = vrot.lane.b32.xlu0 %v4881, 112
        %v4964 = vpop.permute.xlu0 %4963
        %4967 = vrot.lane.b32.xlu0 %v4877, 96
        %v4968 = vpop.permute.xlu0 %4967
        %4969 = vrot.lane.b32.xlu0 %v4881, 96
        %v4970 = vpop.permute.xlu0 %4969
        %4973 = vrot.lane.b32.xlu0 %v4877, 80
        %v4974 = vpop.permute.xlu0 %4973
        %4975 = vrot.lane.b32.xlu0 %v4881, 80
        %v4976 = vpop.permute.xlu0 %4975
        %4979 = vrot.lane.b32.xlu0 %v4877, 64
        %v4980 = vpop.permute.xlu0 %4979
        %4981 = vrot.lane.b32.xlu0 %v4881, 64
        %v4982 = vpop.permute.xlu0 %4981
        %4985 = vrot.lane.b32.xlu0 %v4877, 48
        %v4986 = vpop.permute.xlu0 %4985
        %4987 = vrot.lane.b32.xlu0 %v4881, 48
        %v4988 = vpop.permute.xlu0 %4987
        %4991 = vrot.lane.b32.xlu0 %v4877, 32
        %v4992 = vpop.permute.xlu0 %4991
        %4993 = vrot.lane.b32.xlu0 %v4881, 32
        %v4994 = vpop.permute.xlu0 %4993
        %4997 = vrot.lane.b32.xlu0 %v4877, 16
        %v4998 = vpop.permute.xlu0 %4997
        %4999 = vrot.lane.b32.xlu0 %v4881, 16
        %v5000 = vpop.permute.xlu0 %4999
        %v5003 = vcombine.low %v4875, %v4924
        %v5004 = vcombine.high %v4875, %v4924
        %v5006 = vunpack.c.l.s4 1983009808
        %v5007 = vunpack.c.0.s8 %v5006
        %v5008 = vlaneseq
        %v5009 = vshrl.u32 %v5008, 7
        %v5010 = vsub.s32 %v5007, %v5009
        %v5011 = vrot.slane %v5003, %v5010
        %v5013 = vunpack.c.l.s4 1983009808
        %v5014 = vunpack.c.0.s8 %v5013
        %v5015 = vlaneseq
        %v5016 = vshrl.u32 %v5015, 7
        %v5017 = vsub.s32 %v5014, %v5016
        %v5018 = vrot.slane %v5004, %v5017
        %v5019 = vcombine.low %v4918, %v4930
        %v5020 = vcombine.high %v4918, %v4930
        %v5022 = vunpack.c.l.s4 1983009808
        %v5023 = vunpack.c.0.s8 %v5022
        %v5024 = vlaneseq
        %v5025 = vshrl.u32 %v5024, 7
        %v5026 = vsub.s32 %v5023, %v5025
        %v5027 = vrot.slane %v5019, %v5026
        %v5029 = vunpack.c.l.s4 1983009808
        %v5030 = vunpack.c.0.s8 %v5029
        %v5031 = vlaneseq
        %v5032 = vshrl.u32 %v5031, 7
        %v5033 = vsub.s32 %v5030, %v5032
        %v5034 = vrot.slane %v5020, %v5033
        %v5035 = vcombine.low %v4936, %v4948
        %v5036 = vcombine.high %v4936, %v4948
        %v5038 = vunpack.c.l.s4 1983009808
        %v5039 = vunpack.c.0.s8 %v5038
        %v5040 = vlaneseq
        %v5041 = vshrl.u32 %v5040, 7
        %v5042 = vsub.s32 %v5039, %v5041
        %v5043 = vrot.slane %v5035, %v5042
        %v5045 = vunpack.c.l.s4 1983009808
        %v5046 = vunpack.c.0.s8 %v5045
        %v5047 = vlaneseq
        %v5048 = vshrl.u32 %v5047, 7
        %v5049 = vsub.s32 %v5046, %v5048
        %v5050 = vrot.slane %v5036, %v5049
        %v5051 = vcombine.low %v4942, %v4954
        %v5052 = vcombine.high %v4942, %v4954
        %v5054 = vunpack.c.l.s4 1983009808
        %v5055 = vunpack.c.0.s8 %v5054
        %v5056 = vlaneseq
        %v5057 = vshrl.u32 %v5056, 7
        %v5058 = vsub.s32 %v5055, %v5057
        %v5059 = vrot.slane %v5051, %v5058
        %v5061 = vunpack.c.l.s4 1983009808
        %v5062 = vunpack.c.0.s8 %v5061
        %v5063 = vlaneseq
        %v5064 = vshrl.u32 %v5063, 7
        %v5065 = vsub.s32 %v5062, %v5064
        %v5066 = vrot.slane %v5052, %v5065
        %v5067 = vcombine.low %v5011, %v5027
        %v5068 = vcombine.high %v5011, %v5027
        %v5070 = vunpack.c.l.s4 1934713408
        %v5071 = vunpack.c.0.s8 %v5070
        %v5072 = vlaneseq
        %v5073 = vshrl.u32 %v5072, 7
        %v5074 = vsub.s32 %v5071, %v5073
        %v5075 = vrot.slane %v5067, %v5074
        %v5077 = vunpack.c.l.s4 1934713408
        %v5078 = vunpack.c.0.s8 %v5077
        %v5079 = vlaneseq
        %v5080 = vshrl.u32 %v5079, 7
        %v5081 = vsub.s32 %v5078, %v5080
        %v5082 = vrot.slane %v5068, %v5081
        %v5083 = vcombine.low %v5018, %v5034
        %v5084 = vcombine.high %v5018, %v5034
        %v5086 = vunpack.c.l.s4 1934713408
        %v5087 = vunpack.c.0.s8 %v5086
        %v5088 = vlaneseq
        %v5089 = vshrl.u32 %v5088, 7
        %v5090 = vsub.s32 %v5087, %v5089
        %v5091 = vrot.slane %v5083, %v5090
        %v5093 = vunpack.c.l.s4 1934713408
        %v5094 = vunpack.c.0.s8 %v5093
        %v5095 = vlaneseq
        %v5096 = vshrl.u32 %v5095, 7
        %v5097 = vsub.s32 %v5094, %v5096
        %v5098 = vrot.slane %v5084, %v5097
        %v5099 = vcombine.low %v5043, %v5059
        %v5100 = vcombine.high %v5043, %v5059
        %v5102 = vunpack.c.l.s4 1934713408
        %v5103 = vunpack.c.0.s8 %v5102
        %v5104 = vlaneseq
        %v5105 = vshrl.u32 %v5104, 7
        %v5106 = vsub.s32 %v5103, %v5105
        %v5107 = vrot.slane %v5099, %v5106
        %v5109 = vunpack.c.l.s4 1934713408
        %v5110 = vunpack.c.0.s8 %v5109
        %v5111 = vlaneseq
        %v5112 = vshrl.u32 %v5111, 7
        %v5113 = vsub.s32 %v5110, %v5112
        %v5114 = vrot.slane %v5100, %v5113
        %v5115 = vcombine.low %v5050, %v5066
        %v5116 = vcombine.high %v5050, %v5066
        %v5118 = vunpack.c.l.s4 1934713408
        %v5119 = vunpack.c.0.s8 %v5118
        %v5120 = vlaneseq
        %v5121 = vshrl.u32 %v5120, 7
        %v5122 = vsub.s32 %v5119, %v5121
        %v5123 = vrot.slane %v5115, %v5122
        %v5125 = vunpack.c.l.s4 1934713408
        %v5126 = vunpack.c.0.s8 %v5125
        %v5127 = vlaneseq
        %v5128 = vshrl.u32 %v5127, 7
        %v5129 = vsub.s32 %v5126, %v5128
        %v5130 = vrot.slane %v5116, %v5129
        %v5131 = vcombine.low %v5075, %v5107
        %v5132 = vcombine.high %v5075, %v5107
        %v5133 = vcombine.low %v5082, %v5114
        %v5134 = vcombine.high %v5082, %v5114
        %v5135 = vcombine.low %v5091, %v5123
        %v5136 = vcombine.high %v5091, %v5123
        %v5137 = vcombine.low %v5098, %v5130
        %v5138 = vcombine.high %v5098, %v5130
        %v5139 = vcombine.low %v4877, %v4968
        %v5140 = vcombine.high %v4877, %v4968
        %v5142 = vunpack.c.l.s4 1983009808
        %v5143 = vunpack.c.0.s8 %v5142
        %v5144 = vlaneseq
        %v5145 = vshrl.u32 %v5144, 7
        %v5146 = vsub.s32 %v5143, %v5145
        %v5147 = vrot.slane %v5139, %v5146
        %v5149 = vunpack.c.l.s4 1983009808
        %v5150 = vunpack.c.0.s8 %v5149
        %v5151 = vlaneseq
        %v5152 = vshrl.u32 %v5151, 7
        %v5153 = vsub.s32 %v5150, %v5152
        %v5154 = vrot.slane %v5140, %v5153
        %v5155 = vcombine.low %v4962, %v4974
        %v5156 = vcombine.high %v4962, %v4974
        %v5158 = vunpack.c.l.s4 1983009808
        %v5159 = vunpack.c.0.s8 %v5158
        %v5160 = vlaneseq
        %v5161 = vshrl.u32 %v5160, 7
        %v5162 = vsub.s32 %v5159, %v5161
        %v5163 = vrot.slane %v5155, %v5162
        %v5165 = vunpack.c.l.s4 1983009808
        %v5166 = vunpack.c.0.s8 %v5165
        %v5167 = vlaneseq
        %v5168 = vshrl.u32 %v5167, 7
        %v5169 = vsub.s32 %v5166, %v5168
        %v5170 = vrot.slane %v5156, %v5169
        %v5171 = vcombine.low %v4980, %v4992
        %v5172 = vcombine.high %v4980, %v4992
        %v5174 = vunpack.c.l.s4 1983009808
        %v5175 = vunpack.c.0.s8 %v5174
        %v5176 = vlaneseq
        %v5177 = vshrl.u32 %v5176, 7
        %v5178 = vsub.s32 %v5175, %v5177
        %v5179 = vrot.slane %v5171, %v5178
        %v5181 = vunpack.c.l.s4 1983009808
        %v5182 = vunpack.c.0.s8 %v5181
        %v5183 = vlaneseq
        %v5184 = vshrl.u32 %v5183, 7
        %v5185 = vsub.s32 %v5182, %v5184
        %v5186 = vrot.slane %v5172, %v5185
        %v5187 = vcombine.low %v4986, %v4998
        %v5188 = vcombine.high %v4986, %v4998
        %v5190 = vunpack.c.l.s4 1983009808
        %v5191 = vunpack.c.0.s8 %v5190
        %v5192 = vlaneseq
        %v5193 = vshrl.u32 %v5192, 7
        %v5194 = vsub.s32 %v5191, %v5193
        %v5195 = vrot.slane %v5187, %v5194
        %v5197 = vunpack.c.l.s4 1983009808
        %v5198 = vunpack.c.0.s8 %v5197
        %v5199 = vlaneseq
        %v5200 = vshrl.u32 %v5199, 7
        %v5201 = vsub.s32 %v5198, %v5200
        %v5202 = vrot.slane %v5188, %v5201
        %v5203 = vcombine.low %v5147, %v5163
        %v5204 = vcombine.high %v5147, %v5163
        %v5206 = vunpack.c.l.s4 1934713408
        %v5207 = vunpack.c.0.s8 %v5206
        %v5208 = vlaneseq
        %v5209 = vshrl.u32 %v5208, 7
        %v5210 = vsub.s32 %v5207, %v5209
        %v5211 = vrot.slane %v5203, %v5210
        %v5213 = vunpack.c.l.s4 1934713408
        %v5214 = vunpack.c.0.s8 %v5213
        %v5215 = vlaneseq
        %v5216 = vshrl.u32 %v5215, 7
        %v5217 = vsub.s32 %v5214, %v5216
        %v5218 = vrot.slane %v5204, %v5217
        %v5219 = vcombine.low %v5154, %v5170
        %v5220 = vcombine.high %v5154, %v5170
        %v5222 = vunpack.c.l.s4 1934713408
        %v5223 = vunpack.c.0.s8 %v5222
        %v5224 = vlaneseq
        %v5225 = vshrl.u32 %v5224, 7
        %v5226 = vsub.s32 %v5223, %v5225
        %v5227 = vrot.slane %v5219, %v5226
        %v5229 = vunpack.c.l.s4 1934713408
        %v5230 = vunpack.c.0.s8 %v5229
        %v5231 = vlaneseq
        %v5232 = vshrl.u32 %v5231, 7
        %v5233 = vsub.s32 %v5230, %v5232
        %v5234 = vrot.slane %v5220, %v5233
        %v5235 = vcombine.low %v5179, %v5195
        %v5236 = vcombine.high %v5179, %v5195
        %v5238 = vunpack.c.l.s4 1934713408
        %v5239 = vunpack.c.0.s8 %v5238
        %v5240 = vlaneseq
        %v5241 = vshrl.u32 %v5240, 7
        %v5242 = vsub.s32 %v5239, %v5241
        %v5243 = vrot.slane %v5235, %v5242
        %v5245 = vunpack.c.l.s4 1934713408
        %v5246 = vunpack.c.0.s8 %v5245
        %v5247 = vlaneseq
        %v5248 = vshrl.u32 %v5247, 7
        %v5249 = vsub.s32 %v5246, %v5248
        %v5250 = vrot.slane %v5236, %v5249
        %v5251 = vcombine.low %v5186, %v5202
        %v5252 = vcombine.high %v5186, %v5202
        %v5254 = vunpack.c.l.s4 1934713408
        %v5255 = vunpack.c.0.s8 %v5254
        %v5256 = vlaneseq
        %v5257 = vshrl.u32 %v5256, 7
        %v5258 = vsub.s32 %v5255, %v5257
        %v5259 = vrot.slane %v5251, %v5258
        %v5261 = vunpack.c.l.s4 1934713408
        %v5262 = vunpack.c.0.s8 %v5261
        %v5263 = vlaneseq
        %v5264 = vshrl.u32 %v5263, 7
        %v5265 = vsub.s32 %v5262, %v5264
        %v5266 = vrot.slane %v5252, %v5265
        %v5267 = vcombine.low %v5211, %v5243
        %v5268 = vcombine.high %v5211, %v5243
        %v5269 = vcombine.low %v5218, %v5250
        %v5270 = vcombine.high %v5218, %v5250
        %v5271 = vcombine.low %v5227, %v5259
        %v5272 = vcombine.high %v5227, %v5259
        %v5273 = vcombine.low %v5234, %v5266
        %v5274 = vcombine.high %v5234, %v5266
        %v5275 = vcombine.low %v4879, %v4926
        %v5276 = vcombine.high %v4879, %v4926
        %v5278 = vunpack.c.l.s4 1983009808
        %v5279 = vunpack.c.0.s8 %v5278
        %v5280 = vlaneseq
        %v5281 = vshrl.u32 %v5280, 7
        %v5282 = vsub.s32 %v5279, %v5281
        %v5283 = vrot.slane %v5275, %v5282
        %v5285 = vunpack.c.l.s4 1983009808
        %v5286 = vunpack.c.0.s8 %v5285
        %v5287 = vlaneseq
        %v5288 = vshrl.u32 %v5287, 7
        %v5289 = vsub.s32 %v5286, %v5288
        %v5290 = vrot.slane %v5276, %v5289
        %v5291 = vcombine.low %v4920, %v4932
        %v5292 = vcombine.high %v4920, %v4932
        %v5294 = vunpack.c.l.s4 1983009808
        %v5295 = vunpack.c.0.s8 %v5294
        %v5296 = vlaneseq
        %v5297 = vshrl.u32 %v5296, 7
        %v5298 = vsub.s32 %v5295, %v5297
        %v5299 = vrot.slane %v5291, %v5298
        %v5301 = vunpack.c.l.s4 1983009808
        %v5302 = vunpack.c.0.s8 %v5301
        %v5303 = vlaneseq
        %v5304 = vshrl.u32 %v5303, 7
        %v5305 = vsub.s32 %v5302, %v5304
        %v5306 = vrot.slane %v5292, %v5305
        %v5307 = vcombine.low %v4938, %v4950
        %v5308 = vcombine.high %v4938, %v4950
        %v5310 = vunpack.c.l.s4 1983009808
        %v5311 = vunpack.c.0.s8 %v5310
        %v5312 = vlaneseq
        %v5313 = vshrl.u32 %v5312, 7
        %v5314 = vsub.s32 %v5311, %v5313
        %v5315 = vrot.slane %v5307, %v5314
        %v5317 = vunpack.c.l.s4 1983009808
        %v5318 = vunpack.c.0.s8 %v5317
        %v5319 = vlaneseq
        %v5320 = vshrl.u32 %v5319, 7
        %v5321 = vsub.s32 %v5318, %v5320
        %v5322 = vrot.slane %v5308, %v5321
        %v5323 = vcombine.low %v4944, %v4956
        %v5324 = vcombine.high %v4944, %v4956
        %v5326 = vunpack.c.l.s4 1983009808
        %v5327 = vunpack.c.0.s8 %v5326
        %v5328 = vlaneseq
        %v5329 = vshrl.u32 %v5328, 7
        %v5330 = vsub.s32 %v5327, %v5329
        %v5331 = vrot.slane %v5323, %v5330
        %v5333 = vunpack.c.l.s4 1983009808
        %v5334 = vunpack.c.0.s8 %v5333
        %v5335 = vlaneseq
        %v5336 = vshrl.u32 %v5335, 7
        %v5337 = vsub.s32 %v5334, %v5336
        %v5338 = vrot.slane %v5324, %v5337
        %v5339 = vcombine.low %v5283, %v5299
        %v5340 = vcombine.high %v5283, %v5299
        %v5342 = vunpack.c.l.s4 1934713408
        %v5343 = vunpack.c.0.s8 %v5342
        %v5344 = vlaneseq
        %v5345 = vshrl.u32 %v5344, 7
        %v5346 = vsub.s32 %v5343, %v5345
        %v5347 = vrot.slane %v5339, %v5346
        %v5349 = vunpack.c.l.s4 1934713408
        %v5350 = vunpack.c.0.s8 %v5349
        %v5351 = vlaneseq
        %v5352 = vshrl.u32 %v5351, 7
        %v5353 = vsub.s32 %v5350, %v5352
        %v5354 = vrot.slane %v5340, %v5353
        %v5355 = vcombine.low %v5290, %v5306
        %v5356 = vcombine.high %v5290, %v5306
        %v5358 = vunpack.c.l.s4 1934713408
        %v5359 = vunpack.c.0.s8 %v5358
        %v5360 = vlaneseq
        %v5361 = vshrl.u32 %v5360, 7
        %v5362 = vsub.s32 %v5359, %v5361
        %v5363 = vrot.slane %v5355, %v5362
        %v5365 = vunpack.c.l.s4 1934713408
        %v5366 = vunpack.c.0.s8 %v5365
        %v5367 = vlaneseq
        %v5368 = vshrl.u32 %v5367, 7
        %v5369 = vsub.s32 %v5366, %v5368
        %v5370 = vrot.slane %v5356, %v5369
        %v5371 = vcombine.low %v5315, %v5331
        %v5372 = vcombine.high %v5315, %v5331
        %v5374 = vunpack.c.l.s4 1934713408
        %v5375 = vunpack.c.0.s8 %v5374
        %v5376 = vlaneseq
        %v5377 = vshrl.u32 %v5376, 7
        %v5378 = vsub.s32 %v5375, %v5377
        %v5379 = vrot.slane %v5371, %v5378
        %v5381 = vunpack.c.l.s4 1934713408
        %v5382 = vunpack.c.0.s8 %v5381
        %v5383 = vlaneseq
        %v5384 = vshrl.u32 %v5383, 7
        %v5385 = vsub.s32 %v5382, %v5384
        %v5386 = vrot.slane %v5372, %v5385
        %v5387 = vcombine.low %v5322, %v5338
        %v5388 = vcombine.high %v5322, %v5338
        %v5390 = vunpack.c.l.s4 1934713408
        %v5391 = vunpack.c.0.s8 %v5390
        %v5392 = vlaneseq
        %v5393 = vshrl.u32 %v5392, 7
        %v5394 = vsub.s32 %v5391, %v5393
        %v5395 = vrot.slane %v5387, %v5394
        %v5397 = vunpack.c.l.s4 1934713408
        %v5398 = vunpack.c.0.s8 %v5397
        %v5399 = vlaneseq
        %v5400 = vshrl.u32 %v5399, 7
        %v5401 = vsub.s32 %v5398, %v5400
        %v5402 = vrot.slane %v5388, %v5401
        %v5403 = vcombine.low %v5347, %v5379
        %v5404 = vcombine.high %v5347, %v5379
        %v5405 = vcombine.low %v5354, %v5386
        %v5406 = vcombine.high %v5354, %v5386
        %v5407 = vcombine.low %v5363, %v5395
        %v5408 = vcombine.high %v5363, %v5395
        %v5409 = vcombine.low %v5370, %v5402
        %v5410 = vcombine.high %v5370, %v5402
        %v5411 = vcombine.low %v4881, %v4970
        %v5412 = vcombine.high %v4881, %v4970
        %v5414 = vunpack.c.l.s4 1983009808
        %v5415 = vunpack.c.0.s8 %v5414
        %v5416 = vlaneseq
        %v5417 = vshrl.u32 %v5416, 7
        %v5418 = vsub.s32 %v5415, %v5417
        %v5419 = vrot.slane %v5411, %v5418
        %v5421 = vunpack.c.l.s4 1983009808
        %v5422 = vunpack.c.0.s8 %v5421
        %v5423 = vlaneseq
        %v5424 = vshrl.u32 %v5423, 7
        %v5425 = vsub.s32 %v5422, %v5424
        %v5426 = vrot.slane %v5412, %v5425
        %v5427 = vcombine.low %v4964, %v4976
        %v5428 = vcombine.high %v4964, %v4976
        %v5430 = vunpack.c.l.s4 1983009808
        %v5431 = vunpack.c.0.s8 %v5430
        %v5432 = vlaneseq
        %v5433 = vshrl.u32 %v5432, 7
        %v5434 = vsub.s32 %v5431, %v5433
        %v5435 = vrot.slane %v5427, %v5434
        %v5437 = vunpack.c.l.s4 1983009808
        %v5438 = vunpack.c.0.s8 %v5437
        %v5439 = vlaneseq
        %v5440 = vshrl.u32 %v5439, 7
        %v5441 = vsub.s32 %v5438, %v5440
        %v5442 = vrot.slane %v5428, %v5441
        %v5443 = vcombine.low %v4982, %v4994
        %v5444 = vcombine.high %v4982, %v4994
        %v5446 = vunpack.c.l.s4 1983009808
        %v5447 = vunpack.c.0.s8 %v5446
        %v5448 = vlaneseq
        %v5449 = vshrl.u32 %v5448, 7
        %v5450 = vsub.s32 %v5447, %v5449
        %v5451 = vrot.slane %v5443, %v5450
        %v5453 = vunpack.c.l.s4 1983009808
        %v5454 = vunpack.c.0.s8 %v5453
        %v5455 = vlaneseq
        %v5456 = vshrl.u32 %v5455, 7
        %v5457 = vsub.s32 %v5454, %v5456
        %v5458 = vrot.slane %v5444, %v5457
        %v5459 = vcombine.low %v4988, %v5000
        %v5460 = vcombine.high %v4988, %v5000
        %v5462 = vunpack.c.l.s4 1983009808
        %v5463 = vunpack.c.0.s8 %v5462
        %v5464 = vlaneseq
        %v5465 = vshrl.u32 %v5464, 7
        %v5466 = vsub.s32 %v5463, %v5465
        %v5467 = vrot.slane %v5459, %v5466
        %v5469 = vunpack.c.l.s4 1983009808
        %v5470 = vunpack.c.0.s8 %v5469
        %v5471 = vlaneseq
        %v5472 = vshrl.u32 %v5471, 7
        %v5473 = vsub.s32 %v5470, %v5472
        %v5474 = vrot.slane %v5460, %v5473
        %v5475 = vcombine.low %v5419, %v5435
        %v5476 = vcombine.high %v5419, %v5435
        %v5478 = vunpack.c.l.s4 1934713408
        %v5479 = vunpack.c.0.s8 %v5478
        %v5480 = vlaneseq
        %v5481 = vshrl.u32 %v5480, 7
        %v5482 = vsub.s32 %v5479, %v5481
        %v5483 = vrot.slane %v5475, %v5482
        %v5485 = vunpack.c.l.s4 1934713408
        %v5486 = vunpack.c.0.s8 %v5485
        %v5487 = vlaneseq
        %v5488 = vshrl.u32 %v5487, 7
        %v5489 = vsub.s32 %v5486, %v5488
        %v5490 = vrot.slane %v5476, %v5489
        %v5491 = vcombine.low %v5426, %v5442
        %v5492 = vcombine.high %v5426, %v5442
        %v5494 = vunpack.c.l.s4 1934713408
        %v5495 = vunpack.c.0.s8 %v5494
        %v5496 = vlaneseq
        %v5497 = vshrl.u32 %v5496, 7
        %v5498 = vsub.s32 %v5495, %v5497
        %v5499 = vrot.slane %v5491, %v5498
        %v5501 = vunpack.c.l.s4 1934713408
        %v5502 = vunpack.c.0.s8 %v5501
        %v5503 = vlaneseq
        %v5504 = vshrl.u32 %v5503, 7
        %v5505 = vsub.s32 %v5502, %v5504
        %v5506 = vrot.slane %v5492, %v5505
        %v5507 = vcombine.low %v5451, %v5467
        %v5508 = vcombine.high %v5451, %v5467
        %v5510 = vunpack.c.l.s4 1934713408
        %v5511 = vunpack.c.0.s8 %v5510
        %v5512 = vlaneseq
        %v5513 = vshrl.u32 %v5512, 7
        %v5514 = vsub.s32 %v5511, %v5513
        %v5515 = vrot.slane %v5507, %v5514
        %v5517 = vunpack.c.l.s4 1934713408
        %v5518 = vunpack.c.0.s8 %v5517
        %v5519 = vlaneseq
        %v5520 = vshrl.u32 %v5519, 7
        %v5521 = vsub.s32 %v5518, %v5520
        %v5522 = vrot.slane %v5508, %v5521
        %v5523 = vcombine.low %v5458, %v5474
        %v5524 = vcombine.high %v5458, %v5474
        %v5526 = vunpack.c.l.s4 1934713408
        %v5527 = vunpack.c.0.s8 %v5526
        %v5528 = vlaneseq
        %v5529 = vshrl.u32 %v5528, 7
        %v5530 = vsub.s32 %v5527, %v5529
        %v5531 = vrot.slane %v5523, %v5530
        %v5533 = vunpack.c.l.s4 1934713408
        %v5534 = vunpack.c.0.s8 %v5533
        %v5535 = vlaneseq
        %v5536 = vshrl.u32 %v5535, 7
        %v5537 = vsub.s32 %v5534, %v5536
        %v5538 = vrot.slane %v5524, %v5537
        %v5539 = vcombine.low %v5483, %v5515
        %v5540 = vcombine.high %v5483, %v5515
        %v5541 = vcombine.low %v5490, %v5522
        %v5542 = vcombine.high %v5490, %v5522
        %v5543 = vcombine.low %v5499, %v5531
        %v5544 = vcombine.high %v5499, %v5531
        %v5545 = vcombine.low %v5506, %v5538
        %v5546 = vcombine.high %v5506, %v5538
        %v5547 = vadd.f32 %v4883, %v5131
        %v5548 = vadd.f32 %v4884, %v5267
        %v5549 = vadd.f32 %v4885, %v5132
        %v5550 = vadd.f32 %v4886, %v5268
        %v5551 = vadd.f32 %v4887, %v5133
        %v5552 = vadd.f32 %v4888, %v5269
        %v5553 = vadd.f32 %v4889, %v5134
        %v5554 = vadd.f32 %v4890, %v5270
        %v5555 = vadd.f32 %v4891, %v5135
        %v5556 = vadd.f32 %v4892, %v5271
        %v5557 = vadd.f32 %v4893, %v5136
        %v5558 = vadd.f32 %v4894, %v5272
        %v5559 = vadd.f32 %v4895, %v5137
        %v5560 = vadd.f32 %v4896, %v5273
        %v5561 = vadd.f32 %v4897, %v5138
        %v5562 = vadd.f32 %v4898, %v5274
        %v5563 = vadd.f32 %v4899, %v5403
        %v5564 = vadd.f32 %v4900, %v5539
        %v5565 = vadd.f32 %v4901, %v5404
        %v5566 = vadd.f32 %v4902, %v5540
        %v5567 = vadd.f32 %v4903, %v5405
        %v5568 = vadd.f32 %v4904, %v5541
        %v5569 = vadd.f32 %v4905, %v5406
        %v5570 = vadd.f32 %v4906, %v5542
        %v5571 = vadd.f32 %v4907, %v5407
        %v5572 = vadd.f32 %v4908, %v5543
        %v5573 = vadd.f32 %v4909, %v5408
        %v5574 = vadd.f32 %v4910, %v5544
        %v5575 = vadd.f32 %v4911, %v5409
        %v5576 = vadd.f32 %v4912, %v5545
        %v5577 = vadd.f32 %v4913, %v5410
        %v5578 = vadd.f32 %v4914, %v5546
        %5579 = vrot.lane.b32.xlu0 %v699, 80
        %v5580 = vpop.permute.xlu0 %5579
        %v5581 = vrot.slane %v5580, 3
        %v5582 = vlaneseq
        %v5583 = vshrl.u32 %v5582, 7
        %v5584 = vsub.s32 0, %v5583
        %v5585 = vrot.slane %v5581, %v5584
        %v5587 = vadd.f32 %v5547, %v5585
        %v5588 = vadd.f32 %v5548, %v5585
        %v5589 = vadd.f32 %v5549, %v5585
        %v5590 = vadd.f32 %v5550, %v5585
        %v5591 = vadd.f32 %v5551, %v5585
        %v5592 = vadd.f32 %v5552, %v5585
        %v5593 = vadd.f32 %v5553, %v5585
        %v5594 = vadd.f32 %v5554, %v5585
        %v5595 = vadd.f32 %v5555, %v5585
        %v5596 = vadd.f32 %v5556, %v5585
        %v5597 = vadd.f32 %v5557, %v5585
        %v5598 = vadd.f32 %v5558, %v5585
        %v5599 = vadd.f32 %v5559, %v5585
        %v5600 = vadd.f32 %v5560, %v5585
        %v5601 = vadd.f32 %v5561, %v5585
        %v5602 = vadd.f32 %v5562, %v5585
        %v5603 = vadd.f32 %v5563, %v5585
        %v5604 = vadd.f32 %v5564, %v5585
        %v5605 = vadd.f32 %v5565, %v5585
        %v5606 = vadd.f32 %v5566, %v5585
        %v5607 = vadd.f32 %v5567, %v5585
        %v5608 = vadd.f32 %v5568, %v5585
        %v5609 = vadd.f32 %v5569, %v5585
        %v5610 = vadd.f32 %v5570, %v5585
        %v5611 = vadd.f32 %v5571, %v5585
        %v5612 = vadd.f32 %v5572, %v5585
        %v5613 = vadd.f32 %v5573, %v5585
        %v5614 = vadd.f32 %v5574, %v5585
        %v5615 = vadd.f32 %v5575, %v5585
        %v5616 = vadd.f32 %v5576, %v5585
        %v5617 = vadd.f32 %v5577, %v5585
        %v5618 = vadd.f32 %v5578, %v5585
        %5619 = vst.msk [vmem:[%s614] sm:$0xff] %vm1839, %v5587
        %5620 = vst.msk [vmem:[%s614 + $0x8] sm:$0xff] %vm1839, %v5588
        %5621 = vst.msk [vmem:[%s614 + $0x10] sm:$0xff] %vm1839, %v5589
        %5622 = vst.msk [vmem:[%s614 + $0x18] sm:$0xff] %vm1839, %v5590
        %5623 = vst.msk [vmem:[%s614 + $0x20] sm:$0xff] %vm1839, %v5591
        %5624 = vst.msk [vmem:[%s614 + $0x28] sm:$0xff] %vm1839, %v5592
        %5625 = vst.msk [vmem:[%s614 + $0x30] sm:$0xff] %vm1839, %v5593
        %5626 = vst.msk [vmem:[%s614 + $0x38] sm:$0xff] %vm1839, %v5594
        %5627 = vst.msk [vmem:[%s614 + $0x40] sm:$0xff] %vm1839, %v5595
        %5628 = vst.msk [vmem:[%s614 + $0x48] sm:$0xff] %vm1839, %v5596
        %5629 = vst.msk [vmem:[%s614 + $0x50] sm:$0xff] %vm1839, %v5597
        %5630 = vst.msk [vmem:[%s614 + $0x58] sm:$0xff] %vm1839, %v5598
        %5631 = vst.msk [vmem:[%s614 + $0x60] sm:$0xff] %vm1839, %v5599
        %5632 = vst.msk [vmem:[%s614 + $0x68] sm:$0xff] %vm1839, %v5600
        %5633 = vst.msk [vmem:[%s614 + $0x70] sm:$0xff] %vm1839, %v5601
        %5634 = vst.msk [vmem:[%s614 + $0x78] sm:$0xff] %vm1839, %v5602
        %5635 = vst.msk [vmem:[%s614 + $0x80] sm:$0xff] %vm1839, %v5603
        %5636 = vst.msk [vmem:[%s614 + $0x88] sm:$0xff] %vm1839, %v5604
        %5637 = vst.msk [vmem:[%s614 + $0x90] sm:$0xff] %vm1839, %v5605
        %5638 = vst.msk [vmem:[%s614 + $0x98] sm:$0xff] %vm1839, %v5606
        %5639 = vst.msk [vmem:[%s614 + $0xa0] sm:$0xff] %vm1839, %v5607
        %5640 = vst.msk [vmem:[%s614 + $0xa8] sm:$0xff] %vm1839, %v5608
        %5641 = vst.msk [vmem:[%s614 + $0xb0] sm:$0xff] %vm1839, %v5609
        %5642 = vst.msk [vmem:[%s614 + $0xb8] sm:$0xff] %vm1839, %v5610
        %5643 = vst.msk [vmem:[%s614 + $0xc0] sm:$0xff] %vm1839, %v5611
        %5644 = vst.msk [vmem:[%s614 + $0xc8] sm:$0xff] %vm1839, %v5612
        %5645 = vst.msk [vmem:[%s614 + $0xd0] sm:$0xff] %vm1839, %v5613
        %5646 = vst.msk [vmem:[%s614 + $0xd8] sm:$0xff] %vm1839, %v5614
        %5647 = vst.msk [vmem:[%s614 + $0xe0] sm:$0xff] %vm1839, %v5615
        %5648 = vst.msk [vmem:[%s614 + $0xe8] sm:$0xff] %vm1839, %v5616
        %5649 = vst.msk [vmem:[%s614 + $0xf0] sm:$0xff] %vm1839, %v5617
        %5650 = vst.msk [vmem:[%s614 + $0xf8] sm:$0xff] %vm1839, %v5618
        %s5651 = sand.u32 %s364, 1
        %s5652 = scalar_lea.sflag [#allocation4], %s5651
        %s5653 = sand.u32 %s364, 1
        %s5654 = smul.addr %s5653, 16
        %s5655 = scalar_lea.vmem [#allocation3], %s5654
        %s5656 = sand.u32 %s390, 1
        %s5657 = scalar_lea.sflag [#allocation6], %s5656
        %s5658 = sand.u32 %s390, 1
        %s5659 = smul.addr %s5658, 256
        %s5660 = scalar_lea.vmem [#allocation5], %s5659
        // Predicated region
        $region77: #{tpu_custom_call.1} parent=67 // pred_check
          %p5661 = pneg %p374
        $region78: #{tpu_custom_call.1} parent=67 // pred_check_branch
          %5663 = sbr.rel (%p5661) target = $region80
        $region79: #{tpu_custom_call.1} parent=67 // pred_region
          %s5665 = ssub.s32 256, 256
          %5666 = vsyncadd %s5652, %s5665
          %s5667 = smul.addr %s36, 2
          %s5668 = smul.addr %s5667, 128
          %s5669 = scalar_lea.hbm %s13, %s5668
          %s5670 = sshll.u32 %s5655, 4
          %s5671 = int_to_ptr.vmem [resolvable:$true] %s5670
          %5676 = dma.vmem_to_hbm [thread:$0]  %s5671, 256, %s5669, %s5652, 128, 128, 8
        $region80: #{tpu_custom_call.1} parent=67 // pred_fallthru
          _
        // Predicated region
        $region81: #{tpu_custom_call.1} parent=67 // pred_check
          %p5677 = pneg %p400
        $region82: #{tpu_custom_call.1} parent=67 // pred_check_branch
          %5679 = sbr.rel (%p5677) target = $region84
        $region83: #{tpu_custom_call.1} parent=67 // pred_region
          %s5681 = ssub.s32 4096, 4096
          %5682 = vsyncadd %s5657, %s5681
          %s5683 = smul.addr %s36, 32
          %s5684 = smul.addr %s5683, 128
          %s5685 = scalar_lea.hbm %s14, %s5684
          %s5686 = sshll.u32 %s5660, 4
          %s5687 = int_to_ptr.vmem [resolvable:$true] %s5686
          %5692 = dma.vmem_to_hbm [thread:$0]  %s5687, 4096, %s5685, %s5657, 128, 128, 8
        $region84: #{tpu_custom_call.1} parent=67 // pred_fallthru
          _
      $region68: #{tpu_custom_call.1} parent=5 // pred_fallthru
        _
      %p5693 = scmp.le.s32.totalorder 2, %s27
      // Predicated region
      $region85: #{tpu_custom_call.1} parent=5 // pred_check
        %p5694 = pneg %p5693
      $region86: #{tpu_custom_call.1} parent=5 // pred_check_branch
        %5696 = sbr.rel (%p5694) target = $region88
      $region87: #{tpu_custom_call.1} parent=5 // pred_region
        %s5697 = ssub.s32 %s27, 2
        // Predicated region
        $region89: #{tpu_custom_call.1} parent=87 // pred_check
          %p5698 = pneg %p380
        $region90: #{tpu_custom_call.1} parent=87 // pred_check_branch
          %5700 = sbr.rel (%p5698) target = $region92
        $region91: #{tpu_custom_call.1} parent=87 // pred_region
          %s5701 = sand.u32 %s365, 1
          %s5702 = scalar_lea.sflag [#allocation4], %s5701
          %s5703 = sand.u32 %s365, 1
          %s5704 = smul.addr %s5703, 16
          %s5705 = scalar_lea.vmem [#allocation3], %s5704
          %5706 = dma.done %s5702, 256
        $region92: #{tpu_custom_call.1} parent=87 // pred_fallthru
          _
        // Predicated region
        $region93: #{tpu_custom_call.1} parent=87 // pred_check
          %p5707 = pneg %p406
        $region94: #{tpu_custom_call.1} parent=87 // pred_check_branch
          %5709 = sbr.rel (%p5707) target = $region96
        $region95: #{tpu_custom_call.1} parent=87 // pred_region
          %s5710 = sand.u32 %s391, 1
          %s5711 = scalar_lea.sflag [#allocation6], %s5710
          %s5712 = sand.u32 %s391, 1
          %s5713 = smul.addr %s5712, 256
          %s5714 = scalar_lea.vmem [#allocation5], %s5713
          %5715 = dma.done %s5711, 4096
        $region96: #{tpu_custom_call.1} parent=87 // pred_fallthru
          _
      $region88: #{tpu_custom_call.1} parent=5 // pred_fallthru
        _
    $region6: #{tpu_custom_call.1} parent=1 // loop_footer
      %s31 = sadd.s32 1, %s27
    $region7: #{tpu_custom_call.1} parent=1 // loop_footer_branch
      %26 = sbr.rel target = $region3
    $region8: #{tpu_custom_call.1} parent=1 // loop_exit
      _
    %5716 = vsyncpa [#allocation4], 1
    %s5717 = scalar_lea.sflag [#allocation4], 1
    %5718 = vsyncpa %s5717, 1
    %5719 = vsyncpa [#allocation6], 1
    %s5720 = scalar_lea.sflag [#allocation6], 1
    %5721 = vsyncpa %s5720, 1
  %5722 = vsyncmov [#allocation2]
  %s5723 = vpop.sfrf %5722
  %p5724 = scmp.eq.s32.totalorder %s5723, 0
  %p5725 = pneg %p5724
  %5727 = shalt.err (%p5725)

</llo_original>
